<compile_context>
chip_gen: v7x
topology: tpu7x:2x2x1
jax: 0.10.0
libtpu: 0.0.40
codegen_flags: <defaults>
</compile_context>

<pallas_src>
import functools

import jax
import jax.numpy as jnp
from jax.experimental import pallas as pl
from jax.experimental.pallas import tpu as pltpu


_VMEM_BIG = 48 * 1024 * 1024     # v7x-safe (64 MiB physical per TensorCore)
_VMEM_SMALL = 32 * 1024 * 1024


def _round_up(x, m):
    return (x + m - 1) // m * m


def _largest_tile(total, cap):
    """Largest multiple of 128 that divides `total` (a multiple of 128), <= cap."""
    t = max(128, (min(cap, total) // 128) * 128)
    while total % t:
        t -= 128
    return t


def _choose_prop_tiles(n_pad, fh, fh_out, budget=40 * 1024 * 1024):
    """Pick (row_tile, k_tile) for the propagate kernel under a VMEM budget."""
    def vmem(rt, kt):
        g = 2 * rt * kt * 2              # double-buffered bf16 G block
        s = 2 * n_pad * fh * 2           # resident bf16 S (conservative x2)
        acc = rt * fh * 4                # f32 accumulator scratch
        out = 2 * rt * fh_out * 2        # double-buffered bf16 output block
        return g + s + acc + out + (1 << 21)
    rt = _largest_tile(n_pad, 512)
    kt = _largest_tile(n_pad, 2048)
    while vmem(rt, kt) > budget and kt > 128:
        kt = _largest_tile(n_pad, kt - 128)
    while vmem(rt, kt) > budget and rt > 128:
        rt = _largest_tile(n_pad, rt - 128)
    return rt, kt


# ----------------------------------------------------------------------------
# Kernel 1: row-tiled dense matmul  S = X @ W   (bf16 in, f32 acc, bf16 out)
# ----------------------------------------------------------------------------
def _dense_matmul_kernel(x_ref, w_ref, o_ref):
    o_ref[...] = jnp.dot(x_ref[...], w_ref[...],
                         preferred_element_type=jnp.float32).astype(o_ref.dtype)


def _dense_matmul(x, w, row_tile):
    m, k = x.shape
    n = w.shape[1]
    return pl.pallas_call(
        _dense_matmul_kernel,
        out_shape=jax.ShapeDtypeStruct((m, n), jnp.bfloat16),
        grid_spec=pltpu.PrefetchScalarGridSpec(
            num_scalar_prefetch=0,
            grid=(m // row_tile,),
            in_specs=[pl.BlockSpec((row_tile, k), lambda i: (i, 0)),
                      pl.BlockSpec((k, n), lambda i: (0, 0))],        # W resident
            out_specs=pl.BlockSpec((row_tile, n), lambda i: (i, 0))),
        compiler_params=pltpu.CompilerParams(
            dimension_semantics=("parallel",),
            vmem_limit_bytes=_VMEM_SMALL),
    )(x, w)


# ----------------------------------------------------------------------------
# Kernel 2: tiled GraphConvolution propagation
#   out = leaky_relu(G @ S + b, 0.25)           (optionally) @ W_next fused in
#   grid = (row_tiles, k_tiles); G in rectangular blocks, S fully VMEM-resident
#   (one DMA), f32 accumulator scratch, bias + activation (+ next-layer weight)
#   fused at the last k step.
# ----------------------------------------------------------------------------
def _gcn_prop_kernel(g_ref, s_ref, b_ref, *rest, k_tile, fuse_w2):
    if fuse_w2:
        w2_ref, o_ref, acc_ref = rest
    else:
        o_ref, acc_ref = rest
    k = pl.program_id(1)

    @pl.when(k == 0)
    def _():
        acc_ref[...] = jnp.zeros_like(acc_ref)

    ks = pl.multiple_of(k * k_tile, k_tile)
    acc_ref[...] += jnp.dot(g_ref[...], s_ref[pl.ds(ks, k_tile), :],
                            preferred_element_type=jnp.float32)

    @pl.when(k == pl.num_programs(1) - 1)
    def _():
        v = acc_ref[...] + b_ref[...]                    # f32
        v = jnp.where(v > 0, v, 0.25 * v)                # leaky_relu(0.25)
        if fuse_w2:
            o_ref[...] = jnp.dot(v.astype(jnp.bfloat16), w2_ref[...],
                                 preferred_element_type=jnp.float32
                                 ).astype(o_ref.dtype)
        else:
            o_ref[...] = v.astype(o_ref.dtype)


def _gcn_propagate(g, s, b, w_next, row_tile, k_tile):
    n_pad, fh = s.shape
    fuse = w_next is not None
    fh_out = w_next.shape[1] if fuse else fh

    in_specs = [pl.BlockSpec((row_tile, k_tile), lambda i, k: (i, k)),  # G block
                pl.BlockSpec((n_pad, fh), lambda i, k: (0, 0)),         # S resident
                pl.BlockSpec((1, fh), lambda i, k: (0, 0))]             # bias
    args = [g, s, b]
    if fuse:
        in_specs.append(pl.BlockSpec((fh, fh_out), lambda i, k: (0, 0)))
        args.append(w_next)

    kernel = functools.partial(_gcn_prop_kernel, k_tile=k_tile, fuse_w2=fuse)
    return pl.pallas_call(
        kernel,
        out_shape=jax.ShapeDtypeStruct((n_pad, fh_out), jnp.bfloat16),
        grid_spec=pltpu.PrefetchScalarGridSpec(
            num_scalar_prefetch=0,
            grid=(n_pad // row_tile, n_pad // k_tile),
            in_specs=in_specs,
            out_specs=pl.BlockSpec((row_tile, fh_out), lambda i, k: (i, 0)),
            scratch_shapes=[pltpu.VMEM((row_tile, fh), jnp.float32)]),
        compiler_params=pltpu.CompilerParams(
            dimension_semantics=("parallel", "arbitrary"),
            vmem_limit_bytes=_VMEM_BIG),
    )(*args)


# ----------------------------------------------------------------------------
# Kernel 3: row-tiled Event_Encoder MLP + EvenProp combine
#   Hc = w * H1 + (1 - w) * temp0 * (relu(H1 @ A1 + c1) @ A2 + c2)
#   w and (1 - w) * temp0 arrive as SMEM scalars.
# ----------------------------------------------------------------------------
def _combine_kernel(wt_ref, h1_ref, a1_ref, c1_ref, a2_ref, c2_ref, o_ref):
    f32, bf16 = jnp.float32, jnp.bfloat16
    H1 = h1_ref[...]                                               # bf16 (rt, Fh)
    # Event_Encoder MLP (dropout == 0 -> identity): lin1 -> relu -> lin2
    z = jnp.maximum(
        jnp.dot(H1, a1_ref[...], preferred_element_type=f32) + c1_ref[...], 0.0)
    Xe = jnp.dot(z.astype(bf16), a2_ref[...],
                 preferred_element_type=f32) + c2_ref[...]
    # EvenProp propagated term is identically zero (see module docstring).
    o_ref[...] = (wt_ref[0] * H1.astype(f32) + wt_ref[1] * Xe).astype(o_ref.dtype)


def _combine(wt, h1, a1, c1, a2, c2, row_tile):
    n_pad, fh = h1.shape
    fz = a1.shape[1]
    return pl.pallas_call(
        _combine_kernel,
        out_shape=jax.ShapeDtypeStruct((n_pad, fh), jnp.bfloat16),
        grid_spec=pltpu.PrefetchScalarGridSpec(
            num_scalar_prefetch=0,
            grid=(n_pad // row_tile,),
            in_specs=[pl.BlockSpec(memory_space=pltpu.MemorySpace.SMEM),  # [w,(1-w)*t0]
                      pl.BlockSpec((row_tile, fh), lambda i: (i, 0)),
                      pl.BlockSpec((fh, fz), lambda i: (0, 0)),
                      pl.BlockSpec((1, fz), lambda i: (0, 0)),
                      pl.BlockSpec((fz, fh), lambda i: (0, 0)),
                      pl.BlockSpec((1, fh), lambda i: (0, 0))],
            out_specs=pl.BlockSpec((row_tile, fh), lambda i: (i, 0))),
        compiler_params=pltpu.CompilerParams(
            dimension_semantics=("parallel",),
            vmem_limit_bytes=_VMEM_SMALL),
    )(wt, h1, a1, c1, a2, c2)


# ----------------------------------------------------------------------------
# Kernel 4: tiled bilinear decoder  out = (HR @ train_W) @ HD^T
#   HD is pre-transposed once outside the kernel (lane-contiguous MXU operand);
#   supp = HR_tile @ train_W is computed once per row tile and cached in VMEM.
# ----------------------------------------------------------------------------
def _decoder_kernel(hr_ref, tw_ref, hdt_ref, o_ref, supp_ref):
    @pl.when(pl.program_id(1) == 0)
    def _():
        supp_ref[...] = jnp.dot(hr_ref[...], tw_ref[...],
                                preferred_element_type=jnp.float32
                                ).astype(supp_ref.dtype)
    o_ref[...] = jnp.dot(supp_ref[...], hdt_ref[...],
                         preferred_element_type=jnp.float32)


def _decoder(hr, tw, hdt, d_tile, t_tile):
    d_pad, fh = hr.shape
    t_pad = hdt.shape[1]
    return pl.pallas_call(
        _decoder_kernel,
        out_shape=jax.ShapeDtypeStruct((d_pad, t_pad), jnp.float32),
        grid_spec=pltpu.PrefetchScalarGridSpec(
            num_scalar_prefetch=0,
            grid=(d_pad // d_tile, t_pad // t_tile),
            in_specs=[pl.BlockSpec((d_tile, fh), lambda i, j: (i, 0)),   # HR rows
                      pl.BlockSpec((fh, fh), lambda i, j: (0, 0)),       # train_W
                      pl.BlockSpec((fh, t_tile), lambda i, j: (0, j))],  # HD^T cols
            out_specs=pl.BlockSpec((d_tile, t_tile), lambda i, j: (i, j)),
            scratch_shapes=[pltpu.VMEM((d_tile, fh), jnp.bfloat16)]),
        compiler_params=pltpu.CompilerParams(
            dimension_semantics=("parallel", "arbitrary"),
            vmem_limit_bytes=_VMEM_BIG),
    )(hr, tw, hdt)


# ----------------------------------------------------------------------------
# One-time (per-graph) adjacency prep: pad + relayout + bf16 cast, hoisted out
# of the forward path (block concat/pad, no O(N^2) scatter chain).
# ----------------------------------------------------------------------------
def prepare_graph(G, drug_num, target_num):
    N = drug_num + target_num
    d_pad = _round_up(drug_num, 128)
    t_pad = _round_up(target_num, 128)
    G = G.astype(jnp.float32)
    top = jnp.concatenate(
        [jnp.pad(G[:drug_num, :drug_num],
                 ((0, d_pad - drug_num), (0, d_pad - drug_num))),
         jnp.pad(G[:drug_num, drug_num:N],
                 ((0, d_pad - drug_num), (0, t_pad - target_num)))], axis=1)
    bot = jnp.concatenate(
        [jnp.pad(G[drug_num:N, :drug_num],
                 ((0, t_pad - target_num), (0, d_pad - drug_num))),
         jnp.pad(G[drug_num:N, drug_num:N],
                 ((0, t_pad - target_num), (0, t_pad - target_num)))], axis=1)
    return jnp.concatenate([top, bot], axis=0).astype(jnp.bfloat16)


# ----------------------------------------------------------------------------
# Forward wrapper
# ----------------------------------------------------------------------------
def dual_encoder_forward(H, Gp, params, w, temp0, *, drug_num, target_num,
                         temp1=None):
    # temp1 multiplies an identically-zero propagated term (see docstring);
    # kept in the signature for interface parity only.
    del temp1
    f32, bf16 = jnp.float32, jnp.bfloat16
    N = drug_num + target_num
    in_dim, hgcn = params["W1"].shape
    hidden = params["A1"].shape[1]

    Fi = _round_up(in_dim, 128)
    Fh = _round_up(hgcn, 128)
    Fz = _round_up(hidden, 128)
    d_pad = _round_up(drug_num, 128)      # drugs -> rows [0, d_pad)
    t_pad = _round_up(target_num, 128)    # targets -> rows [d_pad, d_pad+t_pad)
    n_pad = d_pad + t_pad                 # 128-aligned node/contraction dim
    assert Gp.shape == (n_pad, n_pad), "Gp must come from prepare_graph()"

    def pad2(a, r, c):
        return jnp.pad(a, ((0, r - a.shape[0]), (0, c - a.shape[1])))

    # node features, same drug/target relayout as Gp; bf16 MXU operands
    Hp = jnp.concatenate(
        [pad2(H[:drug_num].astype(f32), d_pad, Fi),
         pad2(H[drug_num:N].astype(f32), t_pad, Fi)], axis=0).astype(bf16)

    W1 = pad2(params["W1"], Fi, Fh).astype(bf16)
    W2 = pad2(params["W2"], Fh, Fh).astype(bf16)
    A1 = pad2(params["A1"], Fh, Fz).astype(bf16)
    A2 = pad2(params["A2"], Fz, Fh).astype(bf16)
    TW = pad2(params["TW"], Fh, Fh).astype(bf16)
    b1 = pad2(params["b1"], 1, Fh).astype(f32)
    b2 = pad2(params["b2"], 1, Fh).astype(f32)
    c1 = pad2(params["c1"], 1, Fz).astype(f32)
    c2 = pad2(params["c2"], 1, Fh).astype(f32)

    # SMEM scalars for the combine kernel: [w, (1 - w) * temp0]
    wv = jnp.asarray(w, f32)
    wt = jnp.stack([wv, (1.0 - wv) * jnp.asarray(temp0, f32)])

    row_tile = _largest_tile(n_pad, 512)
    prow, pk = _choose_prop_tiles(n_pad, Fh, Fh)

    # GCN_Encoder (two GraphConvolution layers); S2 = X1 @ W2 fused into the
    # epilogue of the first propagate.
    S1 = _dense_matmul(Hp, W1, row_tile)                  # support1 = H @ W1
    S2 = _gcn_propagate(Gp, S1, b1, W2, prow, pk)         # leaky(G@S1 + b1) @ W2
    H1 = _gcn_propagate(Gp, S2, b2, None, prow, pk)       # leaky(G@S2 + b2)

    # Event encoder MLP + EvenProp combine (row-tiled)
    Hc = _combine(wt, H1, A1, c1, A2, c2, row_tile)       # bf16 (n_pad, Fh)

    # Decoder: (HR @ train_W) @ HD^T, tiled; HD transposed once outside.
    HR = Hc[:d_pad]
    HDT = Hc[d_pad:d_pad + t_pad].T                       # (Fh, t_pad)
    d_tile = _largest_tile(d_pad, 256)
    t_tile = _largest_tile(t_pad, 512)
    out_pad = _decoder(HR, TW, HDT, d_tile, t_tile)
    return out_pad[:drug_num, :target_num]


if __name__ == "__main__":
    drug_num, target_num = 8, 8
    N = drug_num + target_num
    in_dim, hgcn_dim, hidden_dim = 32, 32, 16
    K, alpha = 4, 0.1
    w = 0.6
    # EvenProp: temp = alpha * (1 - alpha) ** (2 * arange(K // 2 + 1))
    temp0 = alpha
    temp1 = alpha * (1.0 - alpha) ** 2

    key = jax.random.PRNGKey(0)
    ks = jax.random.split(key, 10)
    H = jax.random.normal(ks[0], (N, in_dim), jnp.float32)
    G = (jax.random.uniform(ks[1], (N, N)) > 0.5).astype(jnp.float32)

    params = {
        "W1": 0.1 * jax.random.normal(ks[2], (in_dim, hgcn_dim), jnp.float32),
        "b1": jnp.zeros((1, hgcn_dim), jnp.float32),   # GraphConvolution bias init 0
        "W2": 0.1 * jax.random.normal(ks[3], (hgcn_dim, hgcn_dim), jnp.float32),
        "b2": jnp.zeros((1, hgcn_dim), jnp.float32),
        # nn.Linear weights stored pre-transposed: y = x @ A + c
        "A1": 0.1 * jax.random.normal(ks[4], (hgcn_dim, hidden_dim), jnp.float32),
        "c1": 0.01 * jax.random.normal(ks[5], (1, hidden_dim), jnp.float32),
        "A2": 0.1 * jax.random.normal(ks[6], (hidden_dim, hgcn_dim), jnp.float32),
        "c2": 0.01 * jax.random.normal(ks[7], (1, hgcn_dim), jnp.float32),
        "TW": 0.1 * jax.random.normal(ks[8], (hgcn_dim, hgcn_dim), jnp.float32),
    }

    # G is fixed per graph: pad / relayout / bf16-cast it once, outside forward.
    Gp = jax.block_until_ready(prepare_graph(G, drug_num, target_num))

    fwd = jax.jit(functools.partial(dual_encoder_forward,
                                    drug_num=drug_num, target_num=target_num,
                                    temp1=temp1))
    out = jax.block_until_ready(fwd(H, Gp, params, w, temp0))
    assert out.shape == (drug_num, target_num)

    # pure-f32 JAX reference with the FULL (unsimplified) EvenProp math
    def reference():
        leaky = lambda v: jnp.where(v > 0, v, 0.25 * v)
        x1 = leaky(G @ (H @ params["W1"]) + params["b1"])
        H1 = leaky(G @ (x1 @ params["W2"]) + params["b2"])
        z = jnp.maximum(H1 @ params["A1"] + params["c1"], 0.0)
        Xe = z @ params["A2"] + params["c2"]
        # directed drug->target edges, PyG 'sym' normalization with source degrees
        B = (G[:drug_num, drug_num:N] != 0).astype(jnp.float32)
        deg_src = jnp.concatenate([B.sum(axis=1),
                                   jnp.zeros((target_num,), jnp.float32)])
        dinv = jnp.where(deg_src > 0, 1.0 / jnp.sqrt(deg_src), 0.0)
        A_norm = jnp.zeros((N, N), jnp.float32).at[:drug_num, drug_num:N].set(
            dinv[:drug_num, None] * B * dinv[None, drug_num:N])
        Xp = A_norm.T @ (A_norm.T @ Xe)          # identically zero for this graph
        H2 = temp0 * Xe + temp1 * Xp
        Hc = w * H1 + (1.0 - w) * H2
        return Hc[:drug_num] @ params["TW"] @ Hc[drug_num:N].T

    ref = reference()
    err = float(jnp.max(jnp.abs(out - ref)))
    assert jnp.allclose(out, ref, rtol=3e-2, atol=3e-2), err
    print("KERNEL_OK")
</pallas_src>

<mosaic_0001>
module attributes {stable_mosaic.version = 11 : i64} {
  func.func @_dense_matmul_kernel(%arg0: i32, %arg1: memref<256x128xbf16, #tpu.memory_space<vmem>>, %arg2: memref<128x128xbf16, #tpu.memory_space<vmem>>, %arg3: memref<256x128xbf16, #tpu.memory_space<vmem>>) attributes {dimension_semantics = [#tpu.dimension_semantics<parallel>], iteration_bounds = array<i64: 1>, scalar_prefetch = 0 : i64, scratch_operands = 0 : i64, tpu.core_type = #tpu.core_type<tc>, window_params = [{transform_indices = @transform_0, window_bounds = array<i64: 256, 128>}, {pipeline_mode = #tpu.pipeline_mode<synchronous>, transform_indices = @transform_1, window_bounds = array<i64: 128, 128>}, {transform_indices = @transform_2, window_bounds = array<i64: 256, 128>}]} {
    %c0 = arith.constant 0 : index
    %c0_0 = arith.constant 0 : index
    %0 = vector.load %arg1[%c0, %c0_0] : memref<256x128xbf16, #tpu.memory_space<vmem>>, vector<256x128xbf16>
    %c0_1 = arith.constant 0 : index
    %c0_2 = arith.constant 0 : index
    %1 = vector.load %arg2[%c0_1, %c0_2] : memref<128x128xbf16, #tpu.memory_space<vmem>>, vector<128x128xbf16>
    %cst = arith.constant dense<0.000000e+00> : vector<256x128xf32>
    %2 = tpu.matmul %0, %1, %cst {dimension_numbers = #tpu.dot_dimension_numbers<[1], [0], [0], [1], [0, 0, 1, 1], [], []>} : vector<256x128xbf16>, vector<128x128xbf16>, vector<256x128xf32> -> vector<256x128xf32>
    %3 = arith.truncf %2 : vector<256x128xf32> to vector<256x128xbf16>
    %c0_3 = arith.constant 0 : index
    %c0_4 = arith.constant 0 : index
    %4 = vector.load %arg3[%c0_3, %c0_4] : memref<256x128xbf16, #tpu.memory_space<vmem>>, vector<256x128xbf16>
    tpu.vector_store %arg3[%c0_3, %c0_4], %3 {strides = array<i32>} : memref<256x128xbf16, #tpu.memory_space<vmem>>, vector<256x128xbf16>,
    return
  }
  func.func @transform_0(%arg0: i32) -> (i32, i32) {
    %c0_i32 = arith.constant 0 : i32
    %c0_i32_0 = arith.constant 0 : i32
    return %arg0, %c0_i32 : i32, i32
  }
  func.func @transform_1(%arg0: i32) -> (i32, i32) {
    %c0_i32 = arith.constant 0 : i32
    %c0_i32_0 = arith.constant 0 : i32
    %c0_i32_1 = arith.constant 0 : i32
    return %c0_i32, %c0_i32_0 : i32, i32
  }
  func.func @transform_2(%arg0: i32) -> (i32, i32) {
    %c0_i32 = arith.constant 0 : i32
    %c0_i32_0 = arith.constant 0 : i32
    return %arg0, %c0_i32 : i32, i32
  }
}

module attributes {stable_mosaic.version = 11 : i64} {
  func.func @_gcn_prop_kernel(%arg0: i32, %arg1: i32, %arg2: memref<256x256xbf16, #tpu.memory_space<vmem>>, %arg3: memref<256x128xbf16, #tpu.memory_space<vmem>>, %arg4: memref<1x128xf32, #tpu.memory_space<vmem>>, %arg5: memref<128x128xbf16, #tpu.memory_space<vmem>>, %arg6: memref<256x128xbf16, #tpu.memory_space<vmem>>, %arg7: memref<256x128xf32, #tpu.memory_space<vmem>>) attributes {dimension_semantics = [#tpu.dimension_semantics<parallel>, #tpu.dimension_semantics<arbitrary>], iteration_bounds = array<i64: 1, 1>, scalar_prefetch = 0 : i64, scratch_operands = 1 : i64, tpu.core_type = #tpu.core_type<tc>, window_params = [{transform_indices = @transform_0, window_bounds = array<i64: 256, 256>}, {pipeline_mode = #tpu.pipeline_mode<synchronous>, transform_indices = @transform_1, window_bounds = array<i64: 256, 128>}, {pipeline_mode = #tpu.pipeline_mode<synchronous>, transform_indices = @transform_2, window_bounds = array<i64: 1, 128>}, {pipeline_mode = #tpu.pipeline_mode<synchronous>, transform_indices = @transform_3, window_bounds = array<i64: 128, 128>}, {transform_indices = @transform_4, window_bounds = array<i64: 256, 128>}]} {
    %c0_i32 = arith.constant 0 : i32
    %0 = arith.cmpi eq, %arg1, %c0_i32 : i32
    %1 = arith.extui %0 : i1 to i32
    %c0_i32_0 = arith.constant 0 : i32
    %2 = arith.cmpi ne, %1, %c0_i32_0 : i32
    scf.if %2 {
      %cst_9 = arith.constant 0.000000e+00 : f32
      %15 = vector.broadcast %cst_9 : f32 to vector<256x128xf32>
      %c0_10 = arith.constant 0 : index
      %c0_11 = arith.constant 0 : index
      %16 = vector.load %arg7[%c0_10, %c0_11] : memref<256x128xf32, #tpu.memory_space<vmem>>, vector<256x128xf32>
      tpu.vector_store %arg7[%c0_10, %c0_11], %15 {strides = array<i32>} : memref<256x128xf32, #tpu.memory_space<vmem>>, vector<256x128xf32>,
    } else {
    }
    %c256_i32 = arith.constant 256 : i32
    %3 = arith.muli %arg1, %c256_i32 : i32
    %4 = tpu.assume_multiple %3, 256 : i32
    %c0 = arith.constant 0 : index
    %c0_1 = arith.constant 0 : index
    %5 = vector.load %arg7[%c0, %c0_1] : memref<256x128xf32, #tpu.memory_space<vmem>>, vector<256x128xf32>
    %c0_2 = arith.constant 0 : index
    %c0_3 = arith.constant 0 : index
    %6 = vector.load %arg2[%c0_2, %c0_3] : memref<256x256xbf16, #tpu.memory_space<vmem>>, vector<256x256xbf16>
    %7 = arith.index_cast %4 : i32 to index
    %c0_4 = arith.constant 0 : index
    %8 = vector.load %arg3[%7, %c0_4] : memref<256x128xbf16, #tpu.memory_space<vmem>>, vector<256x128xbf16>
    %cst = arith.constant dense<0.000000e+00> : vector<256x128xf32>
    %9 = tpu.matmul %6, %8, %cst {dimension_numbers = #tpu.dot_dimension_numbers<[1], [0], [0], [1], [0, 0, 1, 1], [], []>} : vector<256x256xbf16>, vector<256x128xbf16>, vector<256x128xf32> -> vector<256x128xf32>
    %10 = arith.addf %5, %9 : vector<256x128xf32>
    %c0_5 = arith.constant 0 : index
    %c0_6 = arith.constant 0 : index
    %11 = vector.load %arg7[%c0_5, %c0_6] : memref<256x128xf32, #tpu.memory_space<vmem>>, vector<256x128xf32>
    tpu.vector_store %arg7[%c0_5, %c0_6], %10 {strides = array<i32>} : memref<256x128xf32, #tpu.memory_space<vmem>>, vector<256x128xf32>,
    %c0_i32_7 = arith.constant 0 : i32
    %12 = arith.cmpi eq, %arg1, %c0_i32_7 : i32
    %13 = arith.extui %12 : i1 to i32
    %c0_i32_8 = arith.constant 0 : i32
    %14 = arith.cmpi ne, %13, %c0_i32_8 : i32
    scf.if %14 {
      %c0_9 = arith.constant 0 : index
      %c0_10 = arith.constant 0 : index
      %15 = vector.load %arg7[%c0_9, %c0_10] : memref<256x128xf32, #tpu.memory_space<vmem>>, vector<256x128xf32>
      %c0_11 = arith.constant 0 : index
      %c0_12 = arith.constant 0 : index
      %16 = vector.load %arg4[%c0_11, %c0_12] : memref<1x128xf32, #tpu.memory_space<vmem>>, vector<1x128xf32>
      %17 = vector.broadcast %16 : vector<1x128xf32> to vector<256x128xf32>
      %18 = arith.addf %15, %17 : vector<256x128xf32>
      %cst_13 = arith.constant 0.000000e+00 : f32
      %19 = vector.broadcast %cst_13 : f32 to vector<256x128xf32>
      %20 = arith.cmpf ogt, %18, %19 : vector<256x128xf32>
      %cst_14 = arith.constant 2.500000e-01 : f32
      %21 = vector.broadcast %cst_14 : f32 to vector<256x128xf32>
      %22 = arith.mulf %21, %18 : vector<256x128xf32>
      %23 = arith.select %20, %18, %22 : vector<256x128xi1>, vector<256x128xf32>
      %24 = arith.truncf %23 : vector<256x128xf32> to vector<256x128xbf16>
      %c0_15 = arith.constant 0 : index
      %c0_16 = arith.constant 0 : index
      %25 = vector.load %arg5[%c0_15, %c0_16] : memref<128x128xbf16, #tpu.memory_space<vmem>>, vector<128x128xbf16>
      %cst_17 = arith.constant dense<0.000000e+00> : vector<256x128xf32>
      %26 = tpu.matmul %24, %25, %cst_17 {dimension_numbers = #tpu.dot_dimension_numbers<[1], [0], [0], [1], [0, 0, 1, 1], [], []>} : vector<256x128xbf16>, vector<128x128xbf16>, vector<256x128xf32> -> vector<256x128xf32>
      %27 = arith.truncf %26 : vector<256x128xf32> to vector<256x128xbf16>
      %c0_18 = arith.constant 0 : index
      %c0_19 = arith.constant 0 : index
      %28 = vector.load %arg6[%c0_18, %c0_19] : memref<256x128xbf16, #tpu.memory_space<vmem>>, vector<256x128xbf16>
      tpu.vector_store %arg6[%c0_18, %c0_19], %27 {strides = array<i32>} : memref<256x128xbf16, #tpu.memory_space<vmem>>, vector<256x128xbf16>,
    } else {
    }
    return
  }
  func.func @transform_0(%arg0: i32, %arg1: i32) -> (i32, i32) {
    %c0_i32 = arith.constant 0 : i32
    return %arg0, %arg1 : i32, i32
  }
  func.func @transform_1(%arg0: i32, %arg1: i32) -> (i32, i32) {
    %c0_i32 = arith.constant 0 : i32
    %c0_i32_0 = arith.constant 0 : i32
    %c0_i32_1 = arith.constant 0 : i32
    return %c0_i32, %c0_i32_0 : i32, i32
  }
  func.func @transform_2(%arg0: i32, %arg1: i32) -> (i32, i32) {
    %c0_i32 = arith.constant 0 : i32
    %c0_i32_0 = arith.constant 0 : i32
    %c0_i32_1 = arith.constant 0 : i32
    return %c0_i32, %c0_i32_0 : i32, i32
  }
  func.func @transform_3(%arg0: i32, %arg1: i32) -> (i32, i32) {
    %c0_i32 = arith.constant 0 : i32
    %c0_i32_0 = arith.constant 0 : i32
    %c0_i32_1 = arith.constant 0 : i32
    return %c0_i32, %c0_i32_0 : i32, i32
  }
  func.func @transform_4(%arg0: i32, %arg1: i32) -> (i32, i32) {
    %c0_i32 = arith.constant 0 : i32
    %c0_i32_0 = arith.constant 0 : i32
    return %arg0, %c0_i32 : i32, i32
  }
}

module attributes {stable_mosaic.version = 11 : i64} {
  func.func @_gcn_prop_kernel(%arg0: i32, %arg1: i32, %arg2: memref<256x256xbf16, #tpu.memory_space<vmem>>, %arg3: memref<256x128xbf16, #tpu.memory_space<vmem>>, %arg4: memref<1x128xf32, #tpu.memory_space<vmem>>, %arg5: memref<256x128xbf16, #tpu.memory_space<vmem>>, %arg6: memref<256x128xf32, #tpu.memory_space<vmem>>) attributes {dimension_semantics = [#tpu.dimension_semantics<parallel>, #tpu.dimension_semantics<arbitrary>], iteration_bounds = array<i64: 1, 1>, scalar_prefetch = 0 : i64, scratch_operands = 1 : i64, tpu.core_type = #tpu.core_type<tc>, window_params = [{transform_indices = @transform_0, window_bounds = array<i64: 256, 256>}, {pipeline_mode = #tpu.pipeline_mode<synchronous>, transform_indices = @transform_1, window_bounds = array<i64: 256, 128>}, {pipeline_mode = #tpu.pipeline_mode<synchronous>, transform_indices = @transform_2, window_bounds = array<i64: 1, 128>}, {transform_indices = @transform_3, window_bounds = array<i64: 256, 128>}]} {
    %c0_i32 = arith.constant 0 : i32
    %0 = arith.cmpi eq, %arg1, %c0_i32 : i32
    %1 = arith.extui %0 : i1 to i32
    %c0_i32_0 = arith.constant 0 : i32
    %2 = arith.cmpi ne, %1, %c0_i32_0 : i32
    scf.if %2 {
      %cst_9 = arith.constant 0.000000e+00 : f32
      %15 = vector.broadcast %cst_9 : f32 to vector<256x128xf32>
      %c0_10 = arith.constant 0 : index
      %c0_11 = arith.constant 0 : index
      %16 = vector.load %arg6[%c0_10, %c0_11] : memref<256x128xf32, #tpu.memory_space<vmem>>, vector<256x128xf32>
      tpu.vector_store %arg6[%c0_10, %c0_11], %15 {strides = array<i32>} : memref<256x128xf32, #tpu.memory_space<vmem>>, vector<256x128xf32>,
    } else {
    }
    %c256_i32 = arith.constant 256 : i32
    %3 = arith.muli %arg1, %c256_i32 : i32
    %4 = tpu.assume_multiple %3, 256 : i32
    %c0 = arith.constant 0 : index
    %c0_1 = arith.constant 0 : index
    %5 = vector.load %arg6[%c0, %c0_1] : memref<256x128xf32, #tpu.memory_space<vmem>>, vector<256x128xf32>
    %c0_2 = arith.constant 0 : index
    %c0_3 = arith.constant 0 : index
    %6 = vector.load %arg2[%c0_2, %c0_3] : memref<256x256xbf16, #tpu.memory_space<vmem>>, vector<256x256xbf16>
    %7 = arith.index_cast %4 : i32 to index
    %c0_4 = arith.constant 0 : index
    %8 = vector.load %arg3[%7, %c0_4] : memref<256x128xbf16, #tpu.memory_space<vmem>>, vector<256x128xbf16>
    %cst = arith.constant dense<0.000000e+00> : vector<256x128xf32>
    %9 = tpu.matmul %6, %8, %cst {dimension_numbers = #tpu.dot_dimension_numbers<[1], [0], [0], [1], [0, 0, 1, 1], [], []>} : vector<256x256xbf16>, vector<256x128xbf16>, vector<256x128xf32> -> vector<256x128xf32>
    %10 = arith.addf %5, %9 : vector<256x128xf32>
    %c0_5 = arith.constant 0 : index
    %c0_6 = arith.constant 0 : index
    %11 = vector.load %arg6[%c0_5, %c0_6] : memref<256x128xf32, #tpu.memory_space<vmem>>, vector<256x128xf32>
    tpu.vector_store %arg6[%c0_5, %c0_6], %10 {strides = array<i32>} : memref<256x128xf32, #tpu.memory_space<vmem>>, vector<256x128xf32>,
    %c0_i32_7 = arith.constant 0 : i32
    %12 = arith.cmpi eq, %arg1, %c0_i32_7 : i32
    %13 = arith.extui %12 : i1 to i32
    %c0_i32_8 = arith.constant 0 : i32
    %14 = arith.cmpi ne, %13, %c0_i32_8 : i32
    scf.if %14 {
      %c0_9 = arith.constant 0 : index
      %c0_10 = arith.constant 0 : index
      %15 = vector.load %arg6[%c0_9, %c0_10] : memref<256x128xf32, #tpu.memory_space<vmem>>, vector<256x128xf32>
      %c0_11 = arith.constant 0 : index
      %c0_12 = arith.constant 0 : index
      %16 = vector.load %arg4[%c0_11, %c0_12] : memref<1x128xf32, #tpu.memory_space<vmem>>, vector<1x128xf32>
      %17 = vector.broadcast %16 : vector<1x128xf32> to vector<256x128xf32>
      %18 = arith.addf %15, %17 : vector<256x128xf32>
      %cst_13 = arith.constant 0.000000e+00 : f32
      %19 = vector.broadcast %cst_13 : f32 to vector<256x128xf32>
      %20 = arith.cmpf ogt, %18, %19 : vector<256x128xf32>
      %cst_14 = arith.constant 2.500000e-01 : f32
      %21 = vector.broadcast %cst_14 : f32 to vector<256x128xf32>
      %22 = arith.mulf %21, %18 : vector<256x128xf32>
      %23 = arith.select %20, %18, %22 : vector<256x128xi1>, vector<256x128xf32>
      %24 = arith.truncf %23 : vector<256x128xf32> to vector<256x128xbf16>
      %c0_15 = arith.constant 0 : index
      %c0_16 = arith.constant 0 : index
      %25 = vector.load %arg5[%c0_15, %c0_16] : memref<256x128xbf16, #tpu.memory_space<vmem>>, vector<256x128xbf16>
      tpu.vector_store %arg5[%c0_15, %c0_16], %24 {strides = array<i32>} : memref<256x128xbf16, #tpu.memory_space<vmem>>, vector<256x128xbf16>,
    } else {
    }
    return
  }
  func.func @transform_0(%arg0: i32, %arg1: i32) -> (i32, i32) {
    %c0_i32 = arith.constant 0 : i32
    return %arg0, %arg1 : i32, i32
  }
  func.func @transform_1(%arg0: i32, %arg1: i32) -> (i32, i32) {
    %c0_i32 = arith.constant 0 : i32
    %c0_i32_0 = arith.constant 0 : i32
    %c0_i32_1 = arith.constant 0 : i32
    return %c0_i32, %c0_i32_0 : i32, i32
  }
  func.func @transform_2(%arg0: i32, %arg1: i32) -> (i32, i32) {
    %c0_i32 = arith.constant 0 : i32
    %c0_i32_0 = arith.constant 0 : i32
    %c0_i32_1 = arith.constant 0 : i32
    return %c0_i32, %c0_i32_0 : i32, i32
  }
  func.func @transform_3(%arg0: i32, %arg1: i32) -> (i32, i32) {
    %c0_i32 = arith.constant 0 : i32
    %c0_i32_0 = arith.constant 0 : i32
    return %arg0, %c0_i32 : i32, i32
  }
}

module attributes {stable_mosaic.version = 11 : i64} {
  func.func @_combine_kernel(%arg0: i32, %arg1: memref<2xf32, #tpu.memory_space<smem>>, %arg2: memref<256x128xbf16, #tpu.memory_space<vmem>>, %arg3: memref<128x128xbf16, #tpu.memory_space<vmem>>, %arg4: memref<1x128xf32, #tpu.memory_space<vmem>>, %arg5: memref<128x128xbf16, #tpu.memory_space<vmem>>, %arg6: memref<1x128xf32, #tpu.memory_space<vmem>>, %arg7: memref<256x128xbf16, #tpu.memory_space<vmem>>) attributes {dimension_semantics = [#tpu.dimension_semantics<parallel>], iteration_bounds = array<i64: 1>, scalar_prefetch = 0 : i64, scratch_operands = 0 : i64, tpu.core_type = #tpu.core_type<tc>, window_params = [{transform_indices = @transform_0, window_bounds = array<i64: 2>}, {transform_indices = @transform_1, window_bounds = array<i64: 256, 128>}, {pipeline_mode = #tpu.pipeline_mode<synchronous>, transform_indices = @transform_2, window_bounds = array<i64: 128, 128>}, {pipeline_mode = #tpu.pipeline_mode<synchronous>, transform_indices = @transform_3, window_bounds = array<i64: 1, 128>}, {pipeline_mode = #tpu.pipeline_mode<synchronous>, transform_indices = @transform_4, window_bounds = array<i64: 128, 128>}, {pipeline_mode = #tpu.pipeline_mode<synchronous>, transform_indices = @transform_5, window_bounds = array<i64: 1, 128>}, {transform_indices = @transform_6, window_bounds = array<i64: 256, 128>}]} {
    %c0 = arith.constant 0 : index
    %c0_0 = arith.constant 0 : index
    %0 = vector.load %arg2[%c0, %c0_0] : memref<256x128xbf16, #tpu.memory_space<vmem>>, vector<256x128xbf16>
    %c0_1 = arith.constant 0 : index
    %c0_2 = arith.constant 0 : index
    %1 = vector.load %arg3[%c0_1, %c0_2] : memref<128x128xbf16, #tpu.memory_space<vmem>>, vector<128x128xbf16>
    %cst = arith.constant dense<0.000000e+00> : vector<256x128xf32>
    %2 = tpu.matmul %0, %1, %cst {dimension_numbers = #tpu.dot_dimension_numbers<[1], [0], [0], [1], [0, 0, 1, 1], [], []>} : vector<256x128xbf16>, vector<128x128xbf16>, vector<256x128xf32> -> vector<256x128xf32>
    %c0_3 = arith.constant 0 : index
    %c0_4 = arith.constant 0 : index
    %3 = vector.load %arg4[%c0_3, %c0_4] : memref<1x128xf32, #tpu.memory_space<vmem>>, vector<1x128xf32>
    %4 = vector.broadcast %3 : vector<1x128xf32> to vector<256x128xf32>
    %5 = arith.addf %2, %4 : vector<256x128xf32>
    %cst_5 = arith.constant 0.000000e+00 : f32
    %6 = vector.broadcast %cst_5 : f32 to vector<256x128xf32>
    %7 = arith.maximumf %5, %6 : vector<256x128xf32>
    %8 = arith.truncf %7 : vector<256x128xf32> to vector<256x128xbf16>
    %c0_6 = arith.constant 0 : index
    %c0_7 = arith.constant 0 : index
    %9 = vector.load %arg5[%c0_6, %c0_7] : memref<128x128xbf16, #tpu.memory_space<vmem>>, vector<128x128xbf16>
    %cst_8 = arith.constant dense<0.000000e+00> : vector<256x128xf32>
    %10 = tpu.matmul %8, %9, %cst_8 {dimension_numbers = #tpu.dot_dimension_numbers<[1], [0], [0], [1], [0, 0, 1, 1], [], []>} : vector<256x128xbf16>, vector<128x128xbf16>, vector<256x128xf32> -> vector<256x128xf32>
    %c0_9 = arith.constant 0 : index
    %c0_10 = arith.constant 0 : index
    %11 = vector.load %arg6[%c0_9, %c0_10] : memref<1x128xf32, #tpu.memory_space<vmem>>, vector<1x128xf32>
    %12 = vector.broadcast %11 : vector<1x128xf32> to vector<256x128xf32>
    %13 = arith.addf %10, %12 : vector<256x128xf32>
    %c0_11 = arith.constant 0 : index
    %14 = memref.load %arg1[%c0_11] : memref<2xf32, #tpu.memory_space<smem>>
    %15 = arith.extf %0 : vector<256x128xbf16> to vector<256x128xf32>
    %16 = vector.broadcast %14 : f32 to vector<256x128xf32>
    %17 = arith.mulf %16, %15 : vector<256x128xf32>
    %c1 = arith.constant 1 : index
    %18 = memref.load %arg1[%c1] : memref<2xf32, #tpu.memory_space<smem>>
    %19 = vector.broadcast %18 : f32 to vector<256x128xf32>
    %20 = arith.mulf %19, %13 : vector<256x128xf32>
    %21 = arith.addf %17, %20 : vector<256x128xf32>
    %22 = arith.truncf %21 : vector<256x128xf32> to vector<256x128xbf16>
    %c0_12 = arith.constant 0 : index
    %c0_13 = arith.constant 0 : index
    %23 = vector.load %arg7[%c0_12, %c0_13] : memref<256x128xbf16, #tpu.memory_space<vmem>>, vector<256x128xbf16>
    tpu.vector_store %arg7[%c0_12, %c0_13], %22 {strides = array<i32>} : memref<256x128xbf16, #tpu.memory_space<vmem>>, vector<256x128xbf16>,
    return
  }
  func.func @transform_0(%arg0: i32) -> i32 {
    %c0_i32 = arith.constant 0 : i32
    %c0_i32_0 = arith.constant 0 : i32
    return %c0_i32 : i32
  }
  func.func @transform_1(%arg0: i32) -> (i32, i32) {
    %c0_i32 = arith.constant 0 : i32
    %c0_i32_0 = arith.constant 0 : i32
    return %arg0, %c0_i32 : i32, i32
  }
  func.func @transform_2(%arg0: i32) -> (i32, i32) {
    %c0_i32 = arith.constant 0 : i32
    %c0_i32_0 = arith.constant 0 : i32
    %c0_i32_1 = arith.constant 0 : i32
    return %c0_i32, %c0_i32_0 : i32, i32
  }
  func.func @transform_3(%arg0: i32) -> (i32, i32) {
    %c0_i32 = arith.constant 0 : i32
    %c0_i32_0 = arith.constant 0 : i32
    %c0_i32_1 = arith.constant 0 : i32
    return %c0_i32, %c0_i32_0 : i32, i32
  }
  func.func @transform_4(%arg0: i32) -> (i32, i32) {
    %c0_i32 = arith.constant 0 : i32
    %c0_i32_0 = arith.constant 0 : i32
    %c0_i32_1 = arith.constant 0 : i32
    return %c0_i32, %c0_i32_0 : i32, i32
  }
  func.func @transform_5(%arg0: i32) -> (i32, i32) {
    %c0_i32 = arith.constant 0 : i32
    %c0_i32_0 = arith.constant 0 : i32
    %c0_i32_1 = arith.constant 0 : i32
    return %c0_i32, %c0_i32_0 : i32, i32
  }
  func.func @transform_6(%arg0: i32) -> (i32, i32) {
    %c0_i32 = arith.constant 0 : i32
    %c0_i32_0 = arith.constant 0 : i32
    return %arg0, %c0_i32 : i32, i32
  }
}

module attributes {stable_mosaic.version = 11 : i64} {
  func.func @_decoder_kernel(%arg0: i32, %arg1: i32, %arg2: memref<128x128xbf16, #tpu.memory_space<vmem>>, %arg3: memref<128x128xbf16, #tpu.memory_space<vmem>>, %arg4: memref<128x128xbf16, #tpu.memory_space<vmem>>, %arg5: memref<128x128xf32, #tpu.memory_space<vmem>>, %arg6: memref<128x128xbf16, #tpu.memory_space<vmem>>) attributes {dimension_semantics = [#tpu.dimension_semantics<parallel>, #tpu.dimension_semantics<arbitrary>], iteration_bounds = array<i64: 1, 1>, scalar_prefetch = 0 : i64, scratch_operands = 1 : i64, tpu.core_type = #tpu.core_type<tc>, window_params = [{transform_indices = @transform_0, window_bounds = array<i64: 128, 128>}, {pipeline_mode = #tpu.pipeline_mode<synchronous>, transform_indices = @transform_1, window_bounds = array<i64: 128, 128>}, {transform_indices = @transform_2, window_bounds = array<i64: 128, 128>}, {transform_indices = @transform_3, window_bounds = array<i64: 128, 128>}]} {
    %c0_i32 = arith.constant 0 : i32
    %0 = arith.cmpi eq, %arg1, %c0_i32 : i32
    %1 = arith.extui %0 : i1 to i32
    %c0_i32_0 = arith.constant 0 : i32
    %2 = arith.cmpi ne, %1, %c0_i32_0 : i32
    scf.if %2 {
      %c0_6 = arith.constant 0 : index
      %c0_7 = arith.constant 0 : index
      %7 = vector.load %arg2[%c0_6, %c0_7] : memref<128x128xbf16, #tpu.memory_space<vmem>>, vector<128x128xbf16>
      %c0_8 = arith.constant 0 : index
      %c0_9 = arith.constant 0 : index
      %8 = vector.load %arg3[%c0_8, %c0_9] : memref<128x128xbf16, #tpu.memory_space<vmem>>, vector<128x128xbf16>
      %cst_10 = arith.constant dense<0.000000e+00> : vector<128x128xf32>
      %9 = tpu.matmul %7, %8, %cst_10 {dimension_numbers = #tpu.dot_dimension_numbers<[1], [0], [0], [1], [0, 0, 1, 1], [], []>} : vector<128x128xbf16>, vector<128x128xbf16>, vector<128x128xf32> -> vector<128x128xf32>
      %10 = arith.truncf %9 : vector<128x128xf32> to vector<128x128xbf16>
      %c0_11 = arith.constant 0 : index
      %c0_12 = arith.constant 0 : index
      %11 = vector.load %arg6[%c0_11, %c0_12] : memref<128x128xbf16, #tpu.memory_space<vmem>>, vector<128x128xbf16>
      tpu.vector_store %arg6[%c0_11, %c0_12], %10 {strides = array<i32>} : memref<128x128xbf16, #tpu.memory_space<vmem>>, vector<128x128xbf16>,
    } else {
    }
    %c0 = arith.constant 0 : index
    %c0_1 = arith.constant 0 : index
    %3 = vector.load %arg6[%c0, %c0_1] : memref<128x128xbf16, #tpu.memory_space<vmem>>, vector<128x128xbf16>
    %c0_2 = arith.constant 0 : index
    %c0_3 = arith.constant 0 : index
    %4 = vector.load %arg4[%c0_2, %c0_3] : memref<128x128xbf16, #tpu.memory_space<vmem>>, vector<128x128xbf16>
    %cst = arith.constant dense<0.000000e+00> : vector<128x128xf32>
    %5 = tpu.matmul %3, %4, %cst {dimension_numbers = #tpu.dot_dimension_numbers<[1], [0], [0], [1], [0, 0, 1, 1], [], []>} : vector<128x128xbf16>, vector<128x128xbf16>, vector<128x128xf32> -> vector<128x128xf32>
    %c0_4 = arith.constant 0 : index
    %c0_5 = arith.constant 0 : index
    %6 = vector.load %arg5[%c0_4, %c0_5] : memref<128x128xf32, #tpu.memory_space<vmem>>, vector<128x128xf32>
    tpu.vector_store %arg5[%c0_4, %c0_5], %5 {strides = array<i32>} : memref<128x128xf32, #tpu.memory_space<vmem>>, vector<128x128xf32>,
    return
  }
  func.func @transform_0(%arg0: i32, %arg1: i32) -> (i32, i32) {
    %c0_i32 = arith.constant 0 : i32
    %c0_i32_0 = arith.constant 0 : i32
    return %arg0, %c0_i32 : i32, i32
  }
  func.func @transform_1(%arg0: i32, %arg1: i32) -> (i32, i32) {
    %c0_i32 = arith.constant 0 : i32
    %c0_i32_0 = arith.constant 0 : i32
    %c0_i32_1 = arith.constant 0 : i32
    return %c0_i32, %c0_i32_0 : i32, i32
  }
  func.func @transform_2(%arg0: i32, %arg1: i32) -> (i32, i32) {
    %c0_i32 = arith.constant 0 : i32
    %c0_i32_0 = arith.constant 0 : i32
    return %c0_i32, %arg1 : i32, i32
  }
  func.func @transform_3(%arg0: i32, %arg1: i32) -> (i32, i32) {
    %c0_i32 = arith.constant 0 : i32
    return %arg0, %arg1 : i32, i32
  }
}

</mosaic_0001>

<llo_original>
// kernel: dual_encoder_forward.5
$region0: #{dual_encoder_forward.5}
  #allocation0 [shape = 'u32[]', space=smem, size = 0x4, offset = 0x4, fixed_abs, tag = 'smem constant byte address 0x4 - core index']
  #allocation1 [shape = 'u32[144,128]{1,0:T(1,128)}', space=vmem, size = 0x12000, scoped, tag = 'internal scratch']
  %s0 = inlined_call_operand.vmem [shape: bf16[256,128], index: 0, kind: input, shape index: {}]
  %s1 = inlined_call_operand.vmem [shape: bf16[128,128], index: 1, kind: input, shape index: {}]
  %s2 = inlined_call_operand.vmem [shape: bf16[256,128], index: 2, kind: output, shape index: {}]
  %s3 = sld [smem:[#allocation0]]
  $region18: #{dual_encoder_forward.5} parent=0
    _
  %s5 = ssub.s32 1, %s3
  %s6 = scalar_select 0, %s5, %s3
  // Predicated region
  $region2: #{dual_encoder_forward.5} parent=0 // pred_check
    _
  $region3: #{dual_encoder_forward.5} parent=0 // pred_check_branch
    %8 = sbr.rel (0) target = $region5
  $region4: #{dual_encoder_forward.5} parent=0 // pred_region
    _
  $region5: #{dual_encoder_forward.5} parent=0 // pred_fallthru
    _
  // Predicated region
  $region6: #{dual_encoder_forward.5} parent=0 // pred_check
    _
  $region7: #{dual_encoder_forward.5} parent=0 // pred_check_branch
    %10 = sbr.rel (0) target = $region9
  $region8: #{dual_encoder_forward.5} parent=0 // pred_region
    _
  $region9: #{dual_encoder_forward.5} parent=0 // pred_fallthru
    _
  %v12 = vld [vmem:[%s0] sm:$0xf]
  %v13 = vld [vmem:[%s0 + $0x4] sm:$0xf]
  %v14 = vld [vmem:[%s0 + $0x8] sm:$0xf]
  %v15 = vld [vmem:[%s0 + $0xc] sm:$0xf]
  %v16 = vld [vmem:[%s0 + $0x10] sm:$0xf]
  %v17 = vld [vmem:[%s0 + $0x14] sm:$0xf]
  %v18 = vld [vmem:[%s0 + $0x18] sm:$0xf]
  %v19 = vld [vmem:[%s0 + $0x1c] sm:$0xf]
  %v20 = vld [vmem:[%s0 + $0x20] sm:$0xf]
  %v21 = vld [vmem:[%s0 + $0x24] sm:$0xf]
  %v22 = vld [vmem:[%s0 + $0x28] sm:$0xf]
  %v23 = vld [vmem:[%s0 + $0x2c] sm:$0xf]
  %v24 = vld [vmem:[%s0 + $0x30] sm:$0xf]
  %v25 = vld [vmem:[%s0 + $0x34] sm:$0xf]
  %v26 = vld [vmem:[%s0 + $0x38] sm:$0xf]
  %v27 = vld [vmem:[%s0 + $0x3c] sm:$0xf]
  %v28 = vld [vmem:[%s0 + $0x40] sm:$0xf]
  %v29 = vld [vmem:[%s0 + $0x44] sm:$0xf]
  %v30 = vld [vmem:[%s0 + $0x48] sm:$0xf]
  %v31 = vld [vmem:[%s0 + $0x4c] sm:$0xf]
  %v32 = vld [vmem:[%s0 + $0x50] sm:$0xf]
  %v33 = vld [vmem:[%s0 + $0x54] sm:$0xf]
  %v34 = vld [vmem:[%s0 + $0x58] sm:$0xf]
  %v35 = vld [vmem:[%s0 + $0x5c] sm:$0xf]
  %v36 = vld [vmem:[%s0 + $0x60] sm:$0xf]
  %v37 = vld [vmem:[%s0 + $0x64] sm:$0xf]
  %v38 = vld [vmem:[%s0 + $0x68] sm:$0xf]
  %v39 = vld [vmem:[%s0 + $0x6c] sm:$0xf]
  %v40 = vld [vmem:[%s0 + $0x70] sm:$0xf]
  %v41 = vld [vmem:[%s0 + $0x74] sm:$0xf]
  %v42 = vld [vmem:[%s0 + $0x78] sm:$0xf]
  %v43 = vld [vmem:[%s0 + $0x7c] sm:$0xf]
  %v44 = vld [vmem:[%s1] sm:$0xf]
  %v45 = vld [vmem:[%s1 + $0x4] sm:$0xf]
  %v46 = vld [vmem:[%s1 + $0x8] sm:$0xf]
  %v47 = vld [vmem:[%s1 + $0xc] sm:$0xf]
  %v48 = vld [vmem:[%s1 + $0x10] sm:$0xf]
  %v49 = vld [vmem:[%s1 + $0x14] sm:$0xf]
  %v50 = vld [vmem:[%s1 + $0x18] sm:$0xf]
  %v51 = vld [vmem:[%s1 + $0x1c] sm:$0xf]
  %v52 = vld [vmem:[%s1 + $0x20] sm:$0xf]
  %v53 = vld [vmem:[%s1 + $0x24] sm:$0xf]
  %v54 = vld [vmem:[%s1 + $0x28] sm:$0xf]
  %v55 = vld [vmem:[%s1 + $0x2c] sm:$0xf]
  %v56 = vld [vmem:[%s1 + $0x30] sm:$0xf]
  %v57 = vld [vmem:[%s1 + $0x34] sm:$0xf]
  %v58 = vld [vmem:[%s1 + $0x38] sm:$0xf]
  %v59 = vld [vmem:[%s1 + $0x3c] sm:$0xf]
  %v92 = vunpack.c.l.b16 %v12
  %v93 = vunpack.c.l.b16 %v13
  %v94 = vunpack.c.l.b16 %v14
  %v95 = vunpack.c.l.b16 %v15
  %v96 = vunpack.c.l.b16 %v16
  %v97 = vunpack.c.l.b16 %v17
  %v98 = vunpack.c.l.b16 %v18
  %v99 = vunpack.c.l.b16 %v19
  %v100 = vunpack.c.l.b16 %v20
  %v101 = vunpack.c.l.b16 %v21
  %v102 = vunpack.c.l.b16 %v22
  %v103 = vunpack.c.l.b16 %v23
  %v104 = vunpack.c.l.b16 %v24
  %v105 = vunpack.c.l.b16 %v25
  %v106 = vunpack.c.l.b16 %v26
  %v107 = vunpack.c.l.b16 %v27
  %v108 = vunpack.c.l.b16 %v28
  %v109 = vunpack.c.l.b16 %v29
  %v110 = vunpack.c.l.b16 %v30
  %v111 = vunpack.c.l.b16 %v31
  %v112 = vunpack.c.l.b16 %v32
  %v113 = vunpack.c.l.b16 %v33
  %v114 = vunpack.c.l.b16 %v34
  %v115 = vunpack.c.l.b16 %v35
  %v116 = vunpack.c.l.b16 %v36
  %v117 = vunpack.c.l.b16 %v37
  %v118 = vunpack.c.l.b16 %v38
  %v119 = vunpack.c.l.b16 %v39
  %v120 = vunpack.c.l.b16 %v40
  %v121 = vunpack.c.l.b16 %v41
  %v122 = vunpack.c.l.b16 %v42
  %v123 = vunpack.c.l.b16 %v43
  %v124 = vpack.c.b16 %v93, %v92
  %v125 = vpack.c.b16 %v95, %v94
  %v126 = vpack.c.b16 %v97, %v96
  %v127 = vpack.c.b16 %v99, %v98
  %v128 = vpack.c.b16 %v101, %v100
  %v129 = vpack.c.b16 %v103, %v102
  %v130 = vpack.c.b16 %v105, %v104
  %v131 = vpack.c.b16 %v107, %v106
  %v132 = vpack.c.b16 %v109, %v108
  %v133 = vpack.c.b16 %v111, %v110
  %v134 = vpack.c.b16 %v113, %v112
  %v135 = vpack.c.b16 %v115, %v114
  %v136 = vpack.c.b16 %v117, %v116
  %v137 = vpack.c.b16 %v119, %v118
  %v138 = vpack.c.b16 %v121, %v120
  %v139 = vpack.c.b16 %v123, %v122
  %v172 = vunpack.c.l.b16 %v44
  %v173 = vunpack.c.l.b16 %v45
  %v174 = vunpack.c.l.b16 %v46
  %v175 = vunpack.c.l.b16 %v47
  %v176 = vunpack.c.l.b16 %v48
  %v177 = vunpack.c.l.b16 %v49
  %v178 = vunpack.c.l.b16 %v50
  %v179 = vunpack.c.l.b16 %v51
  %v180 = vunpack.c.l.b16 %v52
  %v181 = vunpack.c.l.b16 %v53
  %v182 = vunpack.c.l.b16 %v54
  %v183 = vunpack.c.l.b16 %v55
  %v184 = vunpack.c.l.b16 %v56
  %v185 = vunpack.c.l.b16 %v57
  %v186 = vunpack.c.l.b16 %v58
  %v187 = vunpack.c.l.b16 %v59
  %v188 = vpack.c.b16 %v173, %v172
  %v189 = vpack.c.b16 %v175, %v174
  %v190 = vpack.c.b16 %v177, %v176
  %v191 = vpack.c.b16 %v179, %v178
  %v192 = vpack.c.b16 %v181, %v180
  %v193 = vpack.c.b16 %v183, %v182
  %v194 = vpack.c.b16 %v185, %v184
  %v195 = vpack.c.b16 %v187, %v186
  %204 = vmatprep.subr.bf16.mxu0 0
  %205 = vmatpush1.bf16.msra.mxu0 %v188
  %206 = vmatprep.subr.bf16.mxu0 0
  %207 = vmatpush1.bf16.msra.mxu0 %v189
  %208 = vmatprep.subr.bf16.mxu0 0
  %209 = vmatpush1.bf16.msra.mxu0 %v190
  %210 = vmatprep.subr.bf16.mxu0 0
  %211 = vmatpush1.bf16.msra.mxu0 %v191
  %212 = vmatprep.subr.bf16.mxu0 0
  %213 = vmatpush1.bf16.msra.mxu0 %v192
  %214 = vmatprep.subr.bf16.mxu0 0
  %215 = vmatpush1.bf16.msra.mxu0 %v193
  %216 = vmatprep.subr.bf16.mxu0 0
  %217 = vmatpush1.bf16.msra.mxu0 %v194
  %218 = vmatprep.subr.bf16.mxu0 0
  %219 = vmatpush1.bf16.msra.mxu0 %v195
  %220 = vmatprep.subr.bf16.mxu0 0
  %221 = vmatpush1.bf16.msra.mxu0 0
  %222 = vmatprep.subr.bf16.mxu0 0
  %223 = vmatpush1.bf16.msra.mxu0 0
  %224 = vmatprep.subr.bf16.mxu0 0
  %225 = vmatpush1.bf16.msra.mxu0 0
  %226 = vmatprep.subr.bf16.mxu0 0
  %227 = vmatpush1.bf16.msra.mxu0 0
  %228 = vmatprep.subr.bf16.mxu0 0
  %229 = vmatpush1.bf16.msra.mxu0 0
  %230 = vmatprep.subr.bf16.mxu0 0
  %231 = vmatpush1.bf16.msra.mxu0 0
  %232 = vmatprep.subr.bf16.mxu0 0
  %233 = vmatpush1.bf16.msra.mxu0 0
  %234 = vmatprep.subr.bf16.mxu0 0
  %235 = vmatpush1.bf16.msra.mxu0 0
  %236 = vmatprep.mubr.bf16.mxu0 0
  %237 = vmatmul.mubr.bf16.gmra.mrb[0].mxu0 %v124
  %v238 = vpop.f32.mrb[0].mxu0
  %v239 = vadd.f32 0.0, %v238
  %v240 = vpop.f32.mrb[0].mxu0
  %v241 = vpop.f32.mrb[0].mxu0
  %v242 = vadd.f32 0.0, %v241
  %v243 = vpop.f32.mrb[0].mxu0
  %244 = vmatprep.mubr.bf16.mxu0 0
  %245 = vmatmul.mubr.bf16.gmra.mrb[0].mxu0 %v125
  %v246 = vpop.f32.mrb[0].mxu0
  %v247 = vadd.f32 0.0, %v246
  %v248 = vpop.f32.mrb[0].mxu0
  %v249 = vpop.f32.mrb[0].mxu0
  %v250 = vadd.f32 0.0, %v249
  %v251 = vpop.f32.mrb[0].mxu0
  %252 = vmatprep.mubr.bf16.mxu0 0
  %253 = vmatmul.mubr.bf16.gmra.mrb[0].mxu0 %v126
  %v254 = vpop.f32.mrb[0].mxu0
  %v255 = vadd.f32 0.0, %v254
  %v256 = vpop.f32.mrb[0].mxu0
  %v257 = vpop.f32.mrb[0].mxu0
  %v258 = vadd.f32 0.0, %v257
  %v259 = vpop.f32.mrb[0].mxu0
  %260 = vmatprep.mubr.bf16.mxu0 0
  %261 = vmatmul.mubr.bf16.gmra.mrb[0].mxu0 %v127
  %v262 = vpop.f32.mrb[0].mxu0
  %v263 = vadd.f32 0.0, %v262
  %v264 = vpop.f32.mrb[0].mxu0
  %v265 = vpop.f32.mrb[0].mxu0
  %v266 = vadd.f32 0.0, %v265
  %v267 = vpop.f32.mrb[0].mxu0
  %268 = vmatprep.mubr.bf16.mxu0 0
  %269 = vmatmul.mubr.bf16.gmra.mrb[0].mxu0 %v128
  %v270 = vpop.f32.mrb[0].mxu0
  %v271 = vadd.f32 0.0, %v270
  %v272 = vpop.f32.mrb[0].mxu0
  %v273 = vpop.f32.mrb[0].mxu0
  %v274 = vadd.f32 0.0, %v273
  %v275 = vpop.f32.mrb[0].mxu0
  %276 = vmatprep.mubr.bf16.mxu0 0
  %277 = vmatmul.mubr.bf16.gmra.mrb[0].mxu0 %v129
  %v278 = vpop.f32.mrb[0].mxu0
  %v279 = vadd.f32 0.0, %v278
  %v280 = vpop.f32.mrb[0].mxu0
  %v281 = vpop.f32.mrb[0].mxu0
  %v282 = vadd.f32 0.0, %v281
  %v283 = vpop.f32.mrb[0].mxu0
  %284 = vmatprep.mubr.bf16.mxu0 0
  %285 = vmatmul.mubr.bf16.gmra.mrb[0].mxu0 %v130
  %v286 = vpop.f32.mrb[0].mxu0
  %v287 = vadd.f32 0.0, %v286
  %v288 = vpop.f32.mrb[0].mxu0
  %v289 = vpop.f32.mrb[0].mxu0
  %v290 = vadd.f32 0.0, %v289
  %v291 = vpop.f32.mrb[0].mxu0
  %292 = vmatprep.mubr.bf16.mxu0 0
  %293 = vmatmul.mubr.bf16.gmra.mrb[0].mxu0 %v131
  %v294 = vpop.f32.mrb[0].mxu0
  %v295 = vadd.f32 0.0, %v294
  %v296 = vpop.f32.mrb[0].mxu0
  %v297 = vpop.f32.mrb[0].mxu0
  %v298 = vadd.f32 0.0, %v297
  %v299 = vpop.f32.mrb[0].mxu0
  %300 = vmatprep.mubr.bf16.mxu0 0
  %301 = vmatmul.mubr.bf16.gmra.mrb[0].mxu0 %v132
  %v302 = vpop.f32.mrb[0].mxu0
  %v303 = vadd.f32 0.0, %v302
  %v304 = vpop.f32.mrb[0].mxu0
  %v305 = vpop.f32.mrb[0].mxu0
  %v306 = vadd.f32 0.0, %v305
  %v307 = vpop.f32.mrb[0].mxu0
  %308 = vmatprep.mubr.bf16.mxu0 0
  %309 = vmatmul.mubr.bf16.gmra.mrb[0].mxu0 %v133
  %v310 = vpop.f32.mrb[0].mxu0
  %v311 = vadd.f32 0.0, %v310
  %v312 = vpop.f32.mrb[0].mxu0
  %v313 = vpop.f32.mrb[0].mxu0
  %v314 = vadd.f32 0.0, %v313
  %v315 = vpop.f32.mrb[0].mxu0
  %316 = vmatprep.mubr.bf16.mxu0 0
  %317 = vmatmul.mubr.bf16.gmra.mrb[0].mxu0 %v134
  %v318 = vpop.f32.mrb[0].mxu0
  %v319 = vadd.f32 0.0, %v318
  %v320 = vpop.f32.mrb[0].mxu0
  %v321 = vpop.f32.mrb[0].mxu0
  %v322 = vadd.f32 0.0, %v321
  %v323 = vpop.f32.mrb[0].mxu0
  %324 = vmatprep.mubr.bf16.mxu0 0
  %325 = vmatmul.mubr.bf16.gmra.mrb[0].mxu0 %v135
  %v326 = vpop.f32.mrb[0].mxu0
  %v327 = vadd.f32 0.0, %v326
  %v328 = vpop.f32.mrb[0].mxu0
  %v329 = vpop.f32.mrb[0].mxu0
  %v330 = vadd.f32 0.0, %v329
  %v331 = vpop.f32.mrb[0].mxu0
  %332 = vmatprep.mubr.bf16.mxu0 0
  %333 = vmatmul.mubr.bf16.gmra.mrb[0].mxu0 %v136
  %v334 = vpop.f32.mrb[0].mxu0
  %v335 = vadd.f32 0.0, %v334
  %v336 = vpop.f32.mrb[0].mxu0
  %v337 = vpop.f32.mrb[0].mxu0
  %v338 = vadd.f32 0.0, %v337
  %v339 = vpop.f32.mrb[0].mxu0
  %340 = vmatprep.mubr.bf16.mxu0 0
  %341 = vmatmul.mubr.bf16.gmra.mrb[0].mxu0 %v137
  %v342 = vpop.f32.mrb[0].mxu0
  %v343 = vadd.f32 0.0, %v342
  %v344 = vpop.f32.mrb[0].mxu0
  %v345 = vpop.f32.mrb[0].mxu0
  %v346 = vadd.f32 0.0, %v345
  %v347 = vpop.f32.mrb[0].mxu0
  %348 = vmatprep.mubr.bf16.mxu0 0
  %349 = vmatmul.mubr.bf16.gmra.mrb[0].mxu0 %v138
  %v350 = vpop.f32.mrb[0].mxu0
  %v351 = vadd.f32 0.0, %v350
  %v352 = vpop.f32.mrb[0].mxu0
  %v353 = vpop.f32.mrb[0].mxu0
  %v354 = vadd.f32 0.0, %v353
  %v355 = vpop.f32.mrb[0].mxu0
  %356 = vmatprep.mubr.bf16.mxu0 0
  %357 = vmatmul.mubr.bf16.gmra.mrb[0].mxu0 %v139
  %v358 = vpop.f32.mrb[0].mxu0
  %v359 = vadd.f32 0.0, %v358
  %v360 = vpop.f32.mrb[0].mxu0
  %v361 = vpop.f32.mrb[0].mxu0
  %v362 = vadd.f32 0.0, %v361
  %v363 = vpop.f32.mrb[0].mxu0
  %364 = vdwg.mxu0
  %v365 = vpack.c.bf16 %v242, %v239
  %v366 = vpack.c.bf16 %v250, %v247
  %v367 = vpack.c.bf16 %v258, %v255
  %v368 = vpack.c.bf16 %v266, %v263
  %v369 = vpack.c.bf16 %v274, %v271
  %v370 = vpack.c.bf16 %v282, %v279
  %v371 = vpack.c.bf16 %v290, %v287
  %v372 = vpack.c.bf16 %v298, %v295
  %v373 = vpack.c.bf16 %v306, %v303
  %v374 = vpack.c.bf16 %v314, %v311
  %v375 = vpack.c.bf16 %v322, %v319
  %v376 = vpack.c.bf16 %v330, %v327
  %v377 = vpack.c.bf16 %v338, %v335
  %v378 = vpack.c.bf16 %v346, %v343
  %v379 = vpack.c.bf16 %v354, %v351
  %v380 = vpack.c.bf16 %v362, %v359
  %v397 = vunpack.c.l.b16 %v365
  %v398 = vunpack.c.h.b16 %v365
  %v399 = vunpack.c.l.b16 %v366
  %v400 = vunpack.c.h.b16 %v366
  %v401 = vunpack.c.l.b16 %v367
  %v402 = vunpack.c.h.b16 %v367
  %v403 = vunpack.c.l.b16 %v368
  %v404 = vunpack.c.h.b16 %v368
  %v405 = vunpack.c.l.b16 %v369
  %v406 = vunpack.c.h.b16 %v369
  %v407 = vunpack.c.l.b16 %v370
  %v408 = vunpack.c.h.b16 %v370
  %v409 = vunpack.c.l.b16 %v371
  %v410 = vunpack.c.h.b16 %v371
  %v411 = vunpack.c.l.b16 %v372
  %v412 = vunpack.c.h.b16 %v372
  %v413 = vunpack.c.l.b16 %v373
  %v414 = vunpack.c.h.b16 %v373
  %v415 = vunpack.c.l.b16 %v374
  %v416 = vunpack.c.h.b16 %v374
  %v417 = vunpack.c.l.b16 %v375
  %v418 = vunpack.c.h.b16 %v375
  %v419 = vunpack.c.l.b16 %v376
  %v420 = vunpack.c.h.b16 %v376
  %v421 = vunpack.c.l.b16 %v377
  %v422 = vunpack.c.h.b16 %v377
  %v423 = vunpack.c.l.b16 %v378
  %v424 = vunpack.c.h.b16 %v378
  %v425 = vunpack.c.l.b16 %v379
  %v426 = vunpack.c.h.b16 %v379
  %v427 = vunpack.c.l.b16 %v380
  %v428 = vunpack.c.h.b16 %v380
  %v429 = vpack.c.b16 %v397, %v397
  %v430 = vpack.c.b16 %v398, %v398
  %v431 = vpack.c.b16 %v399, %v399
  %v432 = vpack.c.b16 %v400, %v400
  %v433 = vpack.c.b16 %v401, %v401
  %v434 = vpack.c.b16 %v402, %v402
  %v435 = vpack.c.b16 %v403, %v403
  %v436 = vpack.c.b16 %v404, %v404
  %v437 = vpack.c.b16 %v405, %v405
  %v438 = vpack.c.b16 %v406, %v406
  %v439 = vpack.c.b16 %v407, %v407
  %v440 = vpack.c.b16 %v408, %v408
  %v441 = vpack.c.b16 %v409, %v409
  %v442 = vpack.c.b16 %v410, %v410
  %v443 = vpack.c.b16 %v411, %v411
  %v444 = vpack.c.b16 %v412, %v412
  %v445 = vpack.c.b16 %v413, %v413
  %v446 = vpack.c.b16 %v414, %v414
  %v447 = vpack.c.b16 %v415, %v415
  %v448 = vpack.c.b16 %v416, %v416
  %v449 = vpack.c.b16 %v417, %v417
  %v450 = vpack.c.b16 %v418, %v418
  %v451 = vpack.c.b16 %v419, %v419
  %v452 = vpack.c.b16 %v420, %v420
  %v453 = vpack.c.b16 %v421, %v421
  %v454 = vpack.c.b16 %v422, %v422
  %v455 = vpack.c.b16 %v423, %v423
  %v456 = vpack.c.b16 %v424, %v424
  %v457 = vpack.c.b16 %v425, %v425
  %v458 = vpack.c.b16 %v426, %v426
  %v459 = vpack.c.b16 %v427, %v427
  %v460 = vpack.c.b16 %v428, %v428
  %493 = vst [vmem:[%s2] sm:$0xf] %v429
  %494 = vst [vmem:[%s2 + $0x4] sm:$0xf] %v430
  %495 = vst [vmem:[%s2 + $0x8] sm:$0xf] %v431
  %496 = vst [vmem:[%s2 + $0xc] sm:$0xf] %v432
  %497 = vst [vmem:[%s2 + $0x10] sm:$0xf] %v433
  %498 = vst [vmem:[%s2 + $0x14] sm:$0xf] %v434
  %499 = vst [vmem:[%s2 + $0x18] sm:$0xf] %v435
  %500 = vst [vmem:[%s2 + $0x1c] sm:$0xf] %v436
  %501 = vst [vmem:[%s2 + $0x20] sm:$0xf] %v437
  %502 = vst [vmem:[%s2 + $0x24] sm:$0xf] %v438
  %503 = vst [vmem:[%s2 + $0x28] sm:$0xf] %v439
  %504 = vst [vmem:[%s2 + $0x2c] sm:$0xf] %v440
  %505 = vst [vmem:[%s2 + $0x30] sm:$0xf] %v441
  %506 = vst [vmem:[%s2 + $0x34] sm:$0xf] %v442
  %507 = vst [vmem:[%s2 + $0x38] sm:$0xf] %v443
  %508 = vst [vmem:[%s2 + $0x3c] sm:$0xf] %v444
  %509 = vst [vmem:[%s2 + $0x40] sm:$0xf] %v445
  %510 = vst [vmem:[%s2 + $0x44] sm:$0xf] %v446
  %511 = vst [vmem:[%s2 + $0x48] sm:$0xf] %v447
  %512 = vst [vmem:[%s2 + $0x4c] sm:$0xf] %v448
  %513 = vst [vmem:[%s2 + $0x50] sm:$0xf] %v449
  %514 = vst [vmem:[%s2 + $0x54] sm:$0xf] %v450
  %515 = vst [vmem:[%s2 + $0x58] sm:$0xf] %v451
  %516 = vst [vmem:[%s2 + $0x5c] sm:$0xf] %v452
  %517 = vst [vmem:[%s2 + $0x60] sm:$0xf] %v453
  %518 = vst [vmem:[%s2 + $0x64] sm:$0xf] %v454
  %519 = vst [vmem:[%s2 + $0x68] sm:$0xf] %v455
  %520 = vst [vmem:[%s2 + $0x6c] sm:$0xf] %v456
  %521 = vst [vmem:[%s2 + $0x70] sm:$0xf] %v457
  %522 = vst [vmem:[%s2 + $0x74] sm:$0xf] %v458
  %523 = vst [vmem:[%s2 + $0x78] sm:$0xf] %v459
  %524 = vst [vmem:[%s2 + $0x7c] sm:$0xf] %v460
  // Predicated region
  $region10: #{dual_encoder_forward.5} parent=0 // pred_check
    _
  $region11: #{dual_encoder_forward.5} parent=0 // pred_check_branch
    %526 = sbr.rel (0) target = $region13
  $region12: #{dual_encoder_forward.5} parent=0 // pred_region
    _
  $region13: #{dual_encoder_forward.5} parent=0 // pred_fallthru
    _
  // Predicated region
  $region14: #{dual_encoder_forward.5} parent=0 // pred_check
    _
  $region15: #{dual_encoder_forward.5} parent=0 // pred_check_branch
    %528 = sbr.rel (0) target = $region17
  $region16: #{dual_encoder_forward.5} parent=0 // pred_region
    _
  $region17: #{dual_encoder_forward.5} parent=0 // pred_fallthru
    _

// kernel: dual_encoder_forward.7
$region0: #{dual_encoder_forward.7}
  #allocation0 [shape = 'u32[]', space=smem, size = 0x4, offset = 0x4, fixed_abs, tag = 'smem constant byte address 0x4 - core index']
  #allocation1 [shape = 'u32[144,128]{1,0:T(1,128)}', space=vmem, size = 0x12000, scoped, tag = 'internal scratch']
  #allocation2 [shape = 'f32[256,128]{1,0:T(8,128)}', space=vmem, size = 0x20000, scoped, tag = 'scratch operand']
  %s0 = inlined_call_operand.vmem [shape: bf16[256,256], index: 0, kind: input, shape index: {}]
  %s1 = inlined_call_operand.vmem [shape: bf16[256,128], index: 1, kind: input, shape index: {}]
  %s2 = inlined_call_operand.vmem [shape: f32[1,128], index: 2, kind: input, shape index: {}]
  %s3 = inlined_call_operand.vmem [shape: bf16[256,128], index: 3, kind: output, shape index: {}]
  %s4 = sld [smem:[#allocation0]]
  $region30: #{dual_encoder_forward.7} parent=0
    _
  %s6 = ssub.s32 1, %s4
  %s7 = scalar_select 0, %s6, %s4
  // Predicated region
  $region2: #{dual_encoder_forward.7} parent=0 // pred_check
    _
  $region3: #{dual_encoder_forward.7} parent=0 // pred_check_branch
    %9 = sbr.rel (0) target = $region5
  $region4: #{dual_encoder_forward.7} parent=0 // pred_region
    _
  $region5: #{dual_encoder_forward.7} parent=0 // pred_fallthru
    _
  // Predicated region
  $region6: #{dual_encoder_forward.7} parent=0 // pred_check
    _
  $region7: #{dual_encoder_forward.7} parent=0 // pred_check_branch
    %11 = sbr.rel (0) target = $region9
  $region8: #{dual_encoder_forward.7} parent=0 // pred_region
    _
  $region9: #{dual_encoder_forward.7} parent=0 // pred_fallthru
    _
  // Predicated region
  $region10: #{dual_encoder_forward.7} parent=0 // pred_check
    _
  $region11: #{dual_encoder_forward.7} parent=0 // pred_check_branch
    %13 = sbr.rel (0) target = $region13
  $region12: #{dual_encoder_forward.7} parent=0 // pred_region
    _
  $region13: #{dual_encoder_forward.7} parent=0 // pred_fallthru
    _
  %p15 = scmp.eq.s32.totalorder 0, 0
  // Predicated region
  $region14: #{dual_encoder_forward.7} parent=0 // pred_check
    %p16 = pneg %p15
  $region15: #{dual_encoder_forward.7} parent=0 // pred_check_branch
    %18 = sbr.rel (%p16) target = $region17
  $region16: #{dual_encoder_forward.7} parent=0 // pred_region
    %19 = vst [vmem:[#allocation2] sm:$0xff] 0.0
    %20 = vst [vmem:[#allocation2 + $0x8] sm:$0xff] 0.0
    %21 = vst [vmem:[#allocation2 + $0x10] sm:$0xff] 0.0
    %22 = vst [vmem:[#allocation2 + $0x18] sm:$0xff] 0.0
    %23 = vst [vmem:[#allocation2 + $0x20] sm:$0xff] 0.0
    %24 = vst [vmem:[#allocation2 + $0x28] sm:$0xff] 0.0
    %25 = vst [vmem:[#allocation2 + $0x30] sm:$0xff] 0.0
    %26 = vst [vmem:[#allocation2 + $0x38] sm:$0xff] 0.0
    %27 = vst [vmem:[#allocation2 + $0x40] sm:$0xff] 0.0
    %28 = vst [vmem:[#allocation2 + $0x48] sm:$0xff] 0.0
    %29 = vst [vmem:[#allocation2 + $0x50] sm:$0xff] 0.0
    %30 = vst [vmem:[#allocation2 + $0x58] sm:$0xff] 0.0
    %31 = vst [vmem:[#allocation2 + $0x60] sm:$0xff] 0.0
    %32 = vst [vmem:[#allocation2 + $0x68] sm:$0xff] 0.0
    %33 = vst [vmem:[#allocation2 + $0x70] sm:$0xff] 0.0
    %34 = vst [vmem:[#allocation2 + $0x78] sm:$0xff] 0.0
    %35 = vst [vmem:[#allocation2 + $0x80] sm:$0xff] 0.0
    %36 = vst [vmem:[#allocation2 + $0x88] sm:$0xff] 0.0
    %37 = vst [vmem:[#allocation2 + $0x90] sm:$0xff] 0.0
    %38 = vst [vmem:[#allocation2 + $0x98] sm:$0xff] 0.0
    %39 = vst [vmem:[#allocation2 + $0xa0] sm:$0xff] 0.0
    %40 = vst [vmem:[#allocation2 + $0xa8] sm:$0xff] 0.0
    %41 = vst [vmem:[#allocation2 + $0xb0] sm:$0xff] 0.0
    %42 = vst [vmem:[#allocation2 + $0xb8] sm:$0xff] 0.0
    %43 = vst [vmem:[#allocation2 + $0xc0] sm:$0xff] 0.0
    %44 = vst [vmem:[#allocation2 + $0xc8] sm:$0xff] 0.0
    %45 = vst [vmem:[#allocation2 + $0xd0] sm:$0xff] 0.0
    %46 = vst [vmem:[#allocation2 + $0xd8] sm:$0xff] 0.0
    %47 = vst [vmem:[#allocation2 + $0xe0] sm:$0xff] 0.0
    %48 = vst [vmem:[#allocation2 + $0xe8] sm:$0xff] 0.0
    %49 = vst [vmem:[#allocation2 + $0xf0] sm:$0xff] 0.0
    %50 = vst [vmem:[#allocation2 + $0xf8] sm:$0xff] 0.0
  $region17: #{dual_encoder_forward.7} parent=0 // pred_fallthru
    _
  %s51 = smul.u32 0, 256
  %v52 = vld [vmem:[#allocation2] sm:$0xff]
  %v53 = vld [vmem:[#allocation2 + $0x8] sm:$0xff]
  %v54 = vld [vmem:[#allocation2 + $0x10] sm:$0xff]
  %v55 = vld [vmem:[#allocation2 + $0x18] sm:$0xff]
  %v56 = vld [vmem:[#allocation2 + $0x20] sm:$0xff]
  %v57 = vld [vmem:[#allocation2 + $0x28] sm:$0xff]
  %v58 = vld [vmem:[#allocation2 + $0x30] sm:$0xff]
  %v59 = vld [vmem:[#allocation2 + $0x38] sm:$0xff]
  %v60 = vld [vmem:[#allocation2 + $0x40] sm:$0xff]
  %v61 = vld [vmem:[#allocation2 + $0x48] sm:$0xff]
  %v62 = vld [vmem:[#allocation2 + $0x50] sm:$0xff]
  %v63 = vld [vmem:[#allocation2 + $0x58] sm:$0xff]
  %v64 = vld [vmem:[#allocation2 + $0x60] sm:$0xff]
  %v65 = vld [vmem:[#allocation2 + $0x68] sm:$0xff]
  %v66 = vld [vmem:[#allocation2 + $0x70] sm:$0xff]
  %v67 = vld [vmem:[#allocation2 + $0x78] sm:$0xff]
  %v68 = vld [vmem:[#allocation2 + $0x80] sm:$0xff]
  %v69 = vld [vmem:[#allocation2 + $0x88] sm:$0xff]
  %v70 = vld [vmem:[#allocation2 + $0x90] sm:$0xff]
  %v71 = vld [vmem:[#allocation2 + $0x98] sm:$0xff]
  %v72 = vld [vmem:[#allocation2 + $0xa0] sm:$0xff]
  %v73 = vld [vmem:[#allocation2 + $0xa8] sm:$0xff]
  %v74 = vld [vmem:[#allocation2 + $0xb0] sm:$0xff]
  %v75 = vld [vmem:[#allocation2 + $0xb8] sm:$0xff]
  %v76 = vld [vmem:[#allocation2 + $0xc0] sm:$0xff]
  %v77 = vld [vmem:[#allocation2 + $0xc8] sm:$0xff]
  %v78 = vld [vmem:[#allocation2 + $0xd0] sm:$0xff]
  %v79 = vld [vmem:[#allocation2 + $0xd8] sm:$0xff]
  %v80 = vld [vmem:[#allocation2 + $0xe0] sm:$0xff]
  %v81 = vld [vmem:[#allocation2 + $0xe8] sm:$0xff]
  %v82 = vld [vmem:[#allocation2 + $0xf0] sm:$0xff]
  %v83 = vld [vmem:[#allocation2 + $0xf8] sm:$0xff]
  %v84 = vld [vmem:[%s0] sm:$0xff]
  %v85 = vld [vmem:[%s0 + $0x8] sm:$0xff]
  %v86 = vld [vmem:[%s0 + $0x10] sm:$0xff]
  %v87 = vld [vmem:[%s0 + $0x18] sm:$0xff]
  %v88 = vld [vmem:[%s0 + $0x20] sm:$0xff]
  %v89 = vld [vmem:[%s0 + $0x28] sm:$0xff]
  %v90 = vld [vmem:[%s0 + $0x30] sm:$0xff]
  %v91 = vld [vmem:[%s0 + $0x38] sm:$0xff]
  %v92 = vld [vmem:[%s0 + $0x40] sm:$0xff]
  %v93 = vld [vmem:[%s0 + $0x48] sm:$0xff]
  %v94 = vld [vmem:[%s0 + $0x50] sm:$0xff]
  %v95 = vld [vmem:[%s0 + $0x58] sm:$0xff]
  %v96 = vld [vmem:[%s0 + $0x60] sm:$0xff]
  %v97 = vld [vmem:[%s0 + $0x68] sm:$0xff]
  %v98 = vld [vmem:[%s0 + $0x70] sm:$0xff]
  %v99 = vld [vmem:[%s0 + $0x78] sm:$0xff]
  %v100 = vld [vmem:[%s0 + $0x80] sm:$0xff]
  %v101 = vld [vmem:[%s0 + $0x88] sm:$0xff]
  %v102 = vld [vmem:[%s0 + $0x90] sm:$0xff]
  %v103 = vld [vmem:[%s0 + $0x98] sm:$0xff]
  %v104 = vld [vmem:[%s0 + $0xa0] sm:$0xff]
  %v105 = vld [vmem:[%s0 + $0xa8] sm:$0xff]
  %v106 = vld [vmem:[%s0 + $0xb0] sm:$0xff]
  %v107 = vld [vmem:[%s0 + $0xb8] sm:$0xff]
  %v108 = vld [vmem:[%s0 + $0xc0] sm:$0xff]
  %v109 = vld [vmem:[%s0 + $0xc8] sm:$0xff]
  %v110 = vld [vmem:[%s0 + $0xd0] sm:$0xff]
  %v111 = vld [vmem:[%s0 + $0xd8] sm:$0xff]
  %v112 = vld [vmem:[%s0 + $0xe0] sm:$0xff]
  %v113 = vld [vmem:[%s0 + $0xe8] sm:$0xff]
  %v114 = vld [vmem:[%s0 + $0xf0] sm:$0xff]
  %v115 = vld [vmem:[%s0 + $0xf8] sm:$0xff]
  %s116 = sshra.s32 %s51, 3
  %s117 = sand.u32 %s51, 7
  %s118 = smul.addr %s116, 4
  %s119 = scalar_lea.vmem %s1, %s118
  %v120 = vld [vmem:[%s119] sm:$0xf]
  %v121 = vld [vmem:[%s119 + $0x4] sm:$0xf]
  %v122 = vld [vmem:[%s119 + $0x8] sm:$0xf]
  %v123 = vld [vmem:[%s119 + $0xc] sm:$0xf]
  %v124 = vld [vmem:[%s119 + $0x10] sm:$0xf]
  %v125 = vld [vmem:[%s119 + $0x14] sm:$0xf]
  %v126 = vld [vmem:[%s119 + $0x18] sm:$0xf]
  %v127 = vld [vmem:[%s119 + $0x1c] sm:$0xf]
  %v128 = vld [vmem:[%s119 + $0x20] sm:$0xf]
  %v129 = vld [vmem:[%s119 + $0x24] sm:$0xf]
  %v130 = vld [vmem:[%s119 + $0x28] sm:$0xf]
  %v131 = vld [vmem:[%s119 + $0x2c] sm:$0xf]
  %v132 = vld [vmem:[%s119 + $0x30] sm:$0xf]
  %v133 = vld [vmem:[%s119 + $0x34] sm:$0xf]
  %v134 = vld [vmem:[%s119 + $0x38] sm:$0xf]
  %v135 = vld [vmem:[%s119 + $0x3c] sm:$0xf]
  %v136 = vld [vmem:[%s119 + $0x40] sm:$0xf]
  %v137 = vld [vmem:[%s119 + $0x44] sm:$0xf]
  %v138 = vld [vmem:[%s119 + $0x48] sm:$0xf]
  %v139 = vld [vmem:[%s119 + $0x4c] sm:$0xf]
  %v140 = vld [vmem:[%s119 + $0x50] sm:$0xf]
  %v141 = vld [vmem:[%s119 + $0x54] sm:$0xf]
  %v142 = vld [vmem:[%s119 + $0x58] sm:$0xf]
  %v143 = vld [vmem:[%s119 + $0x5c] sm:$0xf]
  %v144 = vld [vmem:[%s119 + $0x60] sm:$0xf]
  %v145 = vld [vmem:[%s119 + $0x64] sm:$0xf]
  %v146 = vld [vmem:[%s119 + $0x68] sm:$0xf]
  %v147 = vld [vmem:[%s119 + $0x6c] sm:$0xf]
  %v148 = vld [vmem:[%s119 + $0x70] sm:$0xf]
  %v149 = vld [vmem:[%s119 + $0x74] sm:$0xf]
  %v150 = vld [vmem:[%s119 + $0x78] sm:$0xf]
  %v151 = vld [vmem:[%s119 + $0x7c] sm:$0xf]
  %v184 = vunpack.c.l.b16 %v84
  %v185 = vunpack.c.h.b16 %v84
  %v186 = vunpack.c.l.b16 %v85
  %v187 = vunpack.c.h.b16 %v85
  %v188 = vunpack.c.l.b16 %v86
  %v189 = vunpack.c.h.b16 %v86
  %v190 = vunpack.c.l.b16 %v87
  %v191 = vunpack.c.h.b16 %v87
  %v192 = vunpack.c.l.b16 %v88
  %v193 = vunpack.c.h.b16 %v88
  %v194 = vunpack.c.l.b16 %v89
  %v195 = vunpack.c.h.b16 %v89
  %v196 = vunpack.c.l.b16 %v90
  %v197 = vunpack.c.h.b16 %v90
  %v198 = vunpack.c.l.b16 %v91
  %v199 = vunpack.c.h.b16 %v91
  %v200 = vunpack.c.l.b16 %v92
  %v201 = vunpack.c.h.b16 %v92
  %v202 = vunpack.c.l.b16 %v93
  %v203 = vunpack.c.h.b16 %v93
  %v204 = vunpack.c.l.b16 %v94
  %v205 = vunpack.c.h.b16 %v94
  %v206 = vunpack.c.l.b16 %v95
  %v207 = vunpack.c.h.b16 %v95
  %v208 = vunpack.c.l.b16 %v96
  %v209 = vunpack.c.h.b16 %v96
  %v210 = vunpack.c.l.b16 %v97
  %v211 = vunpack.c.h.b16 %v97
  %v212 = vunpack.c.l.b16 %v98
  %v213 = vunpack.c.h.b16 %v98
  %v214 = vunpack.c.l.b16 %v99
  %v215 = vunpack.c.h.b16 %v99
  %v216 = vunpack.c.l.b16 %v100
  %v217 = vunpack.c.h.b16 %v100
  %v218 = vunpack.c.l.b16 %v101
  %v219 = vunpack.c.h.b16 %v101
  %v220 = vunpack.c.l.b16 %v102
  %v221 = vunpack.c.h.b16 %v102
  %v222 = vunpack.c.l.b16 %v103
  %v223 = vunpack.c.h.b16 %v103
  %v224 = vunpack.c.l.b16 %v104
  %v225 = vunpack.c.h.b16 %v104
  %v226 = vunpack.c.l.b16 %v105
  %v227 = vunpack.c.h.b16 %v105
  %v228 = vunpack.c.l.b16 %v106
  %v229 = vunpack.c.h.b16 %v106
  %v230 = vunpack.c.l.b16 %v107
  %v231 = vunpack.c.h.b16 %v107
  %v232 = vunpack.c.l.b16 %v108
  %v233 = vunpack.c.h.b16 %v108
  %v234 = vunpack.c.l.b16 %v109
  %v235 = vunpack.c.h.b16 %v109
  %v236 = vunpack.c.l.b16 %v110
  %v237 = vunpack.c.h.b16 %v110
  %v238 = vunpack.c.l.b16 %v111
  %v239 = vunpack.c.h.b16 %v111
  %v240 = vunpack.c.l.b16 %v112
  %v241 = vunpack.c.h.b16 %v112
  %v242 = vunpack.c.l.b16 %v113
  %v243 = vunpack.c.h.b16 %v113
  %v244 = vunpack.c.l.b16 %v114
  %v245 = vunpack.c.h.b16 %v114
  %v246 = vunpack.c.l.b16 %v115
  %v247 = vunpack.c.h.b16 %v115
  %v248 = vpack.c.b16 %v186, %v184
  %v249 = vpack.c.b16 %v187, %v185
  %v250 = vpack.c.b16 %v190, %v188
  %v251 = vpack.c.b16 %v191, %v189
  %v252 = vpack.c.b16 %v194, %v192
  %v253 = vpack.c.b16 %v195, %v193
  %v254 = vpack.c.b16 %v198, %v196
  %v255 = vpack.c.b16 %v199, %v197
  %v256 = vpack.c.b16 %v202, %v200
  %v257 = vpack.c.b16 %v203, %v201
  %v258 = vpack.c.b16 %v206, %v204
  %v259 = vpack.c.b16 %v207, %v205
  %v260 = vpack.c.b16 %v210, %v208
  %v261 = vpack.c.b16 %v211, %v209
  %v262 = vpack.c.b16 %v214, %v212
  %v263 = vpack.c.b16 %v215, %v213
  %v264 = vpack.c.b16 %v218, %v216
  %v265 = vpack.c.b16 %v219, %v217
  %v266 = vpack.c.b16 %v222, %v220
  %v267 = vpack.c.b16 %v223, %v221
  %v268 = vpack.c.b16 %v226, %v224
  %v269 = vpack.c.b16 %v227, %v225
  %v270 = vpack.c.b16 %v230, %v228
  %v271 = vpack.c.b16 %v231, %v229
  %v272 = vpack.c.b16 %v234, %v232
  %v273 = vpack.c.b16 %v235, %v233
  %v274 = vpack.c.b16 %v238, %v236
  %v275 = vpack.c.b16 %v239, %v237
  %v276 = vpack.c.b16 %v242, %v240
  %v277 = vpack.c.b16 %v243, %v241
  %v278 = vpack.c.b16 %v246, %v244
  %v279 = vpack.c.b16 %v247, %v245
  %v344 = vunpack.c.l.b16 %v120
  %v345 = vunpack.c.l.b16 %v121
  %v346 = vunpack.c.l.b16 %v122
  %v347 = vunpack.c.l.b16 %v123
  %v348 = vunpack.c.l.b16 %v124
  %v349 = vunpack.c.l.b16 %v125
  %v350 = vunpack.c.l.b16 %v126
  %v351 = vunpack.c.l.b16 %v127
  %v352 = vunpack.c.l.b16 %v128
  %v353 = vunpack.c.l.b16 %v129
  %v354 = vunpack.c.l.b16 %v130
  %v355 = vunpack.c.l.b16 %v131
  %v356 = vunpack.c.l.b16 %v132
  %v357 = vunpack.c.l.b16 %v133
  %v358 = vunpack.c.l.b16 %v134
  %v359 = vunpack.c.l.b16 %v135
  %v360 = vunpack.c.l.b16 %v136
  %v361 = vunpack.c.l.b16 %v137
  %v362 = vunpack.c.l.b16 %v138
  %v363 = vunpack.c.l.b16 %v139
  %v364 = vunpack.c.l.b16 %v140
  %v365 = vunpack.c.l.b16 %v141
  %v366 = vunpack.c.l.b16 %v142
  %v367 = vunpack.c.l.b16 %v143
  %v368 = vunpack.c.l.b16 %v144
  %v369 = vunpack.c.l.b16 %v145
  %v370 = vunpack.c.l.b16 %v146
  %v371 = vunpack.c.l.b16 %v147
  %v372 = vunpack.c.l.b16 %v148
  %v373 = vunpack.c.l.b16 %v149
  %v374 = vunpack.c.l.b16 %v150
  %v375 = vunpack.c.l.b16 %v151
  %v376 = vpack.c.b16 %v345, %v344
  %v377 = vpack.c.b16 %v347, %v346
  %v378 = vpack.c.b16 %v349, %v348
  %v379 = vpack.c.b16 %v351, %v350
  %v380 = vpack.c.b16 %v353, %v352
  %v381 = vpack.c.b16 %v355, %v354
  %v382 = vpack.c.b16 %v357, %v356
  %v383 = vpack.c.b16 %v359, %v358
  %v384 = vpack.c.b16 %v361, %v360
  %v385 = vpack.c.b16 %v363, %v362
  %v386 = vpack.c.b16 %v365, %v364
  %v387 = vpack.c.b16 %v367, %v366
  %v388 = vpack.c.b16 %v369, %v368
  %v389 = vpack.c.b16 %v371, %v370
  %v390 = vpack.c.b16 %v373, %v372
  %v391 = vpack.c.b16 %v375, %v374
  %408 = vmatprep.subr.bf16.mxu0 0
  %409 = vmatpush1.bf16.msra.mxu0 %v376
  %410 = vmatprep.subr.bf16.mxu0 0
  %411 = vmatpush1.bf16.msra.mxu0 %v377
  %412 = vmatprep.subr.bf16.mxu0 0
  %413 = vmatpush1.bf16.msra.mxu0 %v378
  %414 = vmatprep.subr.bf16.mxu0 0
  %415 = vmatpush1.bf16.msra.mxu0 %v379
  %416 = vmatprep.subr.bf16.mxu0 0
  %417 = vmatpush1.bf16.msra.mxu0 %v380
  %418 = vmatprep.subr.bf16.mxu0 0
  %419 = vmatpush1.bf16.msra.mxu0 %v381
  %420 = vmatprep.subr.bf16.mxu0 0
  %421 = vmatpush1.bf16.msra.mxu0 %v382
  %422 = vmatprep.subr.bf16.mxu0 0
  %423 = vmatpush1.bf16.msra.mxu0 %v383
  %424 = vmatprep.subr.bf16.mxu0 0
  %425 = vmatpush1.bf16.msra.mxu0 %v384
  %426 = vmatprep.subr.bf16.mxu0 0
  %427 = vmatpush1.bf16.msra.mxu0 %v385
  %428 = vmatprep.subr.bf16.mxu0 0
  %429 = vmatpush1.bf16.msra.mxu0 %v386
  %430 = vmatprep.subr.bf16.mxu0 0
  %431 = vmatpush1.bf16.msra.mxu0 %v387
  %432 = vmatprep.subr.bf16.mxu0 0
  %433 = vmatpush1.bf16.msra.mxu0 %v388
  %434 = vmatprep.subr.bf16.mxu0 0
  %435 = vmatpush1.bf16.msra.mxu0 %v389
  %436 = vmatprep.subr.bf16.mxu0 0
  %437 = vmatpush1.bf16.msra.mxu0 %v390
  %438 = vmatprep.subr.bf16.mxu0 0
  %439 = vmatpush1.bf16.msra.mxu0 %v391
  %440 = vmatprep.mubr.bf16.mxu0 %v249
  %441 = vmatmul.mubr.bf16.gmra.mrb[0].mxu0 %v248
  %v442 = vpop.f32.mrb[0].mxu0
  %v443 = vadd.f32 0.0, %v442
  %v444 = vpop.f32.mrb[0].mxu0
  %v445 = vpop.f32.mrb[0].mxu0
  %v446 = vadd.f32 0.0, %v445
  %v447 = vpop.f32.mrb[0].mxu0
  %448 = vmatprep.mubr.bf16.mxu0 %v251
  %449 = vmatmul.mubr.bf16.gmra.mrb[0].mxu0 %v250
  %v450 = vpop.f32.mrb[0].mxu0
  %v451 = vadd.f32 0.0, %v450
  %v452 = vpop.f32.mrb[0].mxu0
  %v453 = vpop.f32.mrb[0].mxu0
  %v454 = vadd.f32 0.0, %v453
  %v455 = vpop.f32.mrb[0].mxu0
  %456 = vmatprep.mubr.bf16.mxu0 %v253
  %457 = vmatmul.mubr.bf16.gmra.mrb[0].mxu0 %v252
  %v458 = vpop.f32.mrb[0].mxu0
  %v459 = vadd.f32 0.0, %v458
  %v460 = vpop.f32.mrb[0].mxu0
  %v461 = vpop.f32.mrb[0].mxu0
  %v462 = vadd.f32 0.0, %v461
  %v463 = vpop.f32.mrb[0].mxu0
  %464 = vmatprep.mubr.bf16.mxu0 %v255
  %465 = vmatmul.mubr.bf16.gmra.mrb[0].mxu0 %v254
  %v466 = vpop.f32.mrb[0].mxu0
  %v467 = vadd.f32 0.0, %v466
  %v468 = vpop.f32.mrb[0].mxu0
  %v469 = vpop.f32.mrb[0].mxu0
  %v470 = vadd.f32 0.0, %v469
  %v471 = vpop.f32.mrb[0].mxu0
  %472 = vmatprep.mubr.bf16.mxu0 %v257
  %473 = vmatmul.mubr.bf16.gmra.mrb[0].mxu0 %v256
  %v474 = vpop.f32.mrb[0].mxu0
  %v475 = vadd.f32 0.0, %v474
  %v476 = vpop.f32.mrb[0].mxu0
  %v477 = vpop.f32.mrb[0].mxu0
  %v478 = vadd.f32 0.0, %v477
  %v479 = vpop.f32.mrb[0].mxu0
  %480 = vmatprep.mubr.bf16.mxu0 %v259
  %481 = vmatmul.mubr.bf16.gmra.mrb[0].mxu0 %v258
  %v482 = vpop.f32.mrb[0].mxu0
  %v483 = vadd.f32 0.0, %v482
  %v484 = vpop.f32.mrb[0].mxu0
  %v485 = vpop.f32.mrb[0].mxu0
  %v486 = vadd.f32 0.0, %v485
  %v487 = vpop.f32.mrb[0].mxu0
  %488 = vmatprep.mubr.bf16.mxu0 %v261
  %489 = vmatmul.mubr.bf16.gmra.mrb[0].mxu0 %v260
  %v490 = vpop.f32.mrb[0].mxu0
  %v491 = vadd.f32 0.0, %v490
  %v492 = vpop.f32.mrb[0].mxu0
  %v493 = vpop.f32.mrb[0].mxu0
  %v494 = vadd.f32 0.0, %v493
  %v495 = vpop.f32.mrb[0].mxu0
  %496 = vmatprep.mubr.bf16.mxu0 %v263
  %497 = vmatmul.mubr.bf16.gmra.mrb[0].mxu0 %v262
  %v498 = vpop.f32.mrb[0].mxu0
  %v499 = vadd.f32 0.0, %v498
  %v500 = vpop.f32.mrb[0].mxu0
  %v501 = vpop.f32.mrb[0].mxu0
  %v502 = vadd.f32 0.0, %v501
  %v503 = vpop.f32.mrb[0].mxu0
  %504 = vmatprep.mubr.bf16.mxu0 %v265
  %505 = vmatmul.mubr.bf16.gmra.mrb[0].mxu0 %v264
  %v506 = vpop.f32.mrb[0].mxu0
  %v507 = vadd.f32 0.0, %v506
  %v508 = vpop.f32.mrb[0].mxu0
  %v509 = vpop.f32.mrb[0].mxu0
  %v510 = vadd.f32 0.0, %v509
  %v511 = vpop.f32.mrb[0].mxu0
  %512 = vmatprep.mubr.bf16.mxu0 %v267
  %513 = vmatmul.mubr.bf16.gmra.mrb[0].mxu0 %v266
  %v514 = vpop.f32.mrb[0].mxu0
  %v515 = vadd.f32 0.0, %v514
  %v516 = vpop.f32.mrb[0].mxu0
  %v517 = vpop.f32.mrb[0].mxu0
  %v518 = vadd.f32 0.0, %v517
  %v519 = vpop.f32.mrb[0].mxu0
  %520 = vmatprep.mubr.bf16.mxu0 %v269
  %521 = vmatmul.mubr.bf16.gmra.mrb[0].mxu0 %v268
  %v522 = vpop.f32.mrb[0].mxu0
  %v523 = vadd.f32 0.0, %v522
  %v524 = vpop.f32.mrb[0].mxu0
  %v525 = vpop.f32.mrb[0].mxu0
  %v526 = vadd.f32 0.0, %v525
  %v527 = vpop.f32.mrb[0].mxu0
  %528 = vmatprep.mubr.bf16.mxu0 %v271
  %529 = vmatmul.mubr.bf16.gmra.mrb[0].mxu0 %v270
  %v530 = vpop.f32.mrb[0].mxu0
  %v531 = vadd.f32 0.0, %v530
  %v532 = vpop.f32.mrb[0].mxu0
  %v533 = vpop.f32.mrb[0].mxu0
  %v534 = vadd.f32 0.0, %v533
  %v535 = vpop.f32.mrb[0].mxu0
  %536 = vmatprep.mubr.bf16.mxu0 %v273
  %537 = vmatmul.mubr.bf16.gmra.mrb[0].mxu0 %v272
  %v538 = vpop.f32.mrb[0].mxu0
  %v539 = vadd.f32 0.0, %v538
  %v540 = vpop.f32.mrb[0].mxu0
  %v541 = vpop.f32.mrb[0].mxu0
  %v542 = vadd.f32 0.0, %v541
  %v543 = vpop.f32.mrb[0].mxu0
  %544 = vmatprep.mubr.bf16.mxu0 %v275
  %545 = vmatmul.mubr.bf16.gmra.mrb[0].mxu0 %v274
  %v546 = vpop.f32.mrb[0].mxu0
  %v547 = vadd.f32 0.0, %v546
  %v548 = vpop.f32.mrb[0].mxu0
  %v549 = vpop.f32.mrb[0].mxu0
  %v550 = vadd.f32 0.0, %v549
  %v551 = vpop.f32.mrb[0].mxu0
  %552 = vmatprep.mubr.bf16.mxu0 %v277
  %553 = vmatmul.mubr.bf16.gmra.mrb[0].mxu0 %v276
  %v554 = vpop.f32.mrb[0].mxu0
  %v555 = vadd.f32 0.0, %v554
  %v556 = vpop.f32.mrb[0].mxu0
  %v557 = vpop.f32.mrb[0].mxu0
  %v558 = vadd.f32 0.0, %v557
  %v559 = vpop.f32.mrb[0].mxu0
  %560 = vmatprep.mubr.bf16.mxu0 %v279
  %561 = vmatmul.mubr.bf16.gmra.mrb[0].mxu0 %v278
  %v562 = vpop.f32.mrb[0].mxu0
  %v563 = vadd.f32 0.0, %v562
  %v564 = vpop.f32.mrb[0].mxu0
  %v565 = vpop.f32.mrb[0].mxu0
  %v566 = vadd.f32 0.0, %v565
  %v567 = vpop.f32.mrb[0].mxu0
  %568 = vdwg.mxu0
  %v569 = vadd.f32 %v52, %v443
  %v570 = vadd.f32 %v53, %v446
  %v571 = vadd.f32 %v54, %v451
  %v572 = vadd.f32 %v55, %v454
  %v573 = vadd.f32 %v56, %v459
  %v574 = vadd.f32 %v57, %v462
  %v575 = vadd.f32 %v58, %v467
  %v576 = vadd.f32 %v59, %v470
  %v577 = vadd.f32 %v60, %v475
  %v578 = vadd.f32 %v61, %v478
  %v579 = vadd.f32 %v62, %v483
  %v580 = vadd.f32 %v63, %v486
  %v581 = vadd.f32 %v64, %v491
  %v582 = vadd.f32 %v65, %v494
  %v583 = vadd.f32 %v66, %v499
  %v584 = vadd.f32 %v67, %v502
  %v585 = vadd.f32 %v68, %v507
  %v586 = vadd.f32 %v69, %v510
  %v587 = vadd.f32 %v70, %v515
  %v588 = vadd.f32 %v71, %v518
  %v589 = vadd.f32 %v72, %v523
  %v590 = vadd.f32 %v73, %v526
  %v591 = vadd.f32 %v74, %v531
  %v592 = vadd.f32 %v75, %v534
  %v593 = vadd.f32 %v76, %v539
  %v594 = vadd.f32 %v77, %v542
  %v595 = vadd.f32 %v78, %v547
  %v596 = vadd.f32 %v79, %v550
  %v597 = vadd.f32 %v80, %v555
  %v598 = vadd.f32 %v81, %v558
  %v599 = vadd.f32 %v82, %v563
  %v600 = vadd.f32 %v83, %v566
  %601 = vst [vmem:[#allocation2] sm:$0xff] %v569
  %602 = vst [vmem:[#allocation2 + $0x8] sm:$0xff] %v570
  %603 = vst [vmem:[#allocation2 + $0x10] sm:$0xff] %v571
  %604 = vst [vmem:[#allocation2 + $0x18] sm:$0xff] %v572
  %605 = vst [vmem:[#allocation2 + $0x20] sm:$0xff] %v573
  %606 = vst [vmem:[#allocation2 + $0x28] sm:$0xff] %v574
  %607 = vst [vmem:[#allocation2 + $0x30] sm:$0xff] %v575
  %608 = vst [vmem:[#allocation2 + $0x38] sm:$0xff] %v576
  %609 = vst [vmem:[#allocation2 + $0x40] sm:$0xff] %v577
  %610 = vst [vmem:[#allocation2 + $0x48] sm:$0xff] %v578
  %611 = vst [vmem:[#allocation2 + $0x50] sm:$0xff] %v579
  %612 = vst [vmem:[#allocation2 + $0x58] sm:$0xff] %v580
  %613 = vst [vmem:[#allocation2 + $0x60] sm:$0xff] %v581
  %614 = vst [vmem:[#allocation2 + $0x68] sm:$0xff] %v582
  %615 = vst [vmem:[#allocation2 + $0x70] sm:$0xff] %v583
  %616 = vst [vmem:[#allocation2 + $0x78] sm:$0xff] %v584
  %617 = vst [vmem:[#allocation2 + $0x80] sm:$0xff] %v585
  %618 = vst [vmem:[#allocation2 + $0x88] sm:$0xff] %v586
  %619 = vst [vmem:[#allocation2 + $0x90] sm:$0xff] %v587
  %620 = vst [vmem:[#allocation2 + $0x98] sm:$0xff] %v588
  %621 = vst [vmem:[#allocation2 + $0xa0] sm:$0xff] %v589
  %622 = vst [vmem:[#allocation2 + $0xa8] sm:$0xff] %v590
  %623 = vst [vmem:[#allocation2 + $0xb0] sm:$0xff] %v591
  %624 = vst [vmem:[#allocation2 + $0xb8] sm:$0xff] %v592
  %625 = vst [vmem:[#allocation2 + $0xc0] sm:$0xff] %v593
  %626 = vst [vmem:[#allocation2 + $0xc8] sm:$0xff] %v594
  %627 = vst [vmem:[#allocation2 + $0xd0] sm:$0xff] %v595
  %628 = vst [vmem:[#allocation2 + $0xd8] sm:$0xff] %v596
  %629 = vst [vmem:[#allocation2 + $0xe0] sm:$0xff] %v597
  %630 = vst [vmem:[#allocation2 + $0xe8] sm:$0xff] %v598
  %631 = vst [vmem:[#allocation2 + $0xf0] sm:$0xff] %v599
  %632 = vst [vmem:[#allocation2 + $0xf8] sm:$0xff] %v600
  // Predicated region
  $region18: #{dual_encoder_forward.7} parent=0 // pred_check
    %p633 = pneg %p15
  $region19: #{dual_encoder_forward.7} parent=0 // pred_check_branch
    %635 = sbr.rel (%p633) target = $region21
  $region20: #{dual_encoder_forward.7} parent=0 // pred_region
    %v636 = vld [vmem:[#allocation2] sm:$0xff]
    %v637 = vld [vmem:[#allocation2 + $0x8] sm:$0xff]
    %v638 = vld [vmem:[#allocation2 + $0x10] sm:$0xff]
    %v639 = vld [vmem:[#allocation2 + $0x18] sm:$0xff]
    %v640 = vld [vmem:[#allocation2 + $0x20] sm:$0xff]
    %v641 = vld [vmem:[#allocation2 + $0x28] sm:$0xff]
    %v642 = vld [vmem:[#allocation2 + $0x30] sm:$0xff]
    %v643 = vld [vmem:[#allocation2 + $0x38] sm:$0xff]
    %v644 = vld [vmem:[#allocation2 + $0x40] sm:$0xff]
    %v645 = vld [vmem:[#allocation2 + $0x48] sm:$0xff]
    %v646 = vld [vmem:[#allocation2 + $0x50] sm:$0xff]
    %v647 = vld [vmem:[#allocation2 + $0x58] sm:$0xff]
    %v648 = vld [vmem:[#allocation2 + $0x60] sm:$0xff]
    %v649 = vld [vmem:[#allocation2 + $0x68] sm:$0xff]
    %v650 = vld [vmem:[#allocation2 + $0x70] sm:$0xff]
    %v651 = vld [vmem:[#allocation2 + $0x78] sm:$0xff]
    %v652 = vld [vmem:[#allocation2 + $0x80] sm:$0xff]
    %v653 = vld [vmem:[#allocation2 + $0x88] sm:$0xff]
    %v654 = vld [vmem:[#allocation2 + $0x90] sm:$0xff]
    %v655 = vld [vmem:[#allocation2 + $0x98] sm:$0xff]
    %v656 = vld [vmem:[#allocation2 + $0xa0] sm:$0xff]
    %v657 = vld [vmem:[#allocation2 + $0xa8] sm:$0xff]
    %v658 = vld [vmem:[#allocation2 + $0xb0] sm:$0xff]
    %v659 = vld [vmem:[#allocation2 + $0xb8] sm:$0xff]
    %v660 = vld [vmem:[#allocation2 + $0xc0] sm:$0xff]
    %v661 = vld [vmem:[#allocation2 + $0xc8] sm:$0xff]
    %v662 = vld [vmem:[#allocation2 + $0xd0] sm:$0xff]
    %v663 = vld [vmem:[#allocation2 + $0xd8] sm:$0xff]
    %v664 = vld [vmem:[#allocation2 + $0xe0] sm:$0xff]
    %v665 = vld [vmem:[#allocation2 + $0xe8] sm:$0xff]
    %v666 = vld [vmem:[#allocation2 + $0xf0] sm:$0xff]
    %v667 = vld [vmem:[#allocation2 + $0xf8] sm:$0xff]
    %v668 = vld [vmem:[%s2] sm:$0x1]
    %v670 = vlaneseq
    %v671 = vshrl.u32 %v670, 7
    %v672 = vsub.s32 0, %v671
    %v673 = vrot.slane %v668, %v672
    %v675 = vadd.f32 %v636, %v673
    %v676 = vadd.f32 %v637, %v673
    %v677 = vadd.f32 %v638, %v673
    %v678 = vadd.f32 %v639, %v673
    %v679 = vadd.f32 %v640, %v673
    %v680 = vadd.f32 %v641, %v673
    %v681 = vadd.f32 %v642, %v673
    %v682 = vadd.f32 %v643, %v673
    %v683 = vadd.f32 %v644, %v673
    %v684 = vadd.f32 %v645, %v673
    %v685 = vadd.f32 %v646, %v673
    %v686 = vadd.f32 %v647, %v673
    %v687 = vadd.f32 %v648, %v673
    %v688 = vadd.f32 %v649, %v673
    %v689 = vadd.f32 %v650, %v673
    %v690 = vadd.f32 %v651, %v673
    %v691 = vadd.f32 %v652, %v673
    %v692 = vadd.f32 %v653, %v673
    %v693 = vadd.f32 %v654, %v673
    %v694 = vadd.f32 %v655, %v673
    %v695 = vadd.f32 %v656, %v673
    %v696 = vadd.f32 %v657, %v673
    %v697 = vadd.f32 %v658, %v673
    %v698 = vadd.f32 %v659, %v673
    %v699 = vadd.f32 %v660, %v673
    %v700 = vadd.f32 %v661, %v673
    %v701 = vadd.f32 %v662, %v673
    %v702 = vadd.f32 %v663, %v673
    %v703 = vadd.f32 %v664, %v673
    %v704 = vadd.f32 %v665, %v673
    %v705 = vadd.f32 %v666, %v673
    %v706 = vadd.f32 %v667, %v673
    %vm707 = vcmp.gt.f32.partialorder %v675, 0.0
    %vm708 = vcmp.gt.f32.partialorder %v676, 0.0
    %vm709 = vcmp.gt.f32.partialorder %v677, 0.0
    %vm710 = vcmp.gt.f32.partialorder %v678, 0.0
    %vm711 = vcmp.gt.f32.partialorder %v679, 0.0
    %vm712 = vcmp.gt.f32.partialorder %v680, 0.0
    %vm713 = vcmp.gt.f32.partialorder %v681, 0.0
    %vm714 = vcmp.gt.f32.partialorder %v682, 0.0
    %vm715 = vcmp.gt.f32.partialorder %v683, 0.0
    %vm716 = vcmp.gt.f32.partialorder %v684, 0.0
    %vm717 = vcmp.gt.f32.partialorder %v685, 0.0
    %vm718 = vcmp.gt.f32.partialorder %v686, 0.0
    %vm719 = vcmp.gt.f32.partialorder %v687, 0.0
    %vm720 = vcmp.gt.f32.partialorder %v688, 0.0
    %vm721 = vcmp.gt.f32.partialorder %v689, 0.0
    %vm722 = vcmp.gt.f32.partialorder %v690, 0.0
    %vm723 = vcmp.gt.f32.partialorder %v691, 0.0
    %vm724 = vcmp.gt.f32.partialorder %v692, 0.0
    %vm725 = vcmp.gt.f32.partialorder %v693, 0.0
    %vm726 = vcmp.gt.f32.partialorder %v694, 0.0
    %vm727 = vcmp.gt.f32.partialorder %v695, 0.0
    %vm728 = vcmp.gt.f32.partialorder %v696, 0.0
    %vm729 = vcmp.gt.f32.partialorder %v697, 0.0
    %vm730 = vcmp.gt.f32.partialorder %v698, 0.0
    %vm731 = vcmp.gt.f32.partialorder %v699, 0.0
    %vm732 = vcmp.gt.f32.partialorder %v700, 0.0
    %vm733 = vcmp.gt.f32.partialorder %v701, 0.0
    %vm734 = vcmp.gt.f32.partialorder %v702, 0.0
    %vm735 = vcmp.gt.f32.partialorder %v703, 0.0
    %vm736 = vcmp.gt.f32.partialorder %v704, 0.0
    %vm737 = vcmp.gt.f32.partialorder %v705, 0.0
    %vm738 = vcmp.gt.f32.partialorder %v706, 0.0
    %v739 = vmul.f32 %v675, 0.25
    %v740 = vmul.f32 %v676, 0.25
    %v741 = vmul.f32 %v677, 0.25
    %v742 = vmul.f32 %v678, 0.25
    %v743 = vmul.f32 %v679, 0.25
    %v744 = vmul.f32 %v680, 0.25
    %v745 = vmul.f32 %v681, 0.25
    %v746 = vmul.f32 %v682, 0.25
    %v747 = vmul.f32 %v683, 0.25
    %v748 = vmul.f32 %v684, 0.25
    %v749 = vmul.f32 %v685, 0.25
    %v750 = vmul.f32 %v686, 0.25
    %v751 = vmul.f32 %v687, 0.25
    %v752 = vmul.f32 %v688, 0.25
    %v753 = vmul.f32 %v689, 0.25
    %v754 = vmul.f32 %v690, 0.25
    %v755 = vmul.f32 %v691, 0.25
    %v756 = vmul.f32 %v692, 0.25
    %v757 = vmul.f32 %v693, 0.25
    %v758 = vmul.f32 %v694, 0.25
    %v759 = vmul.f32 %v695, 0.25
    %v760 = vmul.f32 %v696, 0.25
    %v761 = vmul.f32 %v697, 0.25
    %v762 = vmul.f32 %v698, 0.25
    %v763 = vmul.f32 %v699, 0.25
    %v764 = vmul.f32 %v700, 0.25
    %v765 = vmul.f32 %v701, 0.25
    %v766 = vmul.f32 %v702, 0.25
    %v767 = vmul.f32 %v703, 0.25
    %v768 = vmul.f32 %v704, 0.25
    %v769 = vmul.f32 %v705, 0.25
    %v770 = vmul.f32 %v706, 0.25
    %v771 = vsel %vm707, %v675, %v739
    %v772 = vsel %vm708, %v676, %v740
    %v773 = vsel %vm709, %v677, %v741
    %v774 = vsel %vm710, %v678, %v742
    %v775 = vsel %vm711, %v679, %v743
    %v776 = vsel %vm712, %v680, %v744
    %v777 = vsel %vm713, %v681, %v745
    %v778 = vsel %vm714, %v682, %v746
    %v779 = vsel %vm715, %v683, %v747
    %v780 = vsel %vm716, %v684, %v748
    %v781 = vsel %vm717, %v685, %v749
    %v782 = vsel %vm718, %v686, %v750
    %v783 = vsel %vm719, %v687, %v751
    %v784 = vsel %vm720, %v688, %v752
    %v785 = vsel %vm721, %v689, %v753
    %v786 = vsel %vm722, %v690, %v754
    %v787 = vsel %vm723, %v691, %v755
    %v788 = vsel %vm724, %v692, %v756
    %v789 = vsel %vm725, %v693, %v757
    %v790 = vsel %vm726, %v694, %v758
    %v791 = vsel %vm727, %v695, %v759
    %v792 = vsel %vm728, %v696, %v760
    %v793 = vsel %vm729, %v697, %v761
    %v794 = vsel %vm730, %v698, %v762
    %v795 = vsel %vm731, %v699, %v763
    %v796 = vsel %vm732, %v700, %v764
    %v797 = vsel %vm733, %v701, %v765
    %v798 = vsel %vm734, %v702, %v766
    %v799 = vsel %vm735, %v703, %v767
    %v800 = vsel %vm736, %v704, %v768
    %v801 = vsel %vm737, %v705, %v769
    %v802 = vsel %vm738, %v706, %v770
    %v803 = vpack.c.bf16 %v772, %v771
    %v804 = vpack.c.bf16 %v774, %v773
    %v805 = vpack.c.bf16 %v776, %v775
    %v806 = vpack.c.bf16 %v778, %v777
    %v807 = vpack.c.bf16 %v780, %v779
    %v808 = vpack.c.bf16 %v782, %v781
    %v809 = vpack.c.bf16 %v784, %v783
    %v810 = vpack.c.bf16 %v786, %v785
    %v811 = vpack.c.bf16 %v788, %v787
    %v812 = vpack.c.bf16 %v790, %v789
    %v813 = vpack.c.bf16 %v792, %v791
    %v814 = vpack.c.bf16 %v794, %v793
    %v815 = vpack.c.bf16 %v796, %v795
    %v816 = vpack.c.bf16 %v798, %v797
    %v817 = vpack.c.bf16 %v800, %v799
    %v818 = vpack.c.bf16 %v802, %v801
    %v835 = vunpack.c.l.b16 %v803
    %v836 = vunpack.c.h.b16 %v803
    %v837 = vunpack.c.l.b16 %v804
    %v838 = vunpack.c.h.b16 %v804
    %v839 = vunpack.c.l.b16 %v805
    %v840 = vunpack.c.h.b16 %v805
    %v841 = vunpack.c.l.b16 %v806
    %v842 = vunpack.c.h.b16 %v806
    %v843 = vunpack.c.l.b16 %v807
    %v844 = vunpack.c.h.b16 %v807
    %v845 = vunpack.c.l.b16 %v808
    %v846 = vunpack.c.h.b16 %v808
    %v847 = vunpack.c.l.b16 %v809
    %v848 = vunpack.c.h.b16 %v809
    %v849 = vunpack.c.l.b16 %v810
    %v850 = vunpack.c.h.b16 %v810
    %v851 = vunpack.c.l.b16 %v811
    %v852 = vunpack.c.h.b16 %v811
    %v853 = vunpack.c.l.b16 %v812
    %v854 = vunpack.c.h.b16 %v812
    %v855 = vunpack.c.l.b16 %v813
    %v856 = vunpack.c.h.b16 %v813
    %v857 = vunpack.c.l.b16 %v814
    %v858 = vunpack.c.h.b16 %v814
    %v859 = vunpack.c.l.b16 %v815
    %v860 = vunpack.c.h.b16 %v815
    %v861 = vunpack.c.l.b16 %v816
    %v862 = vunpack.c.h.b16 %v816
    %v863 = vunpack.c.l.b16 %v817
    %v864 = vunpack.c.h.b16 %v817
    %v865 = vunpack.c.l.b16 %v818
    %v866 = vunpack.c.h.b16 %v818
    %v867 = vpack.c.b16 %v835, %v835
    %v868 = vpack.c.b16 %v836, %v836
    %v869 = vpack.c.b16 %v837, %v837
    %v870 = vpack.c.b16 %v838, %v838
    %v871 = vpack.c.b16 %v839, %v839
    %v872 = vpack.c.b16 %v840, %v840
    %v873 = vpack.c.b16 %v841, %v841
    %v874 = vpack.c.b16 %v842, %v842
    %v875 = vpack.c.b16 %v843, %v843
    %v876 = vpack.c.b16 %v844, %v844
    %v877 = vpack.c.b16 %v845, %v845
    %v878 = vpack.c.b16 %v846, %v846
    %v879 = vpack.c.b16 %v847, %v847
    %v880 = vpack.c.b16 %v848, %v848
    %v881 = vpack.c.b16 %v849, %v849
    %v882 = vpack.c.b16 %v850, %v850
    %v883 = vpack.c.b16 %v851, %v851
    %v884 = vpack.c.b16 %v852, %v852
    %v885 = vpack.c.b16 %v853, %v853
    %v886 = vpack.c.b16 %v854, %v854
    %v887 = vpack.c.b16 %v855, %v855
    %v888 = vpack.c.b16 %v856, %v856
    %v889 = vpack.c.b16 %v857, %v857
    %v890 = vpack.c.b16 %v858, %v858
    %v891 = vpack.c.b16 %v859, %v859
    %v892 = vpack.c.b16 %v860, %v860
    %v893 = vpack.c.b16 %v861, %v861
    %v894 = vpack.c.b16 %v862, %v862
    %v895 = vpack.c.b16 %v863, %v863
    %v896 = vpack.c.b16 %v864, %v864
    %v897 = vpack.c.b16 %v865, %v865
    %v898 = vpack.c.b16 %v866, %v866
    %931 = vst [vmem:[%s3] sm:$0xf] %v867
    %932 = vst [vmem:[%s3 + $0x4] sm:$0xf] %v868
    %933 = vst [vmem:[%s3 + $0x8] sm:$0xf] %v869
    %934 = vst [vmem:[%s3 + $0xc] sm:$0xf] %v870
    %935 = vst [vmem:[%s3 + $0x10] sm:$0xf] %v871
    %936 = vst [vmem:[%s3 + $0x14] sm:$0xf] %v872
    %937 = vst [vmem:[%s3 + $0x18] sm:$0xf] %v873
    %938 = vst [vmem:[%s3 + $0x1c] sm:$0xf] %v874
    %939 = vst [vmem:[%s3 + $0x20] sm:$0xf] %v875
    %940 = vst [vmem:[%s3 + $0x24] sm:$0xf] %v876
    %941 = vst [vmem:[%s3 + $0x28] sm:$0xf] %v877
    %942 = vst [vmem:[%s3 + $0x2c] sm:$0xf] %v878
    %943 = vst [vmem:[%s3 + $0x30] sm:$0xf] %v879
    %944 = vst [vmem:[%s3 + $0x34] sm:$0xf] %v880
    %945 = vst [vmem:[%s3 + $0x38] sm:$0xf] %v881
    %946 = vst [vmem:[%s3 + $0x3c] sm:$0xf] %v882
    %947 = vst [vmem:[%s3 + $0x40] sm:$0xf] %v883
    %948 = vst [vmem:[%s3 + $0x44] sm:$0xf] %v884
    %949 = vst [vmem:[%s3 + $0x48] sm:$0xf] %v885
    %950 = vst [vmem:[%s3 + $0x4c] sm:$0xf] %v886
    %951 = vst [vmem:[%s3 + $0x50] sm:$0xf] %v887
    %952 = vst [vmem:[%s3 + $0x54] sm:$0xf] %v888
    %953 = vst [vmem:[%s3 + $0x58] sm:$0xf] %v889
    %954 = vst [vmem:[%s3 + $0x5c] sm:$0xf] %v890
    %955 = vst [vmem:[%s3 + $0x60] sm:$0xf] %v891
    %956 = vst [vmem:[%s3 + $0x64] sm:$0xf] %v892
    %957 = vst [vmem:[%s3 + $0x68] sm:$0xf] %v893
    %958 = vst [vmem:[%s3 + $0x6c] sm:$0xf] %v894
    %959 = vst [vmem:[%s3 + $0x70] sm:$0xf] %v895
    %960 = vst [vmem:[%s3 + $0x74] sm:$0xf] %v896
    %961 = vst [vmem:[%s3 + $0x78] sm:$0xf] %v897
    %962 = vst [vmem:[%s3 + $0x7c] sm:$0xf] %v898
  $region21: #{dual_encoder_forward.7} parent=0 // pred_fallthru
    _
  // Predicated region
  $region22: #{dual_encoder_forward.7} parent=0 // pred_check
    _
  $region23: #{dual_encoder_forward.7} parent=0 // pred_check_branch
    %964 = sbr.rel (0) target = $region25
  $region24: #{dual_encoder_forward.7} parent=0 // pred_region
    _
  $region25: #{dual_encoder_forward.7} parent=0 // pred_fallthru
    _
  // Predicated region
  $region26: #{dual_encoder_forward.7} parent=0 // pred_check
    _
  $region27: #{dual_encoder_forward.7} parent=0 // pred_check_branch
    %966 = sbr.rel (0) target = $region29
  $region28: #{dual_encoder_forward.7} parent=0 // pred_region
    _
  $region29: #{dual_encoder_forward.7} parent=0 // pred_fallthru
    _

// kernel: dual_encoder_forward.6
$region0: #{dual_encoder_forward.6}
  #allocation0 [shape = 'u32[]', space=smem, size = 0x4, offset = 0x4, fixed_abs, tag = 'smem constant byte address 0x4 - core index']
  #allocation1 [shape = 'u32[144,128]{1,0:T(1,128)}', space=vmem, size = 0x12000, scoped, tag = 'internal scratch']
  #allocation2 [shape = 'f32[256,128]{1,0:T(8,128)}', space=vmem, size = 0x20000, scoped, tag = 'scratch operand']
  %s0 = inlined_call_operand.vmem [shape: bf16[256,256], index: 0, kind: input, shape index: {}]
  %s1 = inlined_call_operand.vmem [shape: bf16[256,128], index: 1, kind: input, shape index: {}]
  %s2 = inlined_call_operand.vmem [shape: f32[1,128], index: 2, kind: input, shape index: {}]
  %s3 = inlined_call_operand.vmem [shape: bf16[128,128], index: 3, kind: input, shape index: {}]
  %s4 = inlined_call_operand.vmem [shape: bf16[256,128], index: 4, kind: output, shape index: {}]
  %s5 = sld [smem:[#allocation0]]
  $region34: #{dual_encoder_forward.6} parent=0
    _
  %s7 = ssub.s32 1, %s5
  %s8 = scalar_select 0, %s7, %s5
  // Predicated region
  $region2: #{dual_encoder_forward.6} parent=0 // pred_check
    _
  $region3: #{dual_encoder_forward.6} parent=0 // pred_check_branch
    %10 = sbr.rel (0) target = $region5
  $region4: #{dual_encoder_forward.6} parent=0 // pred_region
    _
  $region5: #{dual_encoder_forward.6} parent=0 // pred_fallthru
    _
  // Predicated region
  $region6: #{dual_encoder_forward.6} parent=0 // pred_check
    _
  $region7: #{dual_encoder_forward.6} parent=0 // pred_check_branch
    %12 = sbr.rel (0) target = $region9
  $region8: #{dual_encoder_forward.6} parent=0 // pred_region
    _
  $region9: #{dual_encoder_forward.6} parent=0 // pred_fallthru
    _
  // Predicated region
  $region10: #{dual_encoder_forward.6} parent=0 // pred_check
    _
  $region11: #{dual_encoder_forward.6} parent=0 // pred_check_branch
    %14 = sbr.rel (0) target = $region13
  $region12: #{dual_encoder_forward.6} parent=0 // pred_region
    _
  $region13: #{dual_encoder_forward.6} parent=0 // pred_fallthru
    _
  // Predicated region
  $region14: #{dual_encoder_forward.6} parent=0 // pred_check
    _
  $region15: #{dual_encoder_forward.6} parent=0 // pred_check_branch
    %16 = sbr.rel (0) target = $region17
  $region16: #{dual_encoder_forward.6} parent=0 // pred_region
    _
  $region17: #{dual_encoder_forward.6} parent=0 // pred_fallthru
    _
  %p18 = scmp.eq.s32.totalorder 0, 0
  // Predicated region
  $region18: #{dual_encoder_forward.6} parent=0 // pred_check
    %p19 = pneg %p18
  $region19: #{dual_encoder_forward.6} parent=0 // pred_check_branch
    %21 = sbr.rel (%p19) target = $region21
  $region20: #{dual_encoder_forward.6} parent=0 // pred_region
    %22 = vst [vmem:[#allocation2] sm:$0xff] 0.0
    %23 = vst [vmem:[#allocation2 + $0x8] sm:$0xff] 0.0
    %24 = vst [vmem:[#allocation2 + $0x10] sm:$0xff] 0.0
    %25 = vst [vmem:[#allocation2 + $0x18] sm:$0xff] 0.0
    %26 = vst [vmem:[#allocation2 + $0x20] sm:$0xff] 0.0
    %27 = vst [vmem:[#allocation2 + $0x28] sm:$0xff] 0.0
    %28 = vst [vmem:[#allocation2 + $0x30] sm:$0xff] 0.0
    %29 = vst [vmem:[#allocation2 + $0x38] sm:$0xff] 0.0
    %30 = vst [vmem:[#allocation2 + $0x40] sm:$0xff] 0.0
    %31 = vst [vmem:[#allocation2 + $0x48] sm:$0xff] 0.0
    %32 = vst [vmem:[#allocation2 + $0x50] sm:$0xff] 0.0
    %33 = vst [vmem:[#allocation2 + $0x58] sm:$0xff] 0.0
    %34 = vst [vmem:[#allocation2 + $0x60] sm:$0xff] 0.0
    %35 = vst [vmem:[#allocation2 + $0x68] sm:$0xff] 0.0
    %36 = vst [vmem:[#allocation2 + $0x70] sm:$0xff] 0.0
    %37 = vst [vmem:[#allocation2 + $0x78] sm:$0xff] 0.0
    %38 = vst [vmem:[#allocation2 + $0x80] sm:$0xff] 0.0
    %39 = vst [vmem:[#allocation2 + $0x88] sm:$0xff] 0.0
    %40 = vst [vmem:[#allocation2 + $0x90] sm:$0xff] 0.0
    %41 = vst [vmem:[#allocation2 + $0x98] sm:$0xff] 0.0
    %42 = vst [vmem:[#allocation2 + $0xa0] sm:$0xff] 0.0
    %43 = vst [vmem:[#allocation2 + $0xa8] sm:$0xff] 0.0
    %44 = vst [vmem:[#allocation2 + $0xb0] sm:$0xff] 0.0
    %45 = vst [vmem:[#allocation2 + $0xb8] sm:$0xff] 0.0
    %46 = vst [vmem:[#allocation2 + $0xc0] sm:$0xff] 0.0
    %47 = vst [vmem:[#allocation2 + $0xc8] sm:$0xff] 0.0
    %48 = vst [vmem:[#allocation2 + $0xd0] sm:$0xff] 0.0
    %49 = vst [vmem:[#allocation2 + $0xd8] sm:$0xff] 0.0
    %50 = vst [vmem:[#allocation2 + $0xe0] sm:$0xff] 0.0
    %51 = vst [vmem:[#allocation2 + $0xe8] sm:$0xff] 0.0
    %52 = vst [vmem:[#allocation2 + $0xf0] sm:$0xff] 0.0
    %53 = vst [vmem:[#allocation2 + $0xf8] sm:$0xff] 0.0
  $region21: #{dual_encoder_forward.6} parent=0 // pred_fallthru
    _
  %s54 = smul.u32 0, 256
  %v55 = vld [vmem:[#allocation2] sm:$0xff]
  %v56 = vld [vmem:[#allocation2 + $0x8] sm:$0xff]
  %v57 = vld [vmem:[#allocation2 + $0x10] sm:$0xff]
  %v58 = vld [vmem:[#allocation2 + $0x18] sm:$0xff]
  %v59 = vld [vmem:[#allocation2 + $0x20] sm:$0xff]
  %v60 = vld [vmem:[#allocation2 + $0x28] sm:$0xff]
  %v61 = vld [vmem:[#allocation2 + $0x30] sm:$0xff]
  %v62 = vld [vmem:[#allocation2 + $0x38] sm:$0xff]
  %v63 = vld [vmem:[#allocation2 + $0x40] sm:$0xff]
  %v64 = vld [vmem:[#allocation2 + $0x48] sm:$0xff]
  %v65 = vld [vmem:[#allocation2 + $0x50] sm:$0xff]
  %v66 = vld [vmem:[#allocation2 + $0x58] sm:$0xff]
  %v67 = vld [vmem:[#allocation2 + $0x60] sm:$0xff]
  %v68 = vld [vmem:[#allocation2 + $0x68] sm:$0xff]
  %v69 = vld [vmem:[#allocation2 + $0x70] sm:$0xff]
  %v70 = vld [vmem:[#allocation2 + $0x78] sm:$0xff]
  %v71 = vld [vmem:[#allocation2 + $0x80] sm:$0xff]
  %v72 = vld [vmem:[#allocation2 + $0x88] sm:$0xff]
  %v73 = vld [vmem:[#allocation2 + $0x90] sm:$0xff]
  %v74 = vld [vmem:[#allocation2 + $0x98] sm:$0xff]
  %v75 = vld [vmem:[#allocation2 + $0xa0] sm:$0xff]
  %v76 = vld [vmem:[#allocation2 + $0xa8] sm:$0xff]
  %v77 = vld [vmem:[#allocation2 + $0xb0] sm:$0xff]
  %v78 = vld [vmem:[#allocation2 + $0xb8] sm:$0xff]
  %v79 = vld [vmem:[#allocation2 + $0xc0] sm:$0xff]
  %v80 = vld [vmem:[#allocation2 + $0xc8] sm:$0xff]
  %v81 = vld [vmem:[#allocation2 + $0xd0] sm:$0xff]
  %v82 = vld [vmem:[#allocation2 + $0xd8] sm:$0xff]
  %v83 = vld [vmem:[#allocation2 + $0xe0] sm:$0xff]
  %v84 = vld [vmem:[#allocation2 + $0xe8] sm:$0xff]
  %v85 = vld [vmem:[#allocation2 + $0xf0] sm:$0xff]
  %v86 = vld [vmem:[#allocation2 + $0xf8] sm:$0xff]
  %v87 = vld [vmem:[%s0] sm:$0xff]
  %v88 = vld [vmem:[%s0 + $0x8] sm:$0xff]
  %v89 = vld [vmem:[%s0 + $0x10] sm:$0xff]
  %v90 = vld [vmem:[%s0 + $0x18] sm:$0xff]
  %v91 = vld [vmem:[%s0 + $0x20] sm:$0xff]
  %v92 = vld [vmem:[%s0 + $0x28] sm:$0xff]
  %v93 = vld [vmem:[%s0 + $0x30] sm:$0xff]
  %v94 = vld [vmem:[%s0 + $0x38] sm:$0xff]
  %v95 = vld [vmem:[%s0 + $0x40] sm:$0xff]
  %v96 = vld [vmem:[%s0 + $0x48] sm:$0xff]
  %v97 = vld [vmem:[%s0 + $0x50] sm:$0xff]
  %v98 = vld [vmem:[%s0 + $0x58] sm:$0xff]
  %v99 = vld [vmem:[%s0 + $0x60] sm:$0xff]
  %v100 = vld [vmem:[%s0 + $0x68] sm:$0xff]
  %v101 = vld [vmem:[%s0 + $0x70] sm:$0xff]
  %v102 = vld [vmem:[%s0 + $0x78] sm:$0xff]
  %v103 = vld [vmem:[%s0 + $0x80] sm:$0xff]
  %v104 = vld [vmem:[%s0 + $0x88] sm:$0xff]
  %v105 = vld [vmem:[%s0 + $0x90] sm:$0xff]
  %v106 = vld [vmem:[%s0 + $0x98] sm:$0xff]
  %v107 = vld [vmem:[%s0 + $0xa0] sm:$0xff]
  %v108 = vld [vmem:[%s0 + $0xa8] sm:$0xff]
  %v109 = vld [vmem:[%s0 + $0xb0] sm:$0xff]
  %v110 = vld [vmem:[%s0 + $0xb8] sm:$0xff]
  %v111 = vld [vmem:[%s0 + $0xc0] sm:$0xff]
  %v112 = vld [vmem:[%s0 + $0xc8] sm:$0xff]
  %v113 = vld [vmem:[%s0 + $0xd0] sm:$0xff]
  %v114 = vld [vmem:[%s0 + $0xd8] sm:$0xff]
  %v115 = vld [vmem:[%s0 + $0xe0] sm:$0xff]
  %v116 = vld [vmem:[%s0 + $0xe8] sm:$0xff]
  %v117 = vld [vmem:[%s0 + $0xf0] sm:$0xff]
  %v118 = vld [vmem:[%s0 + $0xf8] sm:$0xff]
  %s119 = sshra.s32 %s54, 3
  %s120 = sand.u32 %s54, 7
  %s121 = smul.addr %s119, 4
  %s122 = scalar_lea.vmem %s1, %s121
  %v123 = vld [vmem:[%s122] sm:$0xf]
  %v124 = vld [vmem:[%s122 + $0x4] sm:$0xf]
  %v125 = vld [vmem:[%s122 + $0x8] sm:$0xf]
  %v126 = vld [vmem:[%s122 + $0xc] sm:$0xf]
  %v127 = vld [vmem:[%s122 + $0x10] sm:$0xf]
  %v128 = vld [vmem:[%s122 + $0x14] sm:$0xf]
  %v129 = vld [vmem:[%s122 + $0x18] sm:$0xf]
  %v130 = vld [vmem:[%s122 + $0x1c] sm:$0xf]
  %v131 = vld [vmem:[%s122 + $0x20] sm:$0xf]
  %v132 = vld [vmem:[%s122 + $0x24] sm:$0xf]
  %v133 = vld [vmem:[%s122 + $0x28] sm:$0xf]
  %v134 = vld [vmem:[%s122 + $0x2c] sm:$0xf]
  %v135 = vld [vmem:[%s122 + $0x30] sm:$0xf]
  %v136 = vld [vmem:[%s122 + $0x34] sm:$0xf]
  %v137 = vld [vmem:[%s122 + $0x38] sm:$0xf]
  %v138 = vld [vmem:[%s122 + $0x3c] sm:$0xf]
  %v139 = vld [vmem:[%s122 + $0x40] sm:$0xf]
  %v140 = vld [vmem:[%s122 + $0x44] sm:$0xf]
  %v141 = vld [vmem:[%s122 + $0x48] sm:$0xf]
  %v142 = vld [vmem:[%s122 + $0x4c] sm:$0xf]
  %v143 = vld [vmem:[%s122 + $0x50] sm:$0xf]
  %v144 = vld [vmem:[%s122 + $0x54] sm:$0xf]
  %v145 = vld [vmem:[%s122 + $0x58] sm:$0xf]
  %v146 = vld [vmem:[%s122 + $0x5c] sm:$0xf]
  %v147 = vld [vmem:[%s122 + $0x60] sm:$0xf]
  %v148 = vld [vmem:[%s122 + $0x64] sm:$0xf]
  %v149 = vld [vmem:[%s122 + $0x68] sm:$0xf]
  %v150 = vld [vmem:[%s122 + $0x6c] sm:$0xf]
  %v151 = vld [vmem:[%s122 + $0x70] sm:$0xf]
  %v152 = vld [vmem:[%s122 + $0x74] sm:$0xf]
  %v153 = vld [vmem:[%s122 + $0x78] sm:$0xf]
  %v154 = vld [vmem:[%s122 + $0x7c] sm:$0xf]
  %v187 = vunpack.c.l.b16 %v87
  %v188 = vunpack.c.h.b16 %v87
  %v189 = vunpack.c.l.b16 %v88
  %v190 = vunpack.c.h.b16 %v88
  %v191 = vunpack.c.l.b16 %v89
  %v192 = vunpack.c.h.b16 %v89
  %v193 = vunpack.c.l.b16 %v90
  %v194 = vunpack.c.h.b16 %v90
  %v195 = vunpack.c.l.b16 %v91
  %v196 = vunpack.c.h.b16 %v91
  %v197 = vunpack.c.l.b16 %v92
  %v198 = vunpack.c.h.b16 %v92
  %v199 = vunpack.c.l.b16 %v93
  %v200 = vunpack.c.h.b16 %v93
  %v201 = vunpack.c.l.b16 %v94
  %v202 = vunpack.c.h.b16 %v94
  %v203 = vunpack.c.l.b16 %v95
  %v204 = vunpack.c.h.b16 %v95
  %v205 = vunpack.c.l.b16 %v96
  %v206 = vunpack.c.h.b16 %v96
  %v207 = vunpack.c.l.b16 %v97
  %v208 = vunpack.c.h.b16 %v97
  %v209 = vunpack.c.l.b16 %v98
  %v210 = vunpack.c.h.b16 %v98
  %v211 = vunpack.c.l.b16 %v99
  %v212 = vunpack.c.h.b16 %v99
  %v213 = vunpack.c.l.b16 %v100
  %v214 = vunpack.c.h.b16 %v100
  %v215 = vunpack.c.l.b16 %v101
  %v216 = vunpack.c.h.b16 %v101
  %v217 = vunpack.c.l.b16 %v102
  %v218 = vunpack.c.h.b16 %v102
  %v219 = vunpack.c.l.b16 %v103
  %v220 = vunpack.c.h.b16 %v103
  %v221 = vunpack.c.l.b16 %v104
  %v222 = vunpack.c.h.b16 %v104
  %v223 = vunpack.c.l.b16 %v105
  %v224 = vunpack.c.h.b16 %v105
  %v225 = vunpack.c.l.b16 %v106
  %v226 = vunpack.c.h.b16 %v106
  %v227 = vunpack.c.l.b16 %v107
  %v228 = vunpack.c.h.b16 %v107
  %v229 = vunpack.c.l.b16 %v108
  %v230 = vunpack.c.h.b16 %v108
  %v231 = vunpack.c.l.b16 %v109
  %v232 = vunpack.c.h.b16 %v109
  %v233 = vunpack.c.l.b16 %v110
  %v234 = vunpack.c.h.b16 %v110
  %v235 = vunpack.c.l.b16 %v111
  %v236 = vunpack.c.h.b16 %v111
  %v237 = vunpack.c.l.b16 %v112
  %v238 = vunpack.c.h.b16 %v112
  %v239 = vunpack.c.l.b16 %v113
  %v240 = vunpack.c.h.b16 %v113
  %v241 = vunpack.c.l.b16 %v114
  %v242 = vunpack.c.h.b16 %v114
  %v243 = vunpack.c.l.b16 %v115
  %v244 = vunpack.c.h.b16 %v115
  %v245 = vunpack.c.l.b16 %v116
  %v246 = vunpack.c.h.b16 %v116
  %v247 = vunpack.c.l.b16 %v117
  %v248 = vunpack.c.h.b16 %v117
  %v249 = vunpack.c.l.b16 %v118
  %v250 = vunpack.c.h.b16 %v118
  %v251 = vpack.c.b16 %v189, %v187
  %v252 = vpack.c.b16 %v190, %v188
  %v253 = vpack.c.b16 %v193, %v191
  %v254 = vpack.c.b16 %v194, %v192
  %v255 = vpack.c.b16 %v197, %v195
  %v256 = vpack.c.b16 %v198, %v196
  %v257 = vpack.c.b16 %v201, %v199
  %v258 = vpack.c.b16 %v202, %v200
  %v259 = vpack.c.b16 %v205, %v203
  %v260 = vpack.c.b16 %v206, %v204
  %v261 = vpack.c.b16 %v209, %v207
  %v262 = vpack.c.b16 %v210, %v208
  %v263 = vpack.c.b16 %v213, %v211
  %v264 = vpack.c.b16 %v214, %v212
  %v265 = vpack.c.b16 %v217, %v215
  %v266 = vpack.c.b16 %v218, %v216
  %v267 = vpack.c.b16 %v221, %v219
  %v268 = vpack.c.b16 %v222, %v220
  %v269 = vpack.c.b16 %v225, %v223
  %v270 = vpack.c.b16 %v226, %v224
  %v271 = vpack.c.b16 %v229, %v227
  %v272 = vpack.c.b16 %v230, %v228
  %v273 = vpack.c.b16 %v233, %v231
  %v274 = vpack.c.b16 %v234, %v232
  %v275 = vpack.c.b16 %v237, %v235
  %v276 = vpack.c.b16 %v238, %v236
  %v277 = vpack.c.b16 %v241, %v239
  %v278 = vpack.c.b16 %v242, %v240
  %v279 = vpack.c.b16 %v245, %v243
  %v280 = vpack.c.b16 %v246, %v244
  %v281 = vpack.c.b16 %v249, %v247
  %v282 = vpack.c.b16 %v250, %v248
  %v347 = vunpack.c.l.b16 %v123
  %v348 = vunpack.c.l.b16 %v124
  %v349 = vunpack.c.l.b16 %v125
  %v350 = vunpack.c.l.b16 %v126
  %v351 = vunpack.c.l.b16 %v127
  %v352 = vunpack.c.l.b16 %v128
  %v353 = vunpack.c.l.b16 %v129
  %v354 = vunpack.c.l.b16 %v130
  %v355 = vunpack.c.l.b16 %v131
  %v356 = vunpack.c.l.b16 %v132
  %v357 = vunpack.c.l.b16 %v133
  %v358 = vunpack.c.l.b16 %v134
  %v359 = vunpack.c.l.b16 %v135
  %v360 = vunpack.c.l.b16 %v136
  %v361 = vunpack.c.l.b16 %v137
  %v362 = vunpack.c.l.b16 %v138
  %v363 = vunpack.c.l.b16 %v139
  %v364 = vunpack.c.l.b16 %v140
  %v365 = vunpack.c.l.b16 %v141
  %v366 = vunpack.c.l.b16 %v142
  %v367 = vunpack.c.l.b16 %v143
  %v368 = vunpack.c.l.b16 %v144
  %v369 = vunpack.c.l.b16 %v145
  %v370 = vunpack.c.l.b16 %v146
  %v371 = vunpack.c.l.b16 %v147
  %v372 = vunpack.c.l.b16 %v148
  %v373 = vunpack.c.l.b16 %v149
  %v374 = vunpack.c.l.b16 %v150
  %v375 = vunpack.c.l.b16 %v151
  %v376 = vunpack.c.l.b16 %v152
  %v377 = vunpack.c.l.b16 %v153
  %v378 = vunpack.c.l.b16 %v154
  %v379 = vpack.c.b16 %v348, %v347
  %v380 = vpack.c.b16 %v350, %v349
  %v381 = vpack.c.b16 %v352, %v351
  %v382 = vpack.c.b16 %v354, %v353
  %v383 = vpack.c.b16 %v356, %v355
  %v384 = vpack.c.b16 %v358, %v357
  %v385 = vpack.c.b16 %v360, %v359
  %v386 = vpack.c.b16 %v362, %v361
  %v387 = vpack.c.b16 %v364, %v363
  %v388 = vpack.c.b16 %v366, %v365
  %v389 = vpack.c.b16 %v368, %v367
  %v390 = vpack.c.b16 %v370, %v369
  %v391 = vpack.c.b16 %v372, %v371
  %v392 = vpack.c.b16 %v374, %v373
  %v393 = vpack.c.b16 %v376, %v375
  %v394 = vpack.c.b16 %v378, %v377
  %411 = vmatprep.subr.bf16.mxu0 0
  %412 = vmatpush1.bf16.msra.mxu0 %v379
  %413 = vmatprep.subr.bf16.mxu0 0
  %414 = vmatpush1.bf16.msra.mxu0 %v380
  %415 = vmatprep.subr.bf16.mxu0 0
  %416 = vmatpush1.bf16.msra.mxu0 %v381
  %417 = vmatprep.subr.bf16.mxu0 0
  %418 = vmatpush1.bf16.msra.mxu0 %v382
  %419 = vmatprep.subr.bf16.mxu0 0
  %420 = vmatpush1.bf16.msra.mxu0 %v383
  %421 = vmatprep.subr.bf16.mxu0 0
  %422 = vmatpush1.bf16.msra.mxu0 %v384
  %423 = vmatprep.subr.bf16.mxu0 0
  %424 = vmatpush1.bf16.msra.mxu0 %v385
  %425 = vmatprep.subr.bf16.mxu0 0
  %426 = vmatpush1.bf16.msra.mxu0 %v386
  %427 = vmatprep.subr.bf16.mxu0 0
  %428 = vmatpush1.bf16.msra.mxu0 %v387
  %429 = vmatprep.subr.bf16.mxu0 0
  %430 = vmatpush1.bf16.msra.mxu0 %v388
  %431 = vmatprep.subr.bf16.mxu0 0
  %432 = vmatpush1.bf16.msra.mxu0 %v389
  %433 = vmatprep.subr.bf16.mxu0 0
  %434 = vmatpush1.bf16.msra.mxu0 %v390
  %435 = vmatprep.subr.bf16.mxu0 0
  %436 = vmatpush1.bf16.msra.mxu0 %v391
  %437 = vmatprep.subr.bf16.mxu0 0
  %438 = vmatpush1.bf16.msra.mxu0 %v392
  %439 = vmatprep.subr.bf16.mxu0 0
  %440 = vmatpush1.bf16.msra.mxu0 %v393
  %441 = vmatprep.subr.bf16.mxu0 0
  %442 = vmatpush1.bf16.msra.mxu0 %v394
  %443 = vmatprep.mubr.bf16.mxu0 %v252
  %444 = vmatmul.mubr.bf16.gmra.mrb[0].mxu0 %v251
  %v445 = vpop.f32.mrb[0].mxu0
  %v446 = vadd.f32 0.0, %v445
  %v447 = vpop.f32.mrb[0].mxu0
  %v448 = vpop.f32.mrb[0].mxu0
  %v449 = vadd.f32 0.0, %v448
  %v450 = vpop.f32.mrb[0].mxu0
  %451 = vmatprep.mubr.bf16.mxu0 %v254
  %452 = vmatmul.mubr.bf16.gmra.mrb[0].mxu0 %v253
  %v453 = vpop.f32.mrb[0].mxu0
  %v454 = vadd.f32 0.0, %v453
  %v455 = vpop.f32.mrb[0].mxu0
  %v456 = vpop.f32.mrb[0].mxu0
  %v457 = vadd.f32 0.0, %v456
  %v458 = vpop.f32.mrb[0].mxu0
  %459 = vmatprep.mubr.bf16.mxu0 %v256
  %460 = vmatmul.mubr.bf16.gmra.mrb[0].mxu0 %v255
  %v461 = vpop.f32.mrb[0].mxu0
  %v462 = vadd.f32 0.0, %v461
  %v463 = vpop.f32.mrb[0].mxu0
  %v464 = vpop.f32.mrb[0].mxu0
  %v465 = vadd.f32 0.0, %v464
  %v466 = vpop.f32.mrb[0].mxu0
  %467 = vmatprep.mubr.bf16.mxu0 %v258
  %468 = vmatmul.mubr.bf16.gmra.mrb[0].mxu0 %v257
  %v469 = vpop.f32.mrb[0].mxu0
  %v470 = vadd.f32 0.0, %v469
  %v471 = vpop.f32.mrb[0].mxu0
  %v472 = vpop.f32.mrb[0].mxu0
  %v473 = vadd.f32 0.0, %v472
  %v474 = vpop.f32.mrb[0].mxu0
  %475 = vmatprep.mubr.bf16.mxu0 %v260
  %476 = vmatmul.mubr.bf16.gmra.mrb[0].mxu0 %v259
  %v477 = vpop.f32.mrb[0].mxu0
  %v478 = vadd.f32 0.0, %v477
  %v479 = vpop.f32.mrb[0].mxu0
  %v480 = vpop.f32.mrb[0].mxu0
  %v481 = vadd.f32 0.0, %v480
  %v482 = vpop.f32.mrb[0].mxu0
  %483 = vmatprep.mubr.bf16.mxu0 %v262
  %484 = vmatmul.mubr.bf16.gmra.mrb[0].mxu0 %v261
  %v485 = vpop.f32.mrb[0].mxu0
  %v486 = vadd.f32 0.0, %v485
  %v487 = vpop.f32.mrb[0].mxu0
  %v488 = vpop.f32.mrb[0].mxu0
  %v489 = vadd.f32 0.0, %v488
  %v490 = vpop.f32.mrb[0].mxu0
  %491 = vmatprep.mubr.bf16.mxu0 %v264
  %492 = vmatmul.mubr.bf16.gmra.mrb[0].mxu0 %v263
  %v493 = vpop.f32.mrb[0].mxu0
  %v494 = vadd.f32 0.0, %v493
  %v495 = vpop.f32.mrb[0].mxu0
  %v496 = vpop.f32.mrb[0].mxu0
  %v497 = vadd.f32 0.0, %v496
  %v498 = vpop.f32.mrb[0].mxu0
  %499 = vmatprep.mubr.bf16.mxu0 %v266
  %500 = vmatmul.mubr.bf16.gmra.mrb[0].mxu0 %v265
  %v501 = vpop.f32.mrb[0].mxu0
  %v502 = vadd.f32 0.0, %v501
  %v503 = vpop.f32.mrb[0].mxu0
  %v504 = vpop.f32.mrb[0].mxu0
  %v505 = vadd.f32 0.0, %v504
  %v506 = vpop.f32.mrb[0].mxu0
  %507 = vmatprep.mubr.bf16.mxu0 %v268
  %508 = vmatmul.mubr.bf16.gmra.mrb[0].mxu0 %v267
  %v509 = vpop.f32.mrb[0].mxu0
  %v510 = vadd.f32 0.0, %v509
  %v511 = vpop.f32.mrb[0].mxu0
  %v512 = vpop.f32.mrb[0].mxu0
  %v513 = vadd.f32 0.0, %v512
  %v514 = vpop.f32.mrb[0].mxu0
  %515 = vmatprep.mubr.bf16.mxu0 %v270
  %516 = vmatmul.mubr.bf16.gmra.mrb[0].mxu0 %v269
  %v517 = vpop.f32.mrb[0].mxu0
  %v518 = vadd.f32 0.0, %v517
  %v519 = vpop.f32.mrb[0].mxu0
  %v520 = vpop.f32.mrb[0].mxu0
  %v521 = vadd.f32 0.0, %v520
  %v522 = vpop.f32.mrb[0].mxu0
  %523 = vmatprep.mubr.bf16.mxu0 %v272
  %524 = vmatmul.mubr.bf16.gmra.mrb[0].mxu0 %v271
  %v525 = vpop.f32.mrb[0].mxu0
  %v526 = vadd.f32 0.0, %v525
  %v527 = vpop.f32.mrb[0].mxu0
  %v528 = vpop.f32.mrb[0].mxu0
  %v529 = vadd.f32 0.0, %v528
  %v530 = vpop.f32.mrb[0].mxu0
  %531 = vmatprep.mubr.bf16.mxu0 %v274
  %532 = vmatmul.mubr.bf16.gmra.mrb[0].mxu0 %v273
  %v533 = vpop.f32.mrb[0].mxu0
  %v534 = vadd.f32 0.0, %v533
  %v535 = vpop.f32.mrb[0].mxu0
  %v536 = vpop.f32.mrb[0].mxu0
  %v537 = vadd.f32 0.0, %v536
  %v538 = vpop.f32.mrb[0].mxu0
  %539 = vmatprep.mubr.bf16.mxu0 %v276
  %540 = vmatmul.mubr.bf16.gmra.mrb[0].mxu0 %v275
  %v541 = vpop.f32.mrb[0].mxu0
  %v542 = vadd.f32 0.0, %v541
  %v543 = vpop.f32.mrb[0].mxu0
  %v544 = vpop.f32.mrb[0].mxu0
  %v545 = vadd.f32 0.0, %v544
  %v546 = vpop.f32.mrb[0].mxu0
  %547 = vmatprep.mubr.bf16.mxu0 %v278
  %548 = vmatmul.mubr.bf16.gmra.mrb[0].mxu0 %v277
  %v549 = vpop.f32.mrb[0].mxu0
  %v550 = vadd.f32 0.0, %v549
  %v551 = vpop.f32.mrb[0].mxu0
  %v552 = vpop.f32.mrb[0].mxu0
  %v553 = vadd.f32 0.0, %v552
  %v554 = vpop.f32.mrb[0].mxu0
  %555 = vmatprep.mubr.bf16.mxu0 %v280
  %556 = vmatmul.mubr.bf16.gmra.mrb[0].mxu0 %v279
  %v557 = vpop.f32.mrb[0].mxu0
  %v558 = vadd.f32 0.0, %v557
  %v559 = vpop.f32.mrb[0].mxu0
  %v560 = vpop.f32.mrb[0].mxu0
  %v561 = vadd.f32 0.0, %v560
  %v562 = vpop.f32.mrb[0].mxu0
  %563 = vmatprep.mubr.bf16.mxu0 %v282
  %564 = vmatmul.mubr.bf16.gmra.mrb[0].mxu0 %v281
  %v565 = vpop.f32.mrb[0].mxu0
  %v566 = vadd.f32 0.0, %v565
  %v567 = vpop.f32.mrb[0].mxu0
  %v568 = vpop.f32.mrb[0].mxu0
  %v569 = vadd.f32 0.0, %v568
  %v570 = vpop.f32.mrb[0].mxu0
  %571 = vdwg.mxu0
  %v572 = vadd.f32 %v55, %v446
  %v573 = vadd.f32 %v56, %v449
  %v574 = vadd.f32 %v57, %v454
  %v575 = vadd.f32 %v58, %v457
  %v576 = vadd.f32 %v59, %v462
  %v577 = vadd.f32 %v60, %v465
  %v578 = vadd.f32 %v61, %v470
  %v579 = vadd.f32 %v62, %v473
  %v580 = vadd.f32 %v63, %v478
  %v581 = vadd.f32 %v64, %v481
  %v582 = vadd.f32 %v65, %v486
  %v583 = vadd.f32 %v66, %v489
  %v584 = vadd.f32 %v67, %v494
  %v585 = vadd.f32 %v68, %v497
  %v586 = vadd.f32 %v69, %v502
  %v587 = vadd.f32 %v70, %v505
  %v588 = vadd.f32 %v71, %v510
  %v589 = vadd.f32 %v72, %v513
  %v590 = vadd.f32 %v73, %v518
  %v591 = vadd.f32 %v74, %v521
  %v592 = vadd.f32 %v75, %v526
  %v593 = vadd.f32 %v76, %v529
  %v594 = vadd.f32 %v77, %v534
  %v595 = vadd.f32 %v78, %v537
  %v596 = vadd.f32 %v79, %v542
  %v597 = vadd.f32 %v80, %v545
  %v598 = vadd.f32 %v81, %v550
  %v599 = vadd.f32 %v82, %v553
  %v600 = vadd.f32 %v83, %v558
  %v601 = vadd.f32 %v84, %v561
  %v602 = vadd.f32 %v85, %v566
  %v603 = vadd.f32 %v86, %v569
  %604 = vst [vmem:[#allocation2] sm:$0xff] %v572
  %605 = vst [vmem:[#allocation2 + $0x8] sm:$0xff] %v573
  %606 = vst [vmem:[#allocation2 + $0x10] sm:$0xff] %v574
  %607 = vst [vmem:[#allocation2 + $0x18] sm:$0xff] %v575
  %608 = vst [vmem:[#allocation2 + $0x20] sm:$0xff] %v576
  %609 = vst [vmem:[#allocation2 + $0x28] sm:$0xff] %v577
  %610 = vst [vmem:[#allocation2 + $0x30] sm:$0xff] %v578
  %611 = vst [vmem:[#allocation2 + $0x38] sm:$0xff] %v579
  %612 = vst [vmem:[#allocation2 + $0x40] sm:$0xff] %v580
  %613 = vst [vmem:[#allocation2 + $0x48] sm:$0xff] %v581
  %614 = vst [vmem:[#allocation2 + $0x50] sm:$0xff] %v582
  %615 = vst [vmem:[#allocation2 + $0x58] sm:$0xff] %v583
  %616 = vst [vmem:[#allocation2 + $0x60] sm:$0xff] %v584
  %617 = vst [vmem:[#allocation2 + $0x68] sm:$0xff] %v585
  %618 = vst [vmem:[#allocation2 + $0x70] sm:$0xff] %v586
  %619 = vst [vmem:[#allocation2 + $0x78] sm:$0xff] %v587
  %620 = vst [vmem:[#allocation2 + $0x80] sm:$0xff] %v588
  %621 = vst [vmem:[#allocation2 + $0x88] sm:$0xff] %v589
  %622 = vst [vmem:[#allocation2 + $0x90] sm:$0xff] %v590
  %623 = vst [vmem:[#allocation2 + $0x98] sm:$0xff] %v591
  %624 = vst [vmem:[#allocation2 + $0xa0] sm:$0xff] %v592
  %625 = vst [vmem:[#allocation2 + $0xa8] sm:$0xff] %v593
  %626 = vst [vmem:[#allocation2 + $0xb0] sm:$0xff] %v594
  %627 = vst [vmem:[#allocation2 + $0xb8] sm:$0xff] %v595
  %628 = vst [vmem:[#allocation2 + $0xc0] sm:$0xff] %v596
  %629 = vst [vmem:[#allocation2 + $0xc8] sm:$0xff] %v597
  %630 = vst [vmem:[#allocation2 + $0xd0] sm:$0xff] %v598
  %631 = vst [vmem:[#allocation2 + $0xd8] sm:$0xff] %v599
  %632 = vst [vmem:[#allocation2 + $0xe0] sm:$0xff] %v600
  %633 = vst [vmem:[#allocation2 + $0xe8] sm:$0xff] %v601
  %634 = vst [vmem:[#allocation2 + $0xf0] sm:$0xff] %v602
  %635 = vst [vmem:[#allocation2 + $0xf8] sm:$0xff] %v603
  // Predicated region
  $region22: #{dual_encoder_forward.6} parent=0 // pred_check
    %p636 = pneg %p18
  $region23: #{dual_encoder_forward.6} parent=0 // pred_check_branch
    %638 = sbr.rel (%p636) target = $region25
  $region24: #{dual_encoder_forward.6} parent=0 // pred_region
    %v639 = vld [vmem:[#allocation2] sm:$0xff]
    %v640 = vld [vmem:[#allocation2 + $0x8] sm:$0xff]
    %v641 = vld [vmem:[#allocation2 + $0x10] sm:$0xff]
    %v642 = vld [vmem:[#allocation2 + $0x18] sm:$0xff]
    %v643 = vld [vmem:[#allocation2 + $0x20] sm:$0xff]
    %v644 = vld [vmem:[#allocation2 + $0x28] sm:$0xff]
    %v645 = vld [vmem:[#allocation2 + $0x30] sm:$0xff]
    %v646 = vld [vmem:[#allocation2 + $0x38] sm:$0xff]
    %v647 = vld [vmem:[#allocation2 + $0x40] sm:$0xff]
    %v648 = vld [vmem:[#allocation2 + $0x48] sm:$0xff]
    %v649 = vld [vmem:[#allocation2 + $0x50] sm:$0xff]
    %v650 = vld [vmem:[#allocation2 + $0x58] sm:$0xff]
    %v651 = vld [vmem:[#allocation2 + $0x60] sm:$0xff]
    %v652 = vld [vmem:[#allocation2 + $0x68] sm:$0xff]
    %v653 = vld [vmem:[#allocation2 + $0x70] sm:$0xff]
    %v654 = vld [vmem:[#allocation2 + $0x78] sm:$0xff]
    %v655 = vld [vmem:[#allocation2 + $0x80] sm:$0xff]
    %v656 = vld [vmem:[#allocation2 + $0x88] sm:$0xff]
    %v657 = vld [vmem:[#allocation2 + $0x90] sm:$0xff]
    %v658 = vld [vmem:[#allocation2 + $0x98] sm:$0xff]
    %v659 = vld [vmem:[#allocation2 + $0xa0] sm:$0xff]
    %v660 = vld [vmem:[#allocation2 + $0xa8] sm:$0xff]
    %v661 = vld [vmem:[#allocation2 + $0xb0] sm:$0xff]
    %v662 = vld [vmem:[#allocation2 + $0xb8] sm:$0xff]
    %v663 = vld [vmem:[#allocation2 + $0xc0] sm:$0xff]
    %v664 = vld [vmem:[#allocation2 + $0xc8] sm:$0xff]
    %v665 = vld [vmem:[#allocation2 + $0xd0] sm:$0xff]
    %v666 = vld [vmem:[#allocation2 + $0xd8] sm:$0xff]
    %v667 = vld [vmem:[#allocation2 + $0xe0] sm:$0xff]
    %v668 = vld [vmem:[#allocation2 + $0xe8] sm:$0xff]
    %v669 = vld [vmem:[#allocation2 + $0xf0] sm:$0xff]
    %v670 = vld [vmem:[#allocation2 + $0xf8] sm:$0xff]
    %v671 = vld [vmem:[%s2] sm:$0x1]
    %v673 = vlaneseq
    %v674 = vshrl.u32 %v673, 7
    %v675 = vsub.s32 0, %v674
    %v676 = vrot.slane %v671, %v675
    %v678 = vadd.f32 %v639, %v676
    %v679 = vadd.f32 %v640, %v676
    %v680 = vadd.f32 %v641, %v676
    %v681 = vadd.f32 %v642, %v676
    %v682 = vadd.f32 %v643, %v676
    %v683 = vadd.f32 %v644, %v676
    %v684 = vadd.f32 %v645, %v676
    %v685 = vadd.f32 %v646, %v676
    %v686 = vadd.f32 %v647, %v676
    %v687 = vadd.f32 %v648, %v676
    %v688 = vadd.f32 %v649, %v676
    %v689 = vadd.f32 %v650, %v676
    %v690 = vadd.f32 %v651, %v676
    %v691 = vadd.f32 %v652, %v676
    %v692 = vadd.f32 %v653, %v676
    %v693 = vadd.f32 %v654, %v676
    %v694 = vadd.f32 %v655, %v676
    %v695 = vadd.f32 %v656, %v676
    %v696 = vadd.f32 %v657, %v676
    %v697 = vadd.f32 %v658, %v676
    %v698 = vadd.f32 %v659, %v676
    %v699 = vadd.f32 %v660, %v676
    %v700 = vadd.f32 %v661, %v676
    %v701 = vadd.f32 %v662, %v676
    %v702 = vadd.f32 %v663, %v676
    %v703 = vadd.f32 %v664, %v676
    %v704 = vadd.f32 %v665, %v676
    %v705 = vadd.f32 %v666, %v676
    %v706 = vadd.f32 %v667, %v676
    %v707 = vadd.f32 %v668, %v676
    %v708 = vadd.f32 %v669, %v676
    %v709 = vadd.f32 %v670, %v676
    %vm710 = vcmp.gt.f32.partialorder %v678, 0.0
    %vm711 = vcmp.gt.f32.partialorder %v679, 0.0
    %vm712 = vcmp.gt.f32.partialorder %v680, 0.0
    %vm713 = vcmp.gt.f32.partialorder %v681, 0.0
    %vm714 = vcmp.gt.f32.partialorder %v682, 0.0
    %vm715 = vcmp.gt.f32.partialorder %v683, 0.0
    %vm716 = vcmp.gt.f32.partialorder %v684, 0.0
    %vm717 = vcmp.gt.f32.partialorder %v685, 0.0
    %vm718 = vcmp.gt.f32.partialorder %v686, 0.0
    %vm719 = vcmp.gt.f32.partialorder %v687, 0.0
    %vm720 = vcmp.gt.f32.partialorder %v688, 0.0
    %vm721 = vcmp.gt.f32.partialorder %v689, 0.0
    %vm722 = vcmp.gt.f32.partialorder %v690, 0.0
    %vm723 = vcmp.gt.f32.partialorder %v691, 0.0
    %vm724 = vcmp.gt.f32.partialorder %v692, 0.0
    %vm725 = vcmp.gt.f32.partialorder %v693, 0.0
    %vm726 = vcmp.gt.f32.partialorder %v694, 0.0
    %vm727 = vcmp.gt.f32.partialorder %v695, 0.0
    %vm728 = vcmp.gt.f32.partialorder %v696, 0.0
    %vm729 = vcmp.gt.f32.partialorder %v697, 0.0
    %vm730 = vcmp.gt.f32.partialorder %v698, 0.0
    %vm731 = vcmp.gt.f32.partialorder %v699, 0.0
    %vm732 = vcmp.gt.f32.partialorder %v700, 0.0
    %vm733 = vcmp.gt.f32.partialorder %v701, 0.0
    %vm734 = vcmp.gt.f32.partialorder %v702, 0.0
    %vm735 = vcmp.gt.f32.partialorder %v703, 0.0
    %vm736 = vcmp.gt.f32.partialorder %v704, 0.0
    %vm737 = vcmp.gt.f32.partialorder %v705, 0.0
    %vm738 = vcmp.gt.f32.partialorder %v706, 0.0
    %vm739 = vcmp.gt.f32.partialorder %v707, 0.0
    %vm740 = vcmp.gt.f32.partialorder %v708, 0.0
    %vm741 = vcmp.gt.f32.partialorder %v709, 0.0
    %v742 = vmul.f32 %v678, 0.25
    %v743 = vmul.f32 %v679, 0.25
    %v744 = vmul.f32 %v680, 0.25
    %v745 = vmul.f32 %v681, 0.25
    %v746 = vmul.f32 %v682, 0.25
    %v747 = vmul.f32 %v683, 0.25
    %v748 = vmul.f32 %v684, 0.25
    %v749 = vmul.f32 %v685, 0.25
    %v750 = vmul.f32 %v686, 0.25
    %v751 = vmul.f32 %v687, 0.25
    %v752 = vmul.f32 %v688, 0.25
    %v753 = vmul.f32 %v689, 0.25
    %v754 = vmul.f32 %v690, 0.25
    %v755 = vmul.f32 %v691, 0.25
    %v756 = vmul.f32 %v692, 0.25
    %v757 = vmul.f32 %v693, 0.25
    %v758 = vmul.f32 %v694, 0.25
    %v759 = vmul.f32 %v695, 0.25
    %v760 = vmul.f32 %v696, 0.25
    %v761 = vmul.f32 %v697, 0.25
    %v762 = vmul.f32 %v698, 0.25
    %v763 = vmul.f32 %v699, 0.25
    %v764 = vmul.f32 %v700, 0.25
    %v765 = vmul.f32 %v701, 0.25
    %v766 = vmul.f32 %v702, 0.25
    %v767 = vmul.f32 %v703, 0.25
    %v768 = vmul.f32 %v704, 0.25
    %v769 = vmul.f32 %v705, 0.25
    %v770 = vmul.f32 %v706, 0.25
    %v771 = vmul.f32 %v707, 0.25
    %v772 = vmul.f32 %v708, 0.25
    %v773 = vmul.f32 %v709, 0.25
    %v774 = vsel %vm710, %v678, %v742
    %v775 = vsel %vm711, %v679, %v743
    %v776 = vsel %vm712, %v680, %v744
    %v777 = vsel %vm713, %v681, %v745
    %v778 = vsel %vm714, %v682, %v746
    %v779 = vsel %vm715, %v683, %v747
    %v780 = vsel %vm716, %v684, %v748
    %v781 = vsel %vm717, %v685, %v749
    %v782 = vsel %vm718, %v686, %v750
    %v783 = vsel %vm719, %v687, %v751
    %v784 = vsel %vm720, %v688, %v752
    %v785 = vsel %vm721, %v689, %v753
    %v786 = vsel %vm722, %v690, %v754
    %v787 = vsel %vm723, %v691, %v755
    %v788 = vsel %vm724, %v692, %v756
    %v789 = vsel %vm725, %v693, %v757
    %v790 = vsel %vm726, %v694, %v758
    %v791 = vsel %vm727, %v695, %v759
    %v792 = vsel %vm728, %v696, %v760
    %v793 = vsel %vm729, %v697, %v761
    %v794 = vsel %vm730, %v698, %v762
    %v795 = vsel %vm731, %v699, %v763
    %v796 = vsel %vm732, %v700, %v764
    %v797 = vsel %vm733, %v701, %v765
    %v798 = vsel %vm734, %v702, %v766
    %v799 = vsel %vm735, %v703, %v767
    %v800 = vsel %vm736, %v704, %v768
    %v801 = vsel %vm737, %v705, %v769
    %v802 = vsel %vm738, %v706, %v770
    %v803 = vsel %vm739, %v707, %v771
    %v804 = vsel %vm740, %v708, %v772
    %v805 = vsel %vm741, %v709, %v773
    %v806 = vpack.c.bf16 %v775, %v774
    %v807 = vpack.c.bf16 %v777, %v776
    %v808 = vpack.c.bf16 %v779, %v778
    %v809 = vpack.c.bf16 %v781, %v780
    %v810 = vpack.c.bf16 %v783, %v782
    %v811 = vpack.c.bf16 %v785, %v784
    %v812 = vpack.c.bf16 %v787, %v786
    %v813 = vpack.c.bf16 %v789, %v788
    %v814 = vpack.c.bf16 %v791, %v790
    %v815 = vpack.c.bf16 %v793, %v792
    %v816 = vpack.c.bf16 %v795, %v794
    %v817 = vpack.c.bf16 %v797, %v796
    %v818 = vpack.c.bf16 %v799, %v798
    %v819 = vpack.c.bf16 %v801, %v800
    %v820 = vpack.c.bf16 %v803, %v802
    %v821 = vpack.c.bf16 %v805, %v804
    %v822 = vld [vmem:[%s3] sm:$0xf]
    %v823 = vld [vmem:[%s3 + $0x4] sm:$0xf]
    %v824 = vld [vmem:[%s3 + $0x8] sm:$0xf]
    %v825 = vld [vmem:[%s3 + $0xc] sm:$0xf]
    %v826 = vld [vmem:[%s3 + $0x10] sm:$0xf]
    %v827 = vld [vmem:[%s3 + $0x14] sm:$0xf]
    %v828 = vld [vmem:[%s3 + $0x18] sm:$0xf]
    %v829 = vld [vmem:[%s3 + $0x1c] sm:$0xf]
    %v830 = vld [vmem:[%s3 + $0x20] sm:$0xf]
    %v831 = vld [vmem:[%s3 + $0x24] sm:$0xf]
    %v832 = vld [vmem:[%s3 + $0x28] sm:$0xf]
    %v833 = vld [vmem:[%s3 + $0x2c] sm:$0xf]
    %v834 = vld [vmem:[%s3 + $0x30] sm:$0xf]
    %v835 = vld [vmem:[%s3 + $0x34] sm:$0xf]
    %v836 = vld [vmem:[%s3 + $0x38] sm:$0xf]
    %v837 = vld [vmem:[%s3 + $0x3c] sm:$0xf]
    %v854 = vunpack.c.l.b16 %v822
    %v855 = vunpack.c.l.b16 %v823
    %v856 = vunpack.c.l.b16 %v824
    %v857 = vunpack.c.l.b16 %v825
    %v858 = vunpack.c.l.b16 %v826
    %v859 = vunpack.c.l.b16 %v827
    %v860 = vunpack.c.l.b16 %v828
    %v861 = vunpack.c.l.b16 %v829
    %v862 = vunpack.c.l.b16 %v830
    %v863 = vunpack.c.l.b16 %v831
    %v864 = vunpack.c.l.b16 %v832
    %v865 = vunpack.c.l.b16 %v833
    %v866 = vunpack.c.l.b16 %v834
    %v867 = vunpack.c.l.b16 %v835
    %v868 = vunpack.c.l.b16 %v836
    %v869 = vunpack.c.l.b16 %v837
    %v870 = vpack.c.b16 %v855, %v854
    %v871 = vpack.c.b16 %v857, %v856
    %v872 = vpack.c.b16 %v859, %v858
    %v873 = vpack.c.b16 %v861, %v860
    %v874 = vpack.c.b16 %v863, %v862
    %v875 = vpack.c.b16 %v865, %v864
    %v876 = vpack.c.b16 %v867, %v866
    %v877 = vpack.c.b16 %v869, %v868
    %886 = vmatprep.subr.bf16.mxu0 0
    %887 = vmatpush1.bf16.msra.mxu0 %v870
    %888 = vmatprep.subr.bf16.mxu0 0
    %889 = vmatpush1.bf16.msra.mxu0 %v871
    %890 = vmatprep.subr.bf16.mxu0 0
    %891 = vmatpush1.bf16.msra.mxu0 %v872
    %892 = vmatprep.subr.bf16.mxu0 0
    %893 = vmatpush1.bf16.msra.mxu0 %v873
    %894 = vmatprep.subr.bf16.mxu0 0
    %895 = vmatpush1.bf16.msra.mxu0 %v874
    %896 = vmatprep.subr.bf16.mxu0 0
    %897 = vmatpush1.bf16.msra.mxu0 %v875
    %898 = vmatprep.subr.bf16.mxu0 0
    %899 = vmatpush1.bf16.msra.mxu0 %v876
    %900 = vmatprep.subr.bf16.mxu0 0
    %901 = vmatpush1.bf16.msra.mxu0 %v877
    %902 = vmatprep.subr.bf16.mxu0 0
    %903 = vmatpush1.bf16.msra.mxu0 0
    %904 = vmatprep.subr.bf16.mxu0 0
    %905 = vmatpush1.bf16.msra.mxu0 0
    %906 = vmatprep.subr.bf16.mxu0 0
    %907 = vmatpush1.bf16.msra.mxu0 0
    %908 = vmatprep.subr.bf16.mxu0 0
    %909 = vmatpush1.bf16.msra.mxu0 0
    %910 = vmatprep.subr.bf16.mxu0 0
    %911 = vmatpush1.bf16.msra.mxu0 0
    %912 = vmatprep.subr.bf16.mxu0 0
    %913 = vmatpush1.bf16.msra.mxu0 0
    %914 = vmatprep.subr.bf16.mxu0 0
    %915 = vmatpush1.bf16.msra.mxu0 0
    %916 = vmatprep.subr.bf16.mxu0 0
    %917 = vmatpush1.bf16.msra.mxu0 0
    %918 = vmatprep.mubr.bf16.mxu0 0
    %919 = vmatmul.mubr.bf16.gmra.mrb[0].mxu0 %v806
    %v920 = vpop.f32.mrb[0].mxu0
    %v921 = vadd.f32 0.0, %v920
    %v922 = vpop.f32.mrb[0].mxu0
    %v923 = vpop.f32.mrb[0].mxu0
    %v924 = vadd.f32 0.0, %v923
    %v925 = vpop.f32.mrb[0].mxu0
    %926 = vmatprep.mubr.bf16.mxu0 0
    %927 = vmatmul.mubr.bf16.gmra.mrb[0].mxu0 %v807
    %v928 = vpop.f32.mrb[0].mxu0
    %v929 = vadd.f32 0.0, %v928
    %v930 = vpop.f32.mrb[0].mxu0
    %v931 = vpop.f32.mrb[0].mxu0
    %v932 = vadd.f32 0.0, %v931
    %v933 = vpop.f32.mrb[0].mxu0
    %934 = vmatprep.mubr.bf16.mxu0 0
    %935 = vmatmul.mubr.bf16.gmra.mrb[0].mxu0 %v808
    %v936 = vpop.f32.mrb[0].mxu0
    %v937 = vadd.f32 0.0, %v936
    %v938 = vpop.f32.mrb[0].mxu0
    %v939 = vpop.f32.mrb[0].mxu0
    %v940 = vadd.f32 0.0, %v939
    %v941 = vpop.f32.mrb[0].mxu0
    %942 = vmatprep.mubr.bf16.mxu0 0
    %943 = vmatmul.mubr.bf16.gmra.mrb[0].mxu0 %v809
    %v944 = vpop.f32.mrb[0].mxu0
    %v945 = vadd.f32 0.0, %v944
    %v946 = vpop.f32.mrb[0].mxu0
    %v947 = vpop.f32.mrb[0].mxu0
    %v948 = vadd.f32 0.0, %v947
    %v949 = vpop.f32.mrb[0].mxu0
    %950 = vmatprep.mubr.bf16.mxu0 0
    %951 = vmatmul.mubr.bf16.gmra.mrb[0].mxu0 %v810
    %v952 = vpop.f32.mrb[0].mxu0
    %v953 = vadd.f32 0.0, %v952
    %v954 = vpop.f32.mrb[0].mxu0
    %v955 = vpop.f32.mrb[0].mxu0
    %v956 = vadd.f32 0.0, %v955
    %v957 = vpop.f32.mrb[0].mxu0
    %958 = vmatprep.mubr.bf16.mxu0 0
    %959 = vmatmul.mubr.bf16.gmra.mrb[0].mxu0 %v811
    %v960 = vpop.f32.mrb[0].mxu0
    %v961 = vadd.f32 0.0, %v960
    %v962 = vpop.f32.mrb[0].mxu0
    %v963 = vpop.f32.mrb[0].mxu0
    %v964 = vadd.f32 0.0, %v963
    %v965 = vpop.f32.mrb[0].mxu0
    %966 = vmatprep.mubr.bf16.mxu0 0
    %967 = vmatmul.mubr.bf16.gmra.mrb[0].mxu0 %v812
    %v968 = vpop.f32.mrb[0].mxu0
    %v969 = vadd.f32 0.0, %v968
    %v970 = vpop.f32.mrb[0].mxu0
    %v971 = vpop.f32.mrb[0].mxu0
    %v972 = vadd.f32 0.0, %v971
    %v973 = vpop.f32.mrb[0].mxu0
    %974 = vmatprep.mubr.bf16.mxu0 0
    %975 = vmatmul.mubr.bf16.gmra.mrb[0].mxu0 %v813
    %v976 = vpop.f32.mrb[0].mxu0
    %v977 = vadd.f32 0.0, %v976
    %v978 = vpop.f32.mrb[0].mxu0
    %v979 = vpop.f32.mrb[0].mxu0
    %v980 = vadd.f32 0.0, %v979
    %v981 = vpop.f32.mrb[0].mxu0
    %982 = vmatprep.mubr.bf16.mxu0 0
    %983 = vmatmul.mubr.bf16.gmra.mrb[0].mxu0 %v814
    %v984 = vpop.f32.mrb[0].mxu0
    %v985 = vadd.f32 0.0, %v984
    %v986 = vpop.f32.mrb[0].mxu0
    %v987 = vpop.f32.mrb[0].mxu0
    %v988 = vadd.f32 0.0, %v987
    %v989 = vpop.f32.mrb[0].mxu0
    %990 = vmatprep.mubr.bf16.mxu0 0
    %991 = vmatmul.mubr.bf16.gmra.mrb[0].mxu0 %v815
    %v992 = vpop.f32.mrb[0].mxu0
    %v993 = vadd.f32 0.0, %v992
    %v994 = vpop.f32.mrb[0].mxu0
    %v995 = vpop.f32.mrb[0].mxu0
    %v996 = vadd.f32 0.0, %v995
    %v997 = vpop.f32.mrb[0].mxu0
    %998 = vmatprep.mubr.bf16.mxu0 0
    %999 = vmatmul.mubr.bf16.gmra.mrb[0].mxu0 %v816
    %v1000 = vpop.f32.mrb[0].mxu0
    %v1001 = vadd.f32 0.0, %v1000
    %v1002 = vpop.f32.mrb[0].mxu0
    %v1003 = vpop.f32.mrb[0].mxu0
    %v1004 = vadd.f32 0.0, %v1003
    %v1005 = vpop.f32.mrb[0].mxu0
    %1006 = vmatprep.mubr.bf16.mxu0 0
    %1007 = vmatmul.mubr.bf16.gmra.mrb[0].mxu0 %v817
    %v1008 = vpop.f32.mrb[0].mxu0
    %v1009 = vadd.f32 0.0, %v1008
    %v1010 = vpop.f32.mrb[0].mxu0
    %v1011 = vpop.f32.mrb[0].mxu0
    %v1012 = vadd.f32 0.0, %v1011
    %v1013 = vpop.f32.mrb[0].mxu0
    %1014 = vmatprep.mubr.bf16.mxu0 0
    %1015 = vmatmul.mubr.bf16.gmra.mrb[0].mxu0 %v818
    %v1016 = vpop.f32.mrb[0].mxu0
    %v1017 = vadd.f32 0.0, %v1016
    %v1018 = vpop.f32.mrb[0].mxu0
    %v1019 = vpop.f32.mrb[0].mxu0
    %v1020 = vadd.f32 0.0, %v1019
    %v1021 = vpop.f32.mrb[0].mxu0
    %1022 = vmatprep.mubr.bf16.mxu0 0
    %1023 = vmatmul.mubr.bf16.gmra.mrb[0].mxu0 %v819
    %v1024 = vpop.f32.mrb[0].mxu0
    %v1025 = vadd.f32 0.0, %v1024
    %v1026 = vpop.f32.mrb[0].mxu0
    %v1027 = vpop.f32.mrb[0].mxu0
    %v1028 = vadd.f32 0.0, %v1027
    %v1029 = vpop.f32.mrb[0].mxu0
    %1030 = vmatprep.mubr.bf16.mxu0 0
    %1031 = vmatmul.mubr.bf16.gmra.mrb[0].mxu0 %v820
    %v1032 = vpop.f32.mrb[0].mxu0
    %v1033 = vadd.f32 0.0, %v1032
    %v1034 = vpop.f32.mrb[0].mxu0
    %v1035 = vpop.f32.mrb[0].mxu0
    %v1036 = vadd.f32 0.0, %v1035
    %v1037 = vpop.f32.mrb[0].mxu0
    %1038 = vmatprep.mubr.bf16.mxu0 0
    %1039 = vmatmul.mubr.bf16.gmra.mrb[0].mxu0 %v821
    %v1040 = vpop.f32.mrb[0].mxu0
    %v1041 = vadd.f32 0.0, %v1040
    %v1042 = vpop.f32.mrb[0].mxu0
    %v1043 = vpop.f32.mrb[0].mxu0
    %v1044 = vadd.f32 0.0, %v1043
    %v1045 = vpop.f32.mrb[0].mxu0
    %1046 = vdwg.mxu0
    %v1047 = vpack.c.bf16 %v924, %v921
    %v1048 = vpack.c.bf16 %v932, %v929
    %v1049 = vpack.c.bf16 %v940, %v937
    %v1050 = vpack.c.bf16 %v948, %v945
    %v1051 = vpack.c.bf16 %v956, %v953
    %v1052 = vpack.c.bf16 %v964, %v961
    %v1053 = vpack.c.bf16 %v972, %v969
    %v1054 = vpack.c.bf16 %v980, %v977
    %v1055 = vpack.c.bf16 %v988, %v985
    %v1056 = vpack.c.bf16 %v996, %v993
    %v1057 = vpack.c.bf16 %v1004, %v1001
    %v1058 = vpack.c.bf16 %v1012, %v1009
    %v1059 = vpack.c.bf16 %v1020, %v1017
    %v1060 = vpack.c.bf16 %v1028, %v1025
    %v1061 = vpack.c.bf16 %v1036, %v1033
    %v1062 = vpack.c.bf16 %v1044, %v1041
    %v1079 = vunpack.c.l.b16 %v1047
    %v1080 = vunpack.c.h.b16 %v1047
    %v1081 = vunpack.c.l.b16 %v1048
    %v1082 = vunpack.c.h.b16 %v1048
    %v1083 = vunpack.c.l.b16 %v1049
    %v1084 = vunpack.c.h.b16 %v1049
    %v1085 = vunpack.c.l.b16 %v1050
    %v1086 = vunpack.c.h.b16 %v1050
    %v1087 = vunpack.c.l.b16 %v1051
    %v1088 = vunpack.c.h.b16 %v1051
    %v1089 = vunpack.c.l.b16 %v1052
    %v1090 = vunpack.c.h.b16 %v1052
    %v1091 = vunpack.c.l.b16 %v1053
    %v1092 = vunpack.c.h.b16 %v1053
    %v1093 = vunpack.c.l.b16 %v1054
    %v1094 = vunpack.c.h.b16 %v1054
    %v1095 = vunpack.c.l.b16 %v1055
    %v1096 = vunpack.c.h.b16 %v1055
    %v1097 = vunpack.c.l.b16 %v1056
    %v1098 = vunpack.c.h.b16 %v1056
    %v1099 = vunpack.c.l.b16 %v1057
    %v1100 = vunpack.c.h.b16 %v1057
    %v1101 = vunpack.c.l.b16 %v1058
    %v1102 = vunpack.c.h.b16 %v1058
    %v1103 = vunpack.c.l.b16 %v1059
    %v1104 = vunpack.c.h.b16 %v1059
    %v1105 = vunpack.c.l.b16 %v1060
    %v1106 = vunpack.c.h.b16 %v1060
    %v1107 = vunpack.c.l.b16 %v1061
    %v1108 = vunpack.c.h.b16 %v1061
    %v1109 = vunpack.c.l.b16 %v1062
    %v1110 = vunpack.c.h.b16 %v1062
    %v1111 = vpack.c.b16 %v1079, %v1079
    %v1112 = vpack.c.b16 %v1080, %v1080
    %v1113 = vpack.c.b16 %v1081, %v1081
    %v1114 = vpack.c.b16 %v1082, %v1082
    %v1115 = vpack.c.b16 %v1083, %v1083
    %v1116 = vpack.c.b16 %v1084, %v1084
    %v1117 = vpack.c.b16 %v1085, %v1085
    %v1118 = vpack.c.b16 %v1086, %v1086
    %v1119 = vpack.c.b16 %v1087, %v1087
    %v1120 = vpack.c.b16 %v1088, %v1088
    %v1121 = vpack.c.b16 %v1089, %v1089
    %v1122 = vpack.c.b16 %v1090, %v1090
    %v1123 = vpack.c.b16 %v1091, %v1091
    %v1124 = vpack.c.b16 %v1092, %v1092
    %v1125 = vpack.c.b16 %v1093, %v1093
    %v1126 = vpack.c.b16 %v1094, %v1094
    %v1127 = vpack.c.b16 %v1095, %v1095
    %v1128 = vpack.c.b16 %v1096, %v1096
    %v1129 = vpack.c.b16 %v1097, %v1097
    %v1130 = vpack.c.b16 %v1098, %v1098
    %v1131 = vpack.c.b16 %v1099, %v1099
    %v1132 = vpack.c.b16 %v1100, %v1100
    %v1133 = vpack.c.b16 %v1101, %v1101
    %v1134 = vpack.c.b16 %v1102, %v1102
    %v1135 = vpack.c.b16 %v1103, %v1103
    %v1136 = vpack.c.b16 %v1104, %v1104
    %v1137 = vpack.c.b16 %v1105, %v1105
    %v1138 = vpack.c.b16 %v1106, %v1106
    %v1139 = vpack.c.b16 %v1107, %v1107
    %v1140 = vpack.c.b16 %v1108, %v1108
    %v1141 = vpack.c.b16 %v1109, %v1109
    %v1142 = vpack.c.b16 %v1110, %v1110
    %1175 = vst [vmem:[%s4] sm:$0xf] %v1111
    %1176 = vst [vmem:[%s4 + $0x4] sm:$0xf] %v1112
    %1177 = vst [vmem:[%s4 + $0x8] sm:$0xf] %v1113
    %1178 = vst [vmem:[%s4 + $0xc] sm:$0xf] %v1114
    %1179 = vst [vmem:[%s4 + $0x10] sm:$0xf] %v1115
    %1180 = vst [vmem:[%s4 + $0x14] sm:$0xf] %v1116
    %1181 = vst [vmem:[%s4 + $0x18] sm:$0xf] %v1117
    %1182 = vst [vmem:[%s4 + $0x1c] sm:$0xf] %v1118
    %1183 = vst [vmem:[%s4 + $0x20] sm:$0xf] %v1119
    %1184 = vst [vmem:[%s4 + $0x24] sm:$0xf] %v1120
    %1185 = vst [vmem:[%s4 + $0x28] sm:$0xf] %v1121
    %1186 = vst [vmem:[%s4 + $0x2c] sm:$0xf] %v1122
    %1187 = vst [vmem:[%s4 + $0x30] sm:$0xf] %v1123
    %1188 = vst [vmem:[%s4 + $0x34] sm:$0xf] %v1124
    %1189 = vst [vmem:[%s4 + $0x38] sm:$0xf] %v1125
    %1190 = vst [vmem:[%s4 + $0x3c] sm:$0xf] %v1126
    %1191 = vst [vmem:[%s4 + $0x40] sm:$0xf] %v1127
    %1192 = vst [vmem:[%s4 + $0x44] sm:$0xf] %v1128
    %1193 = vst [vmem:[%s4 + $0x48] sm:$0xf] %v1129
    %1194 = vst [vmem:[%s4 + $0x4c] sm:$0xf] %v1130
    %1195 = vst [vmem:[%s4 + $0x50] sm:$0xf] %v1131
    %1196 = vst [vmem:[%s4 + $0x54] sm:$0xf] %v1132
    %1197 = vst [vmem:[%s4 + $0x58] sm:$0xf] %v1133
    %1198 = vst [vmem:[%s4 + $0x5c] sm:$0xf] %v1134
    %1199 = vst [vmem:[%s4 + $0x60] sm:$0xf] %v1135
    %1200 = vst [vmem:[%s4 + $0x64] sm:$0xf] %v1136
    %1201 = vst [vmem:[%s4 + $0x68] sm:$0xf] %v1137
    %1202 = vst [vmem:[%s4 + $0x6c] sm:$0xf] %v1138
    %1203 = vst [vmem:[%s4 + $0x70] sm:$0xf] %v1139
    %1204 = vst [vmem:[%s4 + $0x74] sm:$0xf] %v1140
    %1205 = vst [vmem:[%s4 + $0x78] sm:$0xf] %v1141
    %1206 = vst [vmem:[%s4 + $0x7c] sm:$0xf] %v1142
  $region25: #{dual_encoder_forward.6} parent=0 // pred_fallthru
    _
  // Predicated region
  $region26: #{dual_encoder_forward.6} parent=0 // pred_check
    _
  $region27: #{dual_encoder_forward.6} parent=0 // pred_check_branch
    %1208 = sbr.rel (0) target = $region29
  $region28: #{dual_encoder_forward.6} parent=0 // pred_region
    _
  $region29: #{dual_encoder_forward.6} parent=0 // pred_fallthru
    _
  // Predicated region
  $region30: #{dual_encoder_forward.6} parent=0 // pred_check
    _
  $region31: #{dual_encoder_forward.6} parent=0 // pred_check_branch
    %1210 = sbr.rel (0) target = $region33
  $region32: #{dual_encoder_forward.6} parent=0 // pred_region
    _
  $region33: #{dual_encoder_forward.6} parent=0 // pred_fallthru
    _

// kernel: dual_encoder_forward.8
$region0: #{dual_encoder_forward.8}
  #allocation0 [shape = 'u32[]', space=smem, size = 0x4, offset = 0x4, fixed_abs, tag = 'smem constant byte address 0x4 - core index']
  #allocation1 [shape = 'u32[144,128]{1,0:T(1,128)}', space=vmem, size = 0x12000, scoped, tag = 'internal scratch']
  %s0 = inlined_call_operand.vmem [shape: f32[2], index: 0, kind: input, shape index: {}]
  %s1 = inlined_call_operand.vmem [shape: bf16[256,128], index: 1, kind: input, shape index: {}]
  %s2 = inlined_call_operand.vmem [shape: bf16[128,128], index: 2, kind: input, shape index: {}]
  %s3 = inlined_call_operand.vmem [shape: f32[1,128], index: 3, kind: input, shape index: {}]
  %s4 = inlined_call_operand.vmem [shape: bf16[128,128], index: 4, kind: input, shape index: {}]
  %s5 = inlined_call_operand.vmem [shape: f32[1,128], index: 5, kind: input, shape index: {}]
  %s6 = inlined_call_operand.vmem [shape: bf16[256,128], index: 6, kind: output, shape index: {}]
  %s7 = sld [smem:[#allocation0]]
  $region38: #{dual_encoder_forward.8} parent=0
    _
  %s9 = ssub.s32 1, %s7
  %s10 = scalar_select 0, %s9, %s7
  $region1: #{dual_encoder_forward.8} parent=0
    #allocation2 [shape = 'u8[512]{0}', space=smem, size = 0x200, scoped, tag = 'input window, operand 0, single buffered']
    #allocation3 [shape = 's32[1]{0}', space=sflag, size = 0x4, scoped, tag = 'scoped memory for dual_encoder_forward.8']
    %11 = vsyncpa [#allocation3], 0
    // Predicated region
    $region2: #{dual_encoder_forward.8} parent=1 // pred_check
      _
    $region3: #{dual_encoder_forward.8} parent=1 // pred_check_branch
      %13 = sbr.rel (0) target = $region5
    $region4: #{dual_encoder_forward.8} parent=1 // pred_region
      %s15 = ssub.s32 16, 16
      %16 = vsyncadd [#allocation3], %s15
      %s18 = sshll.u32 %s0, 4
      %s19 = int_to_ptr.vmem [resolvable:$true] %s18
      %21 = dma.vmem_to_smem %s19, 16, [#allocation2], [#allocation3]
    $region5: #{dual_encoder_forward.8} parent=1 // pred_fallthru
      _
    // Predicated region
    $region6: #{dual_encoder_forward.8} parent=1 // pred_check
      _
    $region7: #{dual_encoder_forward.8} parent=1 // pred_check_branch
      %23 = sbr.rel (0) target = $region9
    $region8: #{dual_encoder_forward.8} parent=1 // pred_region
      _
    $region9: #{dual_encoder_forward.8} parent=1 // pred_fallthru
      _
    // Predicated region
    $region10: #{dual_encoder_forward.8} parent=1 // pred_check
      _
    $region11: #{dual_encoder_forward.8} parent=1 // pred_check_branch
      %25 = sbr.rel (0) target = $region13
    $region12: #{dual_encoder_forward.8} parent=1 // pred_region
      _
    $region13: #{dual_encoder_forward.8} parent=1 // pred_fallthru
      _
    // Predicated region
    $region14: #{dual_encoder_forward.8} parent=1 // pred_check
      _
    $region15: #{dual_encoder_forward.8} parent=1 // pred_check_branch
      %27 = sbr.rel (0) target = $region17
    $region16: #{dual_encoder_forward.8} parent=1 // pred_region
      _
    $region17: #{dual_encoder_forward.8} parent=1 // pred_fallthru
      _
    // Predicated region
    $region18: #{dual_encoder_forward.8} parent=1 // pred_check
      _
    $region19: #{dual_encoder_forward.8} parent=1 // pred_check_branch
      %29 = sbr.rel (0) target = $region21
    $region20: #{dual_encoder_forward.8} parent=1 // pred_region
      _
    $region21: #{dual_encoder_forward.8} parent=1 // pred_fallthru
      _
    // Predicated region
    $region22: #{dual_encoder_forward.8} parent=1 // pred_check
      _
    $region23: #{dual_encoder_forward.8} parent=1 // pred_check_branch
      %31 = sbr.rel (0) target = $region25
    $region24: #{dual_encoder_forward.8} parent=1 // pred_region
      _
    $region25: #{dual_encoder_forward.8} parent=1 // pred_fallthru
      _
    // Predicated region
    $region26: #{dual_encoder_forward.8} parent=1 // pred_check
      _
    $region27: #{dual_encoder_forward.8} parent=1 // pred_check_branch
      %33 = sbr.rel (0) target = $region29
    $region28: #{dual_encoder_forward.8} parent=1 // pred_region
      %34 = dma.done [#allocation3], 16
    $region29: #{dual_encoder_forward.8} parent=1 // pred_fallthru
      _
    %35 = sfence
    %v37 = vld [vmem:[%s1] sm:$0xf]
    %v38 = vld [vmem:[%s1 + $0x4] sm:$0xf]
    %v39 = vld [vmem:[%s1 + $0x8] sm:$0xf]
    %v40 = vld [vmem:[%s1 + $0xc] sm:$0xf]
    %v41 = vld [vmem:[%s1 + $0x10] sm:$0xf]
    %v42 = vld [vmem:[%s1 + $0x14] sm:$0xf]
    %v43 = vld [vmem:[%s1 + $0x18] sm:$0xf]
    %v44 = vld [vmem:[%s1 + $0x1c] sm:$0xf]
    %v45 = vld [vmem:[%s1 + $0x20] sm:$0xf]
    %v46 = vld [vmem:[%s1 + $0x24] sm:$0xf]
    %v47 = vld [vmem:[%s1 + $0x28] sm:$0xf]
    %v48 = vld [vmem:[%s1 + $0x2c] sm:$0xf]
    %v49 = vld [vmem:[%s1 + $0x30] sm:$0xf]
    %v50 = vld [vmem:[%s1 + $0x34] sm:$0xf]
    %v51 = vld [vmem:[%s1 + $0x38] sm:$0xf]
    %v52 = vld [vmem:[%s1 + $0x3c] sm:$0xf]
    %v53 = vld [vmem:[%s1 + $0x40] sm:$0xf]
    %v54 = vld [vmem:[%s1 + $0x44] sm:$0xf]
    %v55 = vld [vmem:[%s1 + $0x48] sm:$0xf]
    %v56 = vld [vmem:[%s1 + $0x4c] sm:$0xf]
    %v57 = vld [vmem:[%s1 + $0x50] sm:$0xf]
    %v58 = vld [vmem:[%s1 + $0x54] sm:$0xf]
    %v59 = vld [vmem:[%s1 + $0x58] sm:$0xf]
    %v60 = vld [vmem:[%s1 + $0x5c] sm:$0xf]
    %v61 = vld [vmem:[%s1 + $0x60] sm:$0xf]
    %v62 = vld [vmem:[%s1 + $0x64] sm:$0xf]
    %v63 = vld [vmem:[%s1 + $0x68] sm:$0xf]
    %v64 = vld [vmem:[%s1 + $0x6c] sm:$0xf]
    %v65 = vld [vmem:[%s1 + $0x70] sm:$0xf]
    %v66 = vld [vmem:[%s1 + $0x74] sm:$0xf]
    %v67 = vld [vmem:[%s1 + $0x78] sm:$0xf]
    %v68 = vld [vmem:[%s1 + $0x7c] sm:$0xf]
    %v69 = vld [vmem:[%s2] sm:$0xf]
    %v70 = vld [vmem:[%s2 + $0x4] sm:$0xf]
    %v71 = vld [vmem:[%s2 + $0x8] sm:$0xf]
    %v72 = vld [vmem:[%s2 + $0xc] sm:$0xf]
    %v73 = vld [vmem:[%s2 + $0x10] sm:$0xf]
    %v74 = vld [vmem:[%s2 + $0x14] sm:$0xf]
    %v75 = vld [vmem:[%s2 + $0x18] sm:$0xf]
    %v76 = vld [vmem:[%s2 + $0x1c] sm:$0xf]
    %v77 = vld [vmem:[%s2 + $0x20] sm:$0xf]
    %v78 = vld [vmem:[%s2 + $0x24] sm:$0xf]
    %v79 = vld [vmem:[%s2 + $0x28] sm:$0xf]
    %v80 = vld [vmem:[%s2 + $0x2c] sm:$0xf]
    %v81 = vld [vmem:[%s2 + $0x30] sm:$0xf]
    %v82 = vld [vmem:[%s2 + $0x34] sm:$0xf]
    %v83 = vld [vmem:[%s2 + $0x38] sm:$0xf]
    %v84 = vld [vmem:[%s2 + $0x3c] sm:$0xf]
    %v85 = vld [vmem:[%s3] sm:$0x1]
    %v87 = vlaneseq
    %v88 = vshrl.u32 %v87, 7
    %v89 = vsub.s32 0, %v88
    %v90 = vrot.slane %v85, %v89
    %v124 = vunpack.c.l.b16 %v37
    %v125 = vunpack.c.l.b16 %v38
    %v126 = vunpack.c.l.b16 %v39
    %v127 = vunpack.c.l.b16 %v40
    %v128 = vunpack.c.l.b16 %v41
    %v129 = vunpack.c.l.b16 %v42
    %v130 = vunpack.c.l.b16 %v43
    %v131 = vunpack.c.l.b16 %v44
    %v132 = vunpack.c.l.b16 %v45
    %v133 = vunpack.c.l.b16 %v46
    %v134 = vunpack.c.l.b16 %v47
    %v135 = vunpack.c.l.b16 %v48
    %v136 = vunpack.c.l.b16 %v49
    %v137 = vunpack.c.l.b16 %v50
    %v138 = vunpack.c.l.b16 %v51
    %v139 = vunpack.c.l.b16 %v52
    %v140 = vunpack.c.l.b16 %v53
    %v141 = vunpack.c.l.b16 %v54
    %v142 = vunpack.c.l.b16 %v55
    %v143 = vunpack.c.l.b16 %v56
    %v144 = vunpack.c.l.b16 %v57
    %v145 = vunpack.c.l.b16 %v58
    %v146 = vunpack.c.l.b16 %v59
    %v147 = vunpack.c.l.b16 %v60
    %v148 = vunpack.c.l.b16 %v61
    %v149 = vunpack.c.l.b16 %v62
    %v150 = vunpack.c.l.b16 %v63
    %v151 = vunpack.c.l.b16 %v64
    %v152 = vunpack.c.l.b16 %v65
    %v153 = vunpack.c.l.b16 %v66
    %v154 = vunpack.c.l.b16 %v67
    %v155 = vunpack.c.l.b16 %v68
    %v156 = vpack.c.b16 %v125, %v124
    %v157 = vpack.c.b16 %v127, %v126
    %v158 = vpack.c.b16 %v129, %v128
    %v159 = vpack.c.b16 %v131, %v130
    %v160 = vpack.c.b16 %v133, %v132
    %v161 = vpack.c.b16 %v135, %v134
    %v162 = vpack.c.b16 %v137, %v136
    %v163 = vpack.c.b16 %v139, %v138
    %v164 = vpack.c.b16 %v141, %v140
    %v165 = vpack.c.b16 %v143, %v142
    %v166 = vpack.c.b16 %v145, %v144
    %v167 = vpack.c.b16 %v147, %v146
    %v168 = vpack.c.b16 %v149, %v148
    %v169 = vpack.c.b16 %v151, %v150
    %v170 = vpack.c.b16 %v153, %v152
    %v171 = vpack.c.b16 %v155, %v154
    %v204 = vunpack.c.l.b16 %v69
    %v205 = vunpack.c.l.b16 %v70
    %v206 = vunpack.c.l.b16 %v71
    %v207 = vunpack.c.l.b16 %v72
    %v208 = vunpack.c.l.b16 %v73
    %v209 = vunpack.c.l.b16 %v74
    %v210 = vunpack.c.l.b16 %v75
    %v211 = vunpack.c.l.b16 %v76
    %v212 = vunpack.c.l.b16 %v77
    %v213 = vunpack.c.l.b16 %v78
    %v214 = vunpack.c.l.b16 %v79
    %v215 = vunpack.c.l.b16 %v80
    %v216 = vunpack.c.l.b16 %v81
    %v217 = vunpack.c.l.b16 %v82
    %v218 = vunpack.c.l.b16 %v83
    %v219 = vunpack.c.l.b16 %v84
    %v220 = vpack.c.b16 %v205, %v204
    %v221 = vpack.c.b16 %v207, %v206
    %v222 = vpack.c.b16 %v209, %v208
    %v223 = vpack.c.b16 %v211, %v210
    %v224 = vpack.c.b16 %v213, %v212
    %v225 = vpack.c.b16 %v215, %v214
    %v226 = vpack.c.b16 %v217, %v216
    %v227 = vpack.c.b16 %v219, %v218
    %236 = vmatprep.subr.bf16.mxu0 0
    %237 = vmatpush1.bf16.msra.mxu0 %v220
    %238 = vmatprep.subr.bf16.mxu0 0
    %239 = vmatpush1.bf16.msra.mxu0 %v221
    %240 = vmatprep.subr.bf16.mxu0 0
    %241 = vmatpush1.bf16.msra.mxu0 %v222
    %242 = vmatprep.subr.bf16.mxu0 0
    %243 = vmatpush1.bf16.msra.mxu0 %v223
    %244 = vmatprep.subr.bf16.mxu0 0
    %245 = vmatpush1.bf16.msra.mxu0 %v224
    %246 = vmatprep.subr.bf16.mxu0 0
    %247 = vmatpush1.bf16.msra.mxu0 %v225
    %248 = vmatprep.subr.bf16.mxu0 0
    %249 = vmatpush1.bf16.msra.mxu0 %v226
    %250 = vmatprep.subr.bf16.mxu0 0
    %251 = vmatpush1.bf16.msra.mxu0 %v227
    %252 = vmatprep.subr.bf16.mxu0 0
    %253 = vmatpush1.bf16.msra.mxu0 0
    %254 = vmatprep.subr.bf16.mxu0 0
    %255 = vmatpush1.bf16.msra.mxu0 0
    %256 = vmatprep.subr.bf16.mxu0 0
    %257 = vmatpush1.bf16.msra.mxu0 0
    %258 = vmatprep.subr.bf16.mxu0 0
    %259 = vmatpush1.bf16.msra.mxu0 0
    %260 = vmatprep.subr.bf16.mxu0 0
    %261 = vmatpush1.bf16.msra.mxu0 0
    %262 = vmatprep.subr.bf16.mxu0 0
    %263 = vmatpush1.bf16.msra.mxu0 0
    %264 = vmatprep.subr.bf16.mxu0 0
    %265 = vmatpush1.bf16.msra.mxu0 0
    %266 = vmatprep.subr.bf16.mxu0 0
    %267 = vmatpush1.bf16.msra.mxu0 0
    %268 = vmatprep.mubr.bf16.mxu0 0
    %269 = vmatmul.mubr.bf16.gmra.mrb[0].mxu0 %v156
    %v270 = vpop.f32.mrb[0].mxu0
    %v271 = vadd.f32 %v90, %v270
    %v272 = vpop.f32.mrb[0].mxu0
    %v273 = vpop.f32.mrb[0].mxu0
    %v274 = vadd.f32 %v90, %v273
    %v275 = vpop.f32.mrb[0].mxu0
    %276 = vmatprep.mubr.bf16.mxu0 0
    %277 = vmatmul.mubr.bf16.gmra.mrb[0].mxu0 %v157
    %v278 = vpop.f32.mrb[0].mxu0
    %v279 = vadd.f32 %v90, %v278
    %v280 = vpop.f32.mrb[0].mxu0
    %v281 = vpop.f32.mrb[0].mxu0
    %v282 = vadd.f32 %v90, %v281
    %v283 = vpop.f32.mrb[0].mxu0
    %284 = vmatprep.mubr.bf16.mxu0 0
    %285 = vmatmul.mubr.bf16.gmra.mrb[0].mxu0 %v158
    %v286 = vpop.f32.mrb[0].mxu0
    %v287 = vadd.f32 %v90, %v286
    %v288 = vpop.f32.mrb[0].mxu0
    %v289 = vpop.f32.mrb[0].mxu0
    %v290 = vadd.f32 %v90, %v289
    %v291 = vpop.f32.mrb[0].mxu0
    %292 = vmatprep.mubr.bf16.mxu0 0
    %293 = vmatmul.mubr.bf16.gmra.mrb[0].mxu0 %v159
    %v294 = vpop.f32.mrb[0].mxu0
    %v295 = vadd.f32 %v90, %v294
    %v296 = vpop.f32.mrb[0].mxu0
    %v297 = vpop.f32.mrb[0].mxu0
    %v298 = vadd.f32 %v90, %v297
    %v299 = vpop.f32.mrb[0].mxu0
    %300 = vmatprep.mubr.bf16.mxu0 0
    %301 = vmatmul.mubr.bf16.gmra.mrb[0].mxu0 %v160
    %v302 = vpop.f32.mrb[0].mxu0
    %v303 = vadd.f32 %v90, %v302
    %v304 = vpop.f32.mrb[0].mxu0
    %v305 = vpop.f32.mrb[0].mxu0
    %v306 = vadd.f32 %v90, %v305
    %v307 = vpop.f32.mrb[0].mxu0
    %308 = vmatprep.mubr.bf16.mxu0 0
    %309 = vmatmul.mubr.bf16.gmra.mrb[0].mxu0 %v161
    %v310 = vpop.f32.mrb[0].mxu0
    %v311 = vadd.f32 %v90, %v310
    %v312 = vpop.f32.mrb[0].mxu0
    %v313 = vpop.f32.mrb[0].mxu0
    %v314 = vadd.f32 %v90, %v313
    %v315 = vpop.f32.mrb[0].mxu0
    %316 = vmatprep.mubr.bf16.mxu0 0
    %317 = vmatmul.mubr.bf16.gmra.mrb[0].mxu0 %v162
    %v318 = vpop.f32.mrb[0].mxu0
    %v319 = vadd.f32 %v90, %v318
    %v320 = vpop.f32.mrb[0].mxu0
    %v321 = vpop.f32.mrb[0].mxu0
    %v322 = vadd.f32 %v90, %v321
    %v323 = vpop.f32.mrb[0].mxu0
    %324 = vmatprep.mubr.bf16.mxu0 0
    %325 = vmatmul.mubr.bf16.gmra.mrb[0].mxu0 %v163
    %v326 = vpop.f32.mrb[0].mxu0
    %v327 = vadd.f32 %v90, %v326
    %v328 = vpop.f32.mrb[0].mxu0
    %v329 = vpop.f32.mrb[0].mxu0
    %v330 = vadd.f32 %v90, %v329
    %v331 = vpop.f32.mrb[0].mxu0
    %332 = vmatprep.mubr.bf16.mxu0 0
    %333 = vmatmul.mubr.bf16.gmra.mrb[0].mxu0 %v164
    %v334 = vpop.f32.mrb[0].mxu0
    %v335 = vadd.f32 %v90, %v334
    %v336 = vpop.f32.mrb[0].mxu0
    %v337 = vpop.f32.mrb[0].mxu0
    %v338 = vadd.f32 %v90, %v337
    %v339 = vpop.f32.mrb[0].mxu0
    %340 = vmatprep.mubr.bf16.mxu0 0
    %341 = vmatmul.mubr.bf16.gmra.mrb[0].mxu0 %v165
    %v342 = vpop.f32.mrb[0].mxu0
    %v343 = vadd.f32 %v90, %v342
    %v344 = vpop.f32.mrb[0].mxu0
    %v345 = vpop.f32.mrb[0].mxu0
    %v346 = vadd.f32 %v90, %v345
    %v347 = vpop.f32.mrb[0].mxu0
    %348 = vmatprep.mubr.bf16.mxu0 0
    %349 = vmatmul.mubr.bf16.gmra.mrb[0].mxu0 %v166
    %v350 = vpop.f32.mrb[0].mxu0
    %v351 = vadd.f32 %v90, %v350
    %v352 = vpop.f32.mrb[0].mxu0
    %v353 = vpop.f32.mrb[0].mxu0
    %v354 = vadd.f32 %v90, %v353
    %v355 = vpop.f32.mrb[0].mxu0
    %356 = vmatprep.mubr.bf16.mxu0 0
    %357 = vmatmul.mubr.bf16.gmra.mrb[0].mxu0 %v167
    %v358 = vpop.f32.mrb[0].mxu0
    %v359 = vadd.f32 %v90, %v358
    %v360 = vpop.f32.mrb[0].mxu0
    %v361 = vpop.f32.mrb[0].mxu0
    %v362 = vadd.f32 %v90, %v361
    %v363 = vpop.f32.mrb[0].mxu0
    %364 = vmatprep.mubr.bf16.mxu0 0
    %365 = vmatmul.mubr.bf16.gmra.mrb[0].mxu0 %v168
    %v366 = vpop.f32.mrb[0].mxu0
    %v367 = vadd.f32 %v90, %v366
    %v368 = vpop.f32.mrb[0].mxu0
    %v369 = vpop.f32.mrb[0].mxu0
    %v370 = vadd.f32 %v90, %v369
    %v371 = vpop.f32.mrb[0].mxu0
    %372 = vmatprep.mubr.bf16.mxu0 0
    %373 = vmatmul.mubr.bf16.gmra.mrb[0].mxu0 %v169
    %v374 = vpop.f32.mrb[0].mxu0
    %v375 = vadd.f32 %v90, %v374
    %v376 = vpop.f32.mrb[0].mxu0
    %v377 = vpop.f32.mrb[0].mxu0
    %v378 = vadd.f32 %v90, %v377
    %v379 = vpop.f32.mrb[0].mxu0
    %380 = vmatprep.mubr.bf16.mxu0 0
    %381 = vmatmul.mubr.bf16.gmra.mrb[0].mxu0 %v170
    %v382 = vpop.f32.mrb[0].mxu0
    %v383 = vadd.f32 %v90, %v382
    %v384 = vpop.f32.mrb[0].mxu0
    %v385 = vpop.f32.mrb[0].mxu0
    %v386 = vadd.f32 %v90, %v385
    %v387 = vpop.f32.mrb[0].mxu0
    %388 = vmatprep.mubr.bf16.mxu0 0
    %389 = vmatmul.mubr.bf16.gmra.mrb[0].mxu0 %v171
    %v390 = vpop.f32.mrb[0].mxu0
    %v391 = vadd.f32 %v90, %v390
    %v392 = vpop.f32.mrb[0].mxu0
    %v393 = vpop.f32.mrb[0].mxu0
    %v394 = vadd.f32 %v90, %v393
    %v395 = vpop.f32.mrb[0].mxu0
    %396 = vdwg.mxu0
    %v397 = vmax.f32 %v271, 0.0
    %v398 = vmax.f32 %v274, 0.0
    %v399 = vmax.f32 %v279, 0.0
    %v400 = vmax.f32 %v282, 0.0
    %v401 = vmax.f32 %v287, 0.0
    %v402 = vmax.f32 %v290, 0.0
    %v403 = vmax.f32 %v295, 0.0
    %v404 = vmax.f32 %v298, 0.0
    %v405 = vmax.f32 %v303, 0.0
    %v406 = vmax.f32 %v306, 0.0
    %v407 = vmax.f32 %v311, 0.0
    %v408 = vmax.f32 %v314, 0.0
    %v409 = vmax.f32 %v319, 0.0
    %v410 = vmax.f32 %v322, 0.0
    %v411 = vmax.f32 %v327, 0.0
    %v412 = vmax.f32 %v330, 0.0
    %v413 = vmax.f32 %v335, 0.0
    %v414 = vmax.f32 %v338, 0.0
    %v415 = vmax.f32 %v343, 0.0
    %v416 = vmax.f32 %v346, 0.0
    %v417 = vmax.f32 %v351, 0.0
    %v418 = vmax.f32 %v354, 0.0
    %v419 = vmax.f32 %v359, 0.0
    %v420 = vmax.f32 %v362, 0.0
    %v421 = vmax.f32 %v367, 0.0
    %v422 = vmax.f32 %v370, 0.0
    %v423 = vmax.f32 %v375, 0.0
    %v424 = vmax.f32 %v378, 0.0
    %v425 = vmax.f32 %v383, 0.0
    %v426 = vmax.f32 %v386, 0.0
    %v427 = vmax.f32 %v391, 0.0
    %v428 = vmax.f32 %v394, 0.0
    %v429 = vpack.c.bf16 %v398, %v397
    %v430 = vpack.c.bf16 %v400, %v399
    %v431 = vpack.c.bf16 %v402, %v401
    %v432 = vpack.c.bf16 %v404, %v403
    %v433 = vpack.c.bf16 %v406, %v405
    %v434 = vpack.c.bf16 %v408, %v407
    %v435 = vpack.c.bf16 %v410, %v409
    %v436 = vpack.c.bf16 %v412, %v411
    %v437 = vpack.c.bf16 %v414, %v413
    %v438 = vpack.c.bf16 %v416, %v415
    %v439 = vpack.c.bf16 %v418, %v417
    %v440 = vpack.c.bf16 %v420, %v419
    %v441 = vpack.c.bf16 %v422, %v421
    %v442 = vpack.c.bf16 %v424, %v423
    %v443 = vpack.c.bf16 %v426, %v425
    %v444 = vpack.c.bf16 %v428, %v427
    %v445 = vld [vmem:[%s4] sm:$0xf]
    %v446 = vld [vmem:[%s4 + $0x4] sm:$0xf]
    %v447 = vld [vmem:[%s4 + $0x8] sm:$0xf]
    %v448 = vld [vmem:[%s4 + $0xc] sm:$0xf]
    %v449 = vld [vmem:[%s4 + $0x10] sm:$0xf]
    %v450 = vld [vmem:[%s4 + $0x14] sm:$0xf]
    %v451 = vld [vmem:[%s4 + $0x18] sm:$0xf]
    %v452 = vld [vmem:[%s4 + $0x1c] sm:$0xf]
    %v453 = vld [vmem:[%s4 + $0x20] sm:$0xf]
    %v454 = vld [vmem:[%s4 + $0x24] sm:$0xf]
    %v455 = vld [vmem:[%s4 + $0x28] sm:$0xf]
    %v456 = vld [vmem:[%s4 + $0x2c] sm:$0xf]
    %v457 = vld [vmem:[%s4 + $0x30] sm:$0xf]
    %v458 = vld [vmem:[%s4 + $0x34] sm:$0xf]
    %v459 = vld [vmem:[%s4 + $0x38] sm:$0xf]
    %v460 = vld [vmem:[%s4 + $0x3c] sm:$0xf]
    %v461 = vld [vmem:[%s5] sm:$0x1]
    %v463 = vlaneseq
    %v464 = vshrl.u32 %v463, 7
    %v465 = vsub.s32 0, %v464
    %v466 = vrot.slane %v461, %v465
    %v484 = vunpack.c.l.b16 %v445
    %v485 = vunpack.c.l.b16 %v446
    %v486 = vunpack.c.l.b16 %v447
    %v487 = vunpack.c.l.b16 %v448
    %v488 = vunpack.c.l.b16 %v449
    %v489 = vunpack.c.l.b16 %v450
    %v490 = vunpack.c.l.b16 %v451
    %v491 = vunpack.c.l.b16 %v452
    %v492 = vunpack.c.l.b16 %v453
    %v493 = vunpack.c.l.b16 %v454
    %v494 = vunpack.c.l.b16 %v455
    %v495 = vunpack.c.l.b16 %v456
    %v496 = vunpack.c.l.b16 %v457
    %v497 = vunpack.c.l.b16 %v458
    %v498 = vunpack.c.l.b16 %v459
    %v499 = vunpack.c.l.b16 %v460
    %v500 = vpack.c.b16 %v485, %v484
    %v501 = vpack.c.b16 %v487, %v486
    %v502 = vpack.c.b16 %v489, %v488
    %v503 = vpack.c.b16 %v491, %v490
    %v504 = vpack.c.b16 %v493, %v492
    %v505 = vpack.c.b16 %v495, %v494
    %v506 = vpack.c.b16 %v497, %v496
    %v507 = vpack.c.b16 %v499, %v498
    %516 = vmatprep.subr.bf16.mxu0 0
    %517 = vmatpush1.bf16.msra.mxu0 %v500
    %518 = vmatprep.subr.bf16.mxu0 0
    %519 = vmatpush1.bf16.msra.mxu0 %v501
    %520 = vmatprep.subr.bf16.mxu0 0
    %521 = vmatpush1.bf16.msra.mxu0 %v502
    %522 = vmatprep.subr.bf16.mxu0 0
    %523 = vmatpush1.bf16.msra.mxu0 %v503
    %524 = vmatprep.subr.bf16.mxu0 0
    %525 = vmatpush1.bf16.msra.mxu0 %v504
    %526 = vmatprep.subr.bf16.mxu0 0
    %527 = vmatpush1.bf16.msra.mxu0 %v505
    %528 = vmatprep.subr.bf16.mxu0 0
    %529 = vmatpush1.bf16.msra.mxu0 %v506
    %530 = vmatprep.subr.bf16.mxu0 0
    %531 = vmatpush1.bf16.msra.mxu0 %v507
    %532 = vmatprep.subr.bf16.mxu0 0
    %533 = vmatpush1.bf16.msra.mxu0 0
    %534 = vmatprep.subr.bf16.mxu0 0
    %535 = vmatpush1.bf16.msra.mxu0 0
    %536 = vmatprep.subr.bf16.mxu0 0
    %537 = vmatpush1.bf16.msra.mxu0 0
    %538 = vmatprep.subr.bf16.mxu0 0
    %539 = vmatpush1.bf16.msra.mxu0 0
    %540 = vmatprep.subr.bf16.mxu0 0
    %541 = vmatpush1.bf16.msra.mxu0 0
    %542 = vmatprep.subr.bf16.mxu0 0
    %543 = vmatpush1.bf16.msra.mxu0 0
    %544 = vmatprep.subr.bf16.mxu0 0
    %545 = vmatpush1.bf16.msra.mxu0 0
    %546 = vmatprep.subr.bf16.mxu0 0
    %547 = vmatpush1.bf16.msra.mxu0 0
    %548 = vmatprep.mubr.bf16.mxu0 0
    %549 = vmatmul.mubr.bf16.gmra.mrb[0].mxu0 %v429
    %v550 = vpop.f32.mrb[0].mxu0
    %v551 = vadd.f32 %v466, %v550
    %v552 = vpop.f32.mrb[0].mxu0
    %v553 = vpop.f32.mrb[0].mxu0
    %v554 = vadd.f32 %v466, %v553
    %v555 = vpop.f32.mrb[0].mxu0
    %556 = vmatprep.mubr.bf16.mxu0 0
    %557 = vmatmul.mubr.bf16.gmra.mrb[0].mxu0 %v430
    %v558 = vpop.f32.mrb[0].mxu0
    %v559 = vadd.f32 %v466, %v558
    %v560 = vpop.f32.mrb[0].mxu0
    %v561 = vpop.f32.mrb[0].mxu0
    %v562 = vadd.f32 %v466, %v561
    %v563 = vpop.f32.mrb[0].mxu0
    %564 = vmatprep.mubr.bf16.mxu0 0
    %565 = vmatmul.mubr.bf16.gmra.mrb[0].mxu0 %v431
    %v566 = vpop.f32.mrb[0].mxu0
    %v567 = vadd.f32 %v466, %v566
    %v568 = vpop.f32.mrb[0].mxu0
    %v569 = vpop.f32.mrb[0].mxu0
    %v570 = vadd.f32 %v466, %v569
    %v571 = vpop.f32.mrb[0].mxu0
    %572 = vmatprep.mubr.bf16.mxu0 0
    %573 = vmatmul.mubr.bf16.gmra.mrb[0].mxu0 %v432
    %v574 = vpop.f32.mrb[0].mxu0
    %v575 = vadd.f32 %v466, %v574
    %v576 = vpop.f32.mrb[0].mxu0
    %v577 = vpop.f32.mrb[0].mxu0
    %v578 = vadd.f32 %v466, %v577
    %v579 = vpop.f32.mrb[0].mxu0
    %580 = vmatprep.mubr.bf16.mxu0 0
    %581 = vmatmul.mubr.bf16.gmra.mrb[0].mxu0 %v433
    %v582 = vpop.f32.mrb[0].mxu0
    %v583 = vadd.f32 %v466, %v582
    %v584 = vpop.f32.mrb[0].mxu0
    %v585 = vpop.f32.mrb[0].mxu0
    %v586 = vadd.f32 %v466, %v585
    %v587 = vpop.f32.mrb[0].mxu0
    %588 = vmatprep.mubr.bf16.mxu0 0
    %589 = vmatmul.mubr.bf16.gmra.mrb[0].mxu0 %v434
    %v590 = vpop.f32.mrb[0].mxu0
    %v591 = vadd.f32 %v466, %v590
    %v592 = vpop.f32.mrb[0].mxu0
    %v593 = vpop.f32.mrb[0].mxu0
    %v594 = vadd.f32 %v466, %v593
    %v595 = vpop.f32.mrb[0].mxu0
    %596 = vmatprep.mubr.bf16.mxu0 0
    %597 = vmatmul.mubr.bf16.gmra.mrb[0].mxu0 %v435
    %v598 = vpop.f32.mrb[0].mxu0
    %v599 = vadd.f32 %v466, %v598
    %v600 = vpop.f32.mrb[0].mxu0
    %v601 = vpop.f32.mrb[0].mxu0
    %v602 = vadd.f32 %v466, %v601
    %v603 = vpop.f32.mrb[0].mxu0
    %604 = vmatprep.mubr.bf16.mxu0 0
    %605 = vmatmul.mubr.bf16.gmra.mrb[0].mxu0 %v436
    %v606 = vpop.f32.mrb[0].mxu0
    %v607 = vadd.f32 %v466, %v606
    %v608 = vpop.f32.mrb[0].mxu0
    %v609 = vpop.f32.mrb[0].mxu0
    %v610 = vadd.f32 %v466, %v609
    %v611 = vpop.f32.mrb[0].mxu0
    %612 = vmatprep.mubr.bf16.mxu0 0
    %613 = vmatmul.mubr.bf16.gmra.mrb[0].mxu0 %v437
    %v614 = vpop.f32.mrb[0].mxu0
    %v615 = vadd.f32 %v466, %v614
    %v616 = vpop.f32.mrb[0].mxu0
    %v617 = vpop.f32.mrb[0].mxu0
    %v618 = vadd.f32 %v466, %v617
    %v619 = vpop.f32.mrb[0].mxu0
    %620 = vmatprep.mubr.bf16.mxu0 0
    %621 = vmatmul.mubr.bf16.gmra.mrb[0].mxu0 %v438
    %v622 = vpop.f32.mrb[0].mxu0
    %v623 = vadd.f32 %v466, %v622
    %v624 = vpop.f32.mrb[0].mxu0
    %v625 = vpop.f32.mrb[0].mxu0
    %v626 = vadd.f32 %v466, %v625
    %v627 = vpop.f32.mrb[0].mxu0
    %628 = vmatprep.mubr.bf16.mxu0 0
    %629 = vmatmul.mubr.bf16.gmra.mrb[0].mxu0 %v439
    %v630 = vpop.f32.mrb[0].mxu0
    %v631 = vadd.f32 %v466, %v630
    %v632 = vpop.f32.mrb[0].mxu0
    %v633 = vpop.f32.mrb[0].mxu0
    %v634 = vadd.f32 %v466, %v633
    %v635 = vpop.f32.mrb[0].mxu0
    %636 = vmatprep.mubr.bf16.mxu0 0
    %637 = vmatmul.mubr.bf16.gmra.mrb[0].mxu0 %v440
    %v638 = vpop.f32.mrb[0].mxu0
    %v639 = vadd.f32 %v466, %v638
    %v640 = vpop.f32.mrb[0].mxu0
    %v641 = vpop.f32.mrb[0].mxu0
    %v642 = vadd.f32 %v466, %v641
    %v643 = vpop.f32.mrb[0].mxu0
    %644 = vmatprep.mubr.bf16.mxu0 0
    %645 = vmatmul.mubr.bf16.gmra.mrb[0].mxu0 %v441
    %v646 = vpop.f32.mrb[0].mxu0
    %v647 = vadd.f32 %v466, %v646
    %v648 = vpop.f32.mrb[0].mxu0
    %v649 = vpop.f32.mrb[0].mxu0
    %v650 = vadd.f32 %v466, %v649
    %v651 = vpop.f32.mrb[0].mxu0
    %652 = vmatprep.mubr.bf16.mxu0 0
    %653 = vmatmul.mubr.bf16.gmra.mrb[0].mxu0 %v442
    %v654 = vpop.f32.mrb[0].mxu0
    %v655 = vadd.f32 %v466, %v654
    %v656 = vpop.f32.mrb[0].mxu0
    %v657 = vpop.f32.mrb[0].mxu0
    %v658 = vadd.f32 %v466, %v657
    %v659 = vpop.f32.mrb[0].mxu0
    %660 = vmatprep.mubr.bf16.mxu0 0
    %661 = vmatmul.mubr.bf16.gmra.mrb[0].mxu0 %v443
    %v662 = vpop.f32.mrb[0].mxu0
    %v663 = vadd.f32 %v466, %v662
    %v664 = vpop.f32.mrb[0].mxu0
    %v665 = vpop.f32.mrb[0].mxu0
    %v666 = vadd.f32 %v466, %v665
    %v667 = vpop.f32.mrb[0].mxu0
    %668 = vmatprep.mubr.bf16.mxu0 0
    %669 = vmatmul.mubr.bf16.gmra.mrb[0].mxu0 %v444
    %v670 = vpop.f32.mrb[0].mxu0
    %v671 = vadd.f32 %v466, %v670
    %v672 = vpop.f32.mrb[0].mxu0
    %v673 = vpop.f32.mrb[0].mxu0
    %v674 = vadd.f32 %v466, %v673
    %v675 = vpop.f32.mrb[0].mxu0
    %676 = vdwg.mxu0
    %s677 = sld [smem:[#allocation2]]
    %v678 = vunpack.c.l.bf16 %v37
    %v679 = vunpack.c.l.bf16 %v38
    %v680 = vunpack.c.l.bf16 %v39
    %v681 = vunpack.c.l.bf16 %v40
    %v682 = vunpack.c.l.bf16 %v41
    %v683 = vunpack.c.l.bf16 %v42
    %v684 = vunpack.c.l.bf16 %v43
    %v685 = vunpack.c.l.bf16 %v44
    %v686 = vunpack.c.l.bf16 %v45
    %v687 = vunpack.c.l.bf16 %v46
    %v688 = vunpack.c.l.bf16 %v47
    %v689 = vunpack.c.l.bf16 %v48
    %v690 = vunpack.c.l.bf16 %v49
    %v691 = vunpack.c.l.bf16 %v50
    %v692 = vunpack.c.l.bf16 %v51
    %v693 = vunpack.c.l.bf16 %v52
    %v694 = vunpack.c.l.bf16 %v53
    %v695 = vunpack.c.l.bf16 %v54
    %v696 = vunpack.c.l.bf16 %v55
    %v697 = vunpack.c.l.bf16 %v56
    %v698 = vunpack.c.l.bf16 %v57
    %v699 = vunpack.c.l.bf16 %v58
    %v700 = vunpack.c.l.bf16 %v59
    %v701 = vunpack.c.l.bf16 %v60
    %v702 = vunpack.c.l.bf16 %v61
    %v703 = vunpack.c.l.bf16 %v62
    %v704 = vunpack.c.l.bf16 %v63
    %v705 = vunpack.c.l.bf16 %v64
    %v706 = vunpack.c.l.bf16 %v65
    %v707 = vunpack.c.l.bf16 %v66
    %v708 = vunpack.c.l.bf16 %v67
    %v709 = vunpack.c.l.bf16 %v68
    %v710 = vstv %s677
    %v711 = vmul.f32 %v710, %v678
    %v712 = vmul.f32 %v710, %v679
    %v713 = vmul.f32 %v710, %v680
    %v714 = vmul.f32 %v710, %v681
    %v715 = vmul.f32 %v710, %v682
    %v716 = vmul.f32 %v710, %v683
    %v717 = vmul.f32 %v710, %v684
    %v718 = vmul.f32 %v710, %v685
    %v719 = vmul.f32 %v710, %v686
    %v720 = vmul.f32 %v710, %v687
    %v721 = vmul.f32 %v710, %v688
    %v722 = vmul.f32 %v710, %v689
    %v723 = vmul.f32 %v710, %v690
    %v724 = vmul.f32 %v710, %v691
    %v725 = vmul.f32 %v710, %v692
    %v726 = vmul.f32 %v710, %v693
    %v727 = vmul.f32 %v710, %v694
    %v728 = vmul.f32 %v710, %v695
    %v729 = vmul.f32 %v710, %v696
    %v730 = vmul.f32 %v710, %v697
    %v731 = vmul.f32 %v710, %v698
    %v732 = vmul.f32 %v710, %v699
    %v733 = vmul.f32 %v710, %v700
    %v734 = vmul.f32 %v710, %v701
    %v735 = vmul.f32 %v710, %v702
    %v736 = vmul.f32 %v710, %v703
    %v737 = vmul.f32 %v710, %v704
    %v738 = vmul.f32 %v710, %v705
    %v739 = vmul.f32 %v710, %v706
    %v740 = vmul.f32 %v710, %v707
    %v741 = vmul.f32 %v710, %v708
    %v742 = vmul.f32 %v710, %v709
    %s743 = sld [smem:[#allocation2 + $0x1]]
    %v744 = vstv %s743
    %v745 = vmul.f32 %v744, %v551
    %v746 = vmul.f32 %v744, %v554
    %v747 = vmul.f32 %v744, %v559
    %v748 = vmul.f32 %v744, %v562
    %v749 = vmul.f32 %v744, %v567
    %v750 = vmul.f32 %v744, %v570
    %v751 = vmul.f32 %v744, %v575
    %v752 = vmul.f32 %v744, %v578
    %v753 = vmul.f32 %v744, %v583
    %v754 = vmul.f32 %v744, %v586
    %v755 = vmul.f32 %v744, %v591
    %v756 = vmul.f32 %v744, %v594
    %v757 = vmul.f32 %v744, %v599
    %v758 = vmul.f32 %v744, %v602
    %v759 = vmul.f32 %v744, %v607
    %v760 = vmul.f32 %v744, %v610
    %v761 = vmul.f32 %v744, %v615
    %v762 = vmul.f32 %v744, %v618
    %v763 = vmul.f32 %v744, %v623
    %v764 = vmul.f32 %v744, %v626
    %v765 = vmul.f32 %v744, %v631
    %v766 = vmul.f32 %v744, %v634
    %v767 = vmul.f32 %v744, %v639
    %v768 = vmul.f32 %v744, %v642
    %v769 = vmul.f32 %v744, %v647
    %v770 = vmul.f32 %v744, %v650
    %v771 = vmul.f32 %v744, %v655
    %v772 = vmul.f32 %v744, %v658
    %v773 = vmul.f32 %v744, %v663
    %v774 = vmul.f32 %v744, %v666
    %v775 = vmul.f32 %v744, %v671
    %v776 = vmul.f32 %v744, %v674
    %v777 = vadd.f32 %v711, %v745
    %v778 = vadd.f32 %v712, %v746
    %v779 = vadd.f32 %v713, %v747
    %v780 = vadd.f32 %v714, %v748
    %v781 = vadd.f32 %v715, %v749
    %v782 = vadd.f32 %v716, %v750
    %v783 = vadd.f32 %v717, %v751
    %v784 = vadd.f32 %v718, %v752
    %v785 = vadd.f32 %v719, %v753
    %v786 = vadd.f32 %v720, %v754
    %v787 = vadd.f32 %v721, %v755
    %v788 = vadd.f32 %v722, %v756
    %v789 = vadd.f32 %v723, %v757
    %v790 = vadd.f32 %v724, %v758
    %v791 = vadd.f32 %v725, %v759
    %v792 = vadd.f32 %v726, %v760
    %v793 = vadd.f32 %v727, %v761
    %v794 = vadd.f32 %v728, %v762
    %v795 = vadd.f32 %v729, %v763
    %v796 = vadd.f32 %v730, %v764
    %v797 = vadd.f32 %v731, %v765
    %v798 = vadd.f32 %v732, %v766
    %v799 = vadd.f32 %v733, %v767
    %v800 = vadd.f32 %v734, %v768
    %v801 = vadd.f32 %v735, %v769
    %v802 = vadd.f32 %v736, %v770
    %v803 = vadd.f32 %v737, %v771
    %v804 = vadd.f32 %v738, %v772
    %v805 = vadd.f32 %v739, %v773
    %v806 = vadd.f32 %v740, %v774
    %v807 = vadd.f32 %v741, %v775
    %v808 = vadd.f32 %v742, %v776
    %v809 = vpack.c.bf16 %v778, %v777
    %v810 = vpack.c.bf16 %v780, %v779
    %v811 = vpack.c.bf16 %v782, %v781
    %v812 = vpack.c.bf16 %v784, %v783
    %v813 = vpack.c.bf16 %v786, %v785
    %v814 = vpack.c.bf16 %v788, %v787
    %v815 = vpack.c.bf16 %v790, %v789
    %v816 = vpack.c.bf16 %v792, %v791
    %v817 = vpack.c.bf16 %v794, %v793
    %v818 = vpack.c.bf16 %v796, %v795
    %v819 = vpack.c.bf16 %v798, %v797
    %v820 = vpack.c.bf16 %v800, %v799
    %v821 = vpack.c.bf16 %v802, %v801
    %v822 = vpack.c.bf16 %v804, %v803
    %v823 = vpack.c.bf16 %v806, %v805
    %v824 = vpack.c.bf16 %v808, %v807
    %v841 = vunpack.c.l.b16 %v809
    %v842 = vunpack.c.h.b16 %v809
    %v843 = vunpack.c.l.b16 %v810
    %v844 = vunpack.c.h.b16 %v810
    %v845 = vunpack.c.l.b16 %v811
    %v846 = vunpack.c.h.b16 %v811
    %v847 = vunpack.c.l.b16 %v812
    %v848 = vunpack.c.h.b16 %v812
    %v849 = vunpack.c.l.b16 %v813
    %v850 = vunpack.c.h.b16 %v813
    %v851 = vunpack.c.l.b16 %v814
    %v852 = vunpack.c.h.b16 %v814
    %v853 = vunpack.c.l.b16 %v815
    %v854 = vunpack.c.h.b16 %v815
    %v855 = vunpack.c.l.b16 %v816
    %v856 = vunpack.c.h.b16 %v816
    %v857 = vunpack.c.l.b16 %v817
    %v858 = vunpack.c.h.b16 %v817
    %v859 = vunpack.c.l.b16 %v818
    %v860 = vunpack.c.h.b16 %v818
    %v861 = vunpack.c.l.b16 %v819
    %v862 = vunpack.c.h.b16 %v819
    %v863 = vunpack.c.l.b16 %v820
    %v864 = vunpack.c.h.b16 %v820
    %v865 = vunpack.c.l.b16 %v821
    %v866 = vunpack.c.h.b16 %v821
    %v867 = vunpack.c.l.b16 %v822
    %v868 = vunpack.c.h.b16 %v822
    %v869 = vunpack.c.l.b16 %v823
    %v870 = vunpack.c.h.b16 %v823
    %v871 = vunpack.c.l.b16 %v824
    %v872 = vunpack.c.h.b16 %v824
    %v873 = vpack.c.b16 %v841, %v841
    %v874 = vpack.c.b16 %v842, %v842
    %v875 = vpack.c.b16 %v843, %v843
    %v876 = vpack.c.b16 %v844, %v844
    %v877 = vpack.c.b16 %v845, %v845
    %v878 = vpack.c.b16 %v846, %v846
    %v879 = vpack.c.b16 %v847, %v847
    %v880 = vpack.c.b16 %v848, %v848
    %v881 = vpack.c.b16 %v849, %v849
    %v882 = vpack.c.b16 %v850, %v850
    %v883 = vpack.c.b16 %v851, %v851
    %v884 = vpack.c.b16 %v852, %v852
    %v885 = vpack.c.b16 %v853, %v853
    %v886 = vpack.c.b16 %v854, %v854
    %v887 = vpack.c.b16 %v855, %v855
    %v888 = vpack.c.b16 %v856, %v856
    %v889 = vpack.c.b16 %v857, %v857
    %v890 = vpack.c.b16 %v858, %v858
    %v891 = vpack.c.b16 %v859, %v859
    %v892 = vpack.c.b16 %v860, %v860
    %v893 = vpack.c.b16 %v861, %v861
    %v894 = vpack.c.b16 %v862, %v862
    %v895 = vpack.c.b16 %v863, %v863
    %v896 = vpack.c.b16 %v864, %v864
    %v897 = vpack.c.b16 %v865, %v865
    %v898 = vpack.c.b16 %v866, %v866
    %v899 = vpack.c.b16 %v867, %v867
    %v900 = vpack.c.b16 %v868, %v868
    %v901 = vpack.c.b16 %v869, %v869
    %v902 = vpack.c.b16 %v870, %v870
    %v903 = vpack.c.b16 %v871, %v871
    %v904 = vpack.c.b16 %v872, %v872
    %937 = vst [vmem:[%s6] sm:$0xf] %v873
    %938 = vst [vmem:[%s6 + $0x4] sm:$0xf] %v874
    %939 = vst [vmem:[%s6 + $0x8] sm:$0xf] %v875
    %940 = vst [vmem:[%s6 + $0xc] sm:$0xf] %v876
    %941 = vst [vmem:[%s6 + $0x10] sm:$0xf] %v877
    %942 = vst [vmem:[%s6 + $0x14] sm:$0xf] %v878
    %943 = vst [vmem:[%s6 + $0x18] sm:$0xf] %v879
    %944 = vst [vmem:[%s6 + $0x1c] sm:$0xf] %v880
    %945 = vst [vmem:[%s6 + $0x20] sm:$0xf] %v881
    %946 = vst [vmem:[%s6 + $0x24] sm:$0xf] %v882
    %947 = vst [vmem:[%s6 + $0x28] sm:$0xf] %v883
    %948 = vst [vmem:[%s6 + $0x2c] sm:$0xf] %v884
    %949 = vst [vmem:[%s6 + $0x30] sm:$0xf] %v885
    %950 = vst [vmem:[%s6 + $0x34] sm:$0xf] %v886
    %951 = vst [vmem:[%s6 + $0x38] sm:$0xf] %v887
    %952 = vst [vmem:[%s6 + $0x3c] sm:$0xf] %v888
    %953 = vst [vmem:[%s6 + $0x40] sm:$0xf] %v889
    %954 = vst [vmem:[%s6 + $0x44] sm:$0xf] %v890
    %955 = vst [vmem:[%s6 + $0x48] sm:$0xf] %v891
    %956 = vst [vmem:[%s6 + $0x4c] sm:$0xf] %v892
    %957 = vst [vmem:[%s6 + $0x50] sm:$0xf] %v893
    %958 = vst [vmem:[%s6 + $0x54] sm:$0xf] %v894
    %959 = vst [vmem:[%s6 + $0x58] sm:$0xf] %v895
    %960 = vst [vmem:[%s6 + $0x5c] sm:$0xf] %v896
    %961 = vst [vmem:[%s6 + $0x60] sm:$0xf] %v897
    %962 = vst [vmem:[%s6 + $0x64] sm:$0xf] %v898
    %963 = vst [vmem:[%s6 + $0x68] sm:$0xf] %v899
    %964 = vst [vmem:[%s6 + $0x6c] sm:$0xf] %v900
    %965 = vst [vmem:[%s6 + $0x70] sm:$0xf] %v901
    %966 = vst [vmem:[%s6 + $0x74] sm:$0xf] %v902
    %967 = vst [vmem:[%s6 + $0x78] sm:$0xf] %v903
    %968 = vst [vmem:[%s6 + $0x7c] sm:$0xf] %v904
    // Predicated region
    $region30: #{dual_encoder_forward.8} parent=1 // pred_check
      _
    $region31: #{dual_encoder_forward.8} parent=1 // pred_check_branch
      %970 = sbr.rel (0) target = $region33
    $region32: #{dual_encoder_forward.8} parent=1 // pred_region
      _
    $region33: #{dual_encoder_forward.8} parent=1 // pred_fallthru
      _
    // Predicated region
    $region34: #{dual_encoder_forward.8} parent=1 // pred_check
      _
    $region35: #{dual_encoder_forward.8} parent=1 // pred_check_branch
      %972 = sbr.rel (0) target = $region37
    $region36: #{dual_encoder_forward.8} parent=1 // pred_region
      _
    $region37: #{dual_encoder_forward.8} parent=1 // pred_fallthru
      _
    %973 = vsyncpa [#allocation3], 1

// kernel: dual_encoder_forward.9
$region0: #{dual_encoder_forward.9}
  #allocation0 [shape = 'u32[]', space=smem, size = 0x4, offset = 0x4, fixed_abs, tag = 'smem constant byte address 0x4 - core index']
  #allocation1 [shape = 'u32[144,128]{1,0:T(1,128)}', space=vmem, size = 0x12000, scoped, tag = 'internal scratch']
  #allocation2 [shape = 'bf16[128,128]{1,0:T(16,128)(2,1)}', space=vmem, size = 0x8000, scoped, tag = 'scratch operand']
  %s0 = inlined_call_operand.vmem [shape: bf16[128,128], index: 0, kind: input, shape index: {}]
  %s1 = inlined_call_operand.vmem [shape: bf16[128,128], index: 1, kind: input, shape index: {}]
  %s2 = inlined_call_operand.vmem [shape: bf16[128,128], index: 2, kind: input, shape index: {}]
  %s3 = inlined_call_operand.vmem [shape: f32[128,128], index: 3, kind: output, shape index: {}]
  %s4 = sld [smem:[#allocation0]]
  $region26: #{dual_encoder_forward.9} parent=0
    _
  %s6 = ssub.s32 1, %s4
  %s7 = scalar_select 0, %s6, %s4
  // Predicated region
  $region2: #{dual_encoder_forward.9} parent=0 // pred_check
    _
  $region3: #{dual_encoder_forward.9} parent=0 // pred_check_branch
    %9 = sbr.rel (0) target = $region5
  $region4: #{dual_encoder_forward.9} parent=0 // pred_region
    _
  $region5: #{dual_encoder_forward.9} parent=0 // pred_fallthru
    _
  // Predicated region
  $region6: #{dual_encoder_forward.9} parent=0 // pred_check
    _
  $region7: #{dual_encoder_forward.9} parent=0 // pred_check_branch
    %11 = sbr.rel (0) target = $region9
  $region8: #{dual_encoder_forward.9} parent=0 // pred_region
    _
  $region9: #{dual_encoder_forward.9} parent=0 // pred_fallthru
    _
  // Predicated region
  $region10: #{dual_encoder_forward.9} parent=0 // pred_check
    _
  $region11: #{dual_encoder_forward.9} parent=0 // pred_check_branch
    %13 = sbr.rel (0) target = $region13
  $region12: #{dual_encoder_forward.9} parent=0 // pred_region
    _
  $region13: #{dual_encoder_forward.9} parent=0 // pred_fallthru
    _
  %p15 = scmp.eq.s32.totalorder 0, 0
  // Predicated region
  $region14: #{dual_encoder_forward.9} parent=0 // pred_check
    %p16 = pneg %p15
  $region15: #{dual_encoder_forward.9} parent=0 // pred_check_branch
    %18 = sbr.rel (%p16) target = $region17
  $region16: #{dual_encoder_forward.9} parent=0 // pred_region
    %v19 = vld [vmem:[%s0] sm:$0xf]
    %v20 = vld [vmem:[%s0 + $0x4] sm:$0xf]
    %v21 = vld [vmem:[%s0 + $0x8] sm:$0xf]
    %v22 = vld [vmem:[%s0 + $0xc] sm:$0xf]
    %v23 = vld [vmem:[%s0 + $0x10] sm:$0xf]
    %v24 = vld [vmem:[%s0 + $0x14] sm:$0xf]
    %v25 = vld [vmem:[%s0 + $0x18] sm:$0xf]
    %v26 = vld [vmem:[%s0 + $0x1c] sm:$0xf]
    %v27 = vld [vmem:[%s0 + $0x20] sm:$0xf]
    %v28 = vld [vmem:[%s0 + $0x24] sm:$0xf]
    %v29 = vld [vmem:[%s0 + $0x28] sm:$0xf]
    %v30 = vld [vmem:[%s0 + $0x2c] sm:$0xf]
    %v31 = vld [vmem:[%s0 + $0x30] sm:$0xf]
    %v32 = vld [vmem:[%s0 + $0x34] sm:$0xf]
    %v33 = vld [vmem:[%s0 + $0x38] sm:$0xf]
    %v34 = vld [vmem:[%s0 + $0x3c] sm:$0xf]
    %v35 = vld [vmem:[%s1] sm:$0xf]
    %v36 = vld [vmem:[%s1 + $0x4] sm:$0xf]
    %v37 = vld [vmem:[%s1 + $0x8] sm:$0xf]
    %v38 = vld [vmem:[%s1 + $0xc] sm:$0xf]
    %v39 = vld [vmem:[%s1 + $0x10] sm:$0xf]
    %v40 = vld [vmem:[%s1 + $0x14] sm:$0xf]
    %v41 = vld [vmem:[%s1 + $0x18] sm:$0xf]
    %v42 = vld [vmem:[%s1 + $0x1c] sm:$0xf]
    %v43 = vld [vmem:[%s1 + $0x20] sm:$0xf]
    %v44 = vld [vmem:[%s1 + $0x24] sm:$0xf]
    %v45 = vld [vmem:[%s1 + $0x28] sm:$0xf]
    %v46 = vld [vmem:[%s1 + $0x2c] sm:$0xf]
    %v47 = vld [vmem:[%s1 + $0x30] sm:$0xf]
    %v48 = vld [vmem:[%s1 + $0x34] sm:$0xf]
    %v49 = vld [vmem:[%s1 + $0x38] sm:$0xf]
    %v50 = vld [vmem:[%s1 + $0x3c] sm:$0xf]
    %v67 = vunpack.c.l.b16 %v19
    %v68 = vunpack.c.l.b16 %v20
    %v69 = vunpack.c.l.b16 %v21
    %v70 = vunpack.c.l.b16 %v22
    %v71 = vunpack.c.l.b16 %v23
    %v72 = vunpack.c.l.b16 %v24
    %v73 = vunpack.c.l.b16 %v25
    %v74 = vunpack.c.l.b16 %v26
    %v75 = vunpack.c.l.b16 %v27
    %v76 = vunpack.c.l.b16 %v28
    %v77 = vunpack.c.l.b16 %v29
    %v78 = vunpack.c.l.b16 %v30
    %v79 = vunpack.c.l.b16 %v31
    %v80 = vunpack.c.l.b16 %v32
    %v81 = vunpack.c.l.b16 %v33
    %v82 = vunpack.c.l.b16 %v34
    %v83 = vpack.c.b16 %v68, %v67
    %v84 = vpack.c.b16 %v70, %v69
    %v85 = vpack.c.b16 %v72, %v71
    %v86 = vpack.c.b16 %v74, %v73
    %v87 = vpack.c.b16 %v76, %v75
    %v88 = vpack.c.b16 %v78, %v77
    %v89 = vpack.c.b16 %v80, %v79
    %v90 = vpack.c.b16 %v82, %v81
    %v115 = vunpack.c.l.b16 %v35
    %v116 = vunpack.c.l.b16 %v36
    %v117 = vunpack.c.l.b16 %v37
    %v118 = vunpack.c.l.b16 %v38
    %v119 = vunpack.c.l.b16 %v39
    %v120 = vunpack.c.l.b16 %v40
    %v121 = vunpack.c.l.b16 %v41
    %v122 = vunpack.c.l.b16 %v42
    %v123 = vunpack.c.l.b16 %v43
    %v124 = vunpack.c.l.b16 %v44
    %v125 = vunpack.c.l.b16 %v45
    %v126 = vunpack.c.l.b16 %v46
    %v127 = vunpack.c.l.b16 %v47
    %v128 = vunpack.c.l.b16 %v48
    %v129 = vunpack.c.l.b16 %v49
    %v130 = vunpack.c.l.b16 %v50
    %v131 = vpack.c.b16 %v116, %v115
    %v132 = vpack.c.b16 %v118, %v117
    %v133 = vpack.c.b16 %v120, %v119
    %v134 = vpack.c.b16 %v122, %v121
    %v135 = vpack.c.b16 %v124, %v123
    %v136 = vpack.c.b16 %v126, %v125
    %v137 = vpack.c.b16 %v128, %v127
    %v138 = vpack.c.b16 %v130, %v129
    %147 = vmatprep.subr.bf16.mxu0 0
    %148 = vmatpush1.bf16.msra.mxu0 %v131
    %149 = vmatprep.subr.bf16.mxu0 0
    %150 = vmatpush1.bf16.msra.mxu0 %v132
    %151 = vmatprep.subr.bf16.mxu0 0
    %152 = vmatpush1.bf16.msra.mxu0 %v133
    %153 = vmatprep.subr.bf16.mxu0 0
    %154 = vmatpush1.bf16.msra.mxu0 %v134
    %155 = vmatprep.subr.bf16.mxu0 0
    %156 = vmatpush1.bf16.msra.mxu0 %v135
    %157 = vmatprep.subr.bf16.mxu0 0
    %158 = vmatpush1.bf16.msra.mxu0 %v136
    %159 = vmatprep.subr.bf16.mxu0 0
    %160 = vmatpush1.bf16.msra.mxu0 %v137
    %161 = vmatprep.subr.bf16.mxu0 0
    %162 = vmatpush1.bf16.msra.mxu0 %v138
    %163 = vmatprep.subr.bf16.mxu0 0
    %164 = vmatpush1.bf16.msra.mxu0 0
    %165 = vmatprep.subr.bf16.mxu0 0
    %166 = vmatpush1.bf16.msra.mxu0 0
    %167 = vmatprep.subr.bf16.mxu0 0
    %168 = vmatpush1.bf16.msra.mxu0 0
    %169 = vmatprep.subr.bf16.mxu0 0
    %170 = vmatpush1.bf16.msra.mxu0 0
    %171 = vmatprep.subr.bf16.mxu0 0
    %172 = vmatpush1.bf16.msra.mxu0 0
    %173 = vmatprep.subr.bf16.mxu0 0
    %174 = vmatpush1.bf16.msra.mxu0 0
    %175 = vmatprep.subr.bf16.mxu0 0
    %176 = vmatpush1.bf16.msra.mxu0 0
    %177 = vmatprep.subr.bf16.mxu0 0
    %178 = vmatpush1.bf16.msra.mxu0 0
    %179 = vmatprep.mubr.bf16.mxu0 0
    %180 = vmatmul.mubr.bf16.gmra.mrb[0].mxu0 %v83
    %v181 = vpop.f32.mrb[0].mxu0
    %v182 = vadd.f32 0.0, %v181
    %v183 = vpop.f32.mrb[0].mxu0
    %v184 = vpop.f32.mrb[0].mxu0
    %v185 = vadd.f32 0.0, %v184
    %v186 = vpop.f32.mrb[0].mxu0
    %187 = vmatprep.mubr.bf16.mxu0 0
    %188 = vmatmul.mubr.bf16.gmra.mrb[0].mxu0 %v84
    %v189 = vpop.f32.mrb[0].mxu0
    %v190 = vadd.f32 0.0, %v189
    %v191 = vpop.f32.mrb[0].mxu0
    %v192 = vpop.f32.mrb[0].mxu0
    %v193 = vadd.f32 0.0, %v192
    %v194 = vpop.f32.mrb[0].mxu0
    %195 = vmatprep.mubr.bf16.mxu0 0
    %196 = vmatmul.mubr.bf16.gmra.mrb[0].mxu0 %v85
    %v197 = vpop.f32.mrb[0].mxu0
    %v198 = vadd.f32 0.0, %v197
    %v199 = vpop.f32.mrb[0].mxu0
    %v200 = vpop.f32.mrb[0].mxu0
    %v201 = vadd.f32 0.0, %v200
    %v202 = vpop.f32.mrb[0].mxu0
    %203 = vmatprep.mubr.bf16.mxu0 0
    %204 = vmatmul.mubr.bf16.gmra.mrb[0].mxu0 %v86
    %v205 = vpop.f32.mrb[0].mxu0
    %v206 = vadd.f32 0.0, %v205
    %v207 = vpop.f32.mrb[0].mxu0
    %v208 = vpop.f32.mrb[0].mxu0
    %v209 = vadd.f32 0.0, %v208
    %v210 = vpop.f32.mrb[0].mxu0
    %211 = vmatprep.mubr.bf16.mxu0 0
    %212 = vmatmul.mubr.bf16.gmra.mrb[0].mxu0 %v87
    %v213 = vpop.f32.mrb[0].mxu0
    %v214 = vadd.f32 0.0, %v213
    %v215 = vpop.f32.mrb[0].mxu0
    %v216 = vpop.f32.mrb[0].mxu0
    %v217 = vadd.f32 0.0, %v216
    %v218 = vpop.f32.mrb[0].mxu0
    %219 = vmatprep.mubr.bf16.mxu0 0
    %220 = vmatmul.mubr.bf16.gmra.mrb[0].mxu0 %v88
    %v221 = vpop.f32.mrb[0].mxu0
    %v222 = vadd.f32 0.0, %v221
    %v223 = vpop.f32.mrb[0].mxu0
    %v224 = vpop.f32.mrb[0].mxu0
    %v225 = vadd.f32 0.0, %v224
    %v226 = vpop.f32.mrb[0].mxu0
    %227 = vmatprep.mubr.bf16.mxu0 0
    %228 = vmatmul.mubr.bf16.gmra.mrb[0].mxu0 %v89
    %v229 = vpop.f32.mrb[0].mxu0
    %v230 = vadd.f32 0.0, %v229
    %v231 = vpop.f32.mrb[0].mxu0
    %v232 = vpop.f32.mrb[0].mxu0
    %v233 = vadd.f32 0.0, %v232
    %v234 = vpop.f32.mrb[0].mxu0
    %235 = vmatprep.mubr.bf16.mxu0 0
    %236 = vmatmul.mubr.bf16.gmra.mrb[0].mxu0 %v90
    %v237 = vpop.f32.mrb[0].mxu0
    %v238 = vadd.f32 0.0, %v237
    %v239 = vpop.f32.mrb[0].mxu0
    %v240 = vpop.f32.mrb[0].mxu0
    %v241 = vadd.f32 0.0, %v240
    %v242 = vpop.f32.mrb[0].mxu0
    %243 = vdwg.mxu0
    %v244 = vpack.c.bf16 %v185, %v182
    %v245 = vpack.c.bf16 %v193, %v190
    %v246 = vpack.c.bf16 %v201, %v198
    %v247 = vpack.c.bf16 %v209, %v206
    %v248 = vpack.c.bf16 %v217, %v214
    %v249 = vpack.c.bf16 %v225, %v222
    %v250 = vpack.c.bf16 %v233, %v230
    %v251 = vpack.c.bf16 %v241, %v238
    %252 = vst [vmem:[#allocation2] sm:$0xff] %v244
    %253 = vst [vmem:[#allocation2 + $0x8] sm:$0xff] %v245
    %254 = vst [vmem:[#allocation2 + $0x10] sm:$0xff] %v246
    %255 = vst [vmem:[#allocation2 + $0x18] sm:$0xff] %v247
    %256 = vst [vmem:[#allocation2 + $0x20] sm:$0xff] %v248
    %257 = vst [vmem:[#allocation2 + $0x28] sm:$0xff] %v249
    %258 = vst [vmem:[#allocation2 + $0x30] sm:$0xff] %v250
    %259 = vst [vmem:[#allocation2 + $0x38] sm:$0xff] %v251
  $region17: #{dual_encoder_forward.9} parent=0 // pred_fallthru
    _
  %v260 = vld [vmem:[#allocation2] sm:$0xff]
  %v261 = vld [vmem:[#allocation2 + $0x8] sm:$0xff]
  %v262 = vld [vmem:[#allocation2 + $0x10] sm:$0xff]
  %v263 = vld [vmem:[#allocation2 + $0x18] sm:$0xff]
  %v264 = vld [vmem:[#allocation2 + $0x20] sm:$0xff]
  %v265 = vld [vmem:[#allocation2 + $0x28] sm:$0xff]
  %v266 = vld [vmem:[#allocation2 + $0x30] sm:$0xff]
  %v267 = vld [vmem:[#allocation2 + $0x38] sm:$0xff]
  %v268 = vld [vmem:[%s2] sm:$0xf]
  %v269 = vld [vmem:[%s2 + $0x4] sm:$0xf]
  %v270 = vld [vmem:[%s2 + $0x8] sm:$0xf]
  %v271 = vld [vmem:[%s2 + $0xc] sm:$0xf]
  %v272 = vld [vmem:[%s2 + $0x10] sm:$0xf]
  %v273 = vld [vmem:[%s2 + $0x14] sm:$0xf]
  %v274 = vld [vmem:[%s2 + $0x18] sm:$0xf]
  %v275 = vld [vmem:[%s2 + $0x1c] sm:$0xf]
  %v276 = vld [vmem:[%s2 + $0x20] sm:$0xf]
  %v277 = vld [vmem:[%s2 + $0x24] sm:$0xf]
  %v278 = vld [vmem:[%s2 + $0x28] sm:$0xf]
  %v279 = vld [vmem:[%s2 + $0x2c] sm:$0xf]
  %v280 = vld [vmem:[%s2 + $0x30] sm:$0xf]
  %v281 = vld [vmem:[%s2 + $0x34] sm:$0xf]
  %v282 = vld [vmem:[%s2 + $0x38] sm:$0xf]
  %v283 = vld [vmem:[%s2 + $0x3c] sm:$0xf]
  %v300 = vunpack.c.l.b16 %v268
  %v301 = vunpack.c.l.b16 %v269
  %v302 = vunpack.c.l.b16 %v270
  %v303 = vunpack.c.l.b16 %v271
  %v304 = vunpack.c.l.b16 %v272
  %v305 = vunpack.c.l.b16 %v273
  %v306 = vunpack.c.l.b16 %v274
  %v307 = vunpack.c.l.b16 %v275
  %v308 = vunpack.c.l.b16 %v276
  %v309 = vunpack.c.l.b16 %v277
  %v310 = vunpack.c.l.b16 %v278
  %v311 = vunpack.c.l.b16 %v279
  %v312 = vunpack.c.l.b16 %v280
  %v313 = vunpack.c.l.b16 %v281
  %v314 = vunpack.c.l.b16 %v282
  %v315 = vunpack.c.l.b16 %v283
  %v316 = vpack.c.b16 %v301, %v300
  %v317 = vpack.c.b16 %v303, %v302
  %v318 = vpack.c.b16 %v305, %v304
  %v319 = vpack.c.b16 %v307, %v306
  %v320 = vpack.c.b16 %v309, %v308
  %v321 = vpack.c.b16 %v311, %v310
  %v322 = vpack.c.b16 %v313, %v312
  %v323 = vpack.c.b16 %v315, %v314
  %332 = vmatprep.subr.bf16.mxu0 0
  %333 = vmatpush1.bf16.msra.mxu0 %v316
  %334 = vmatprep.subr.bf16.mxu0 0
  %335 = vmatpush1.bf16.msra.mxu0 %v317
  %336 = vmatprep.subr.bf16.mxu0 0
  %337 = vmatpush1.bf16.msra.mxu0 %v318
  %338 = vmatprep.subr.bf16.mxu0 0
  %339 = vmatpush1.bf16.msra.mxu0 %v319
  %340 = vmatprep.subr.bf16.mxu0 0
  %341 = vmatpush1.bf16.msra.mxu0 %v320
  %342 = vmatprep.subr.bf16.mxu0 0
  %343 = vmatpush1.bf16.msra.mxu0 %v321
  %344 = vmatprep.subr.bf16.mxu0 0
  %345 = vmatpush1.bf16.msra.mxu0 %v322
  %346 = vmatprep.subr.bf16.mxu0 0
  %347 = vmatpush1.bf16.msra.mxu0 %v323
  %348 = vmatprep.subr.bf16.mxu0 0
  %349 = vmatpush1.bf16.msra.mxu0 0
  %350 = vmatprep.subr.bf16.mxu0 0
  %351 = vmatpush1.bf16.msra.mxu0 0
  %352 = vmatprep.subr.bf16.mxu0 0
  %353 = vmatpush1.bf16.msra.mxu0 0
  %354 = vmatprep.subr.bf16.mxu0 0
  %355 = vmatpush1.bf16.msra.mxu0 0
  %356 = vmatprep.subr.bf16.mxu0 0
  %357 = vmatpush1.bf16.msra.mxu0 0
  %358 = vmatprep.subr.bf16.mxu0 0
  %359 = vmatpush1.bf16.msra.mxu0 0
  %360 = vmatprep.subr.bf16.mxu0 0
  %361 = vmatpush1.bf16.msra.mxu0 0
  %362 = vmatprep.subr.bf16.mxu0 0
  %363 = vmatpush1.bf16.msra.mxu0 0
  %364 = vmatprep.mubr.bf16.mxu0 0
  %365 = vmatmul.mubr.bf16.gmra.mrb[0].mxu0 %v260
  %v366 = vpop.f32.mrb[0].mxu0
  %v367 = vadd.f32 0.0, %v366
  %v368 = vpop.f32.mrb[0].mxu0
  %v369 = vpop.f32.mrb[0].mxu0
  %v370 = vadd.f32 0.0, %v369
  %v371 = vpop.f32.mrb[0].mxu0
  %372 = vmatprep.mubr.bf16.mxu0 0
  %373 = vmatmul.mubr.bf16.gmra.mrb[0].mxu0 %v261
  %v374 = vpop.f32.mrb[0].mxu0
  %v375 = vadd.f32 0.0, %v374
  %v376 = vpop.f32.mrb[0].mxu0
  %v377 = vpop.f32.mrb[0].mxu0
  %v378 = vadd.f32 0.0, %v377
  %v379 = vpop.f32.mrb[0].mxu0
  %380 = vmatprep.mubr.bf16.mxu0 0
  %381 = vmatmul.mubr.bf16.gmra.mrb[0].mxu0 %v262
  %v382 = vpop.f32.mrb[0].mxu0
  %v383 = vadd.f32 0.0, %v382
  %v384 = vpop.f32.mrb[0].mxu0
  %v385 = vpop.f32.mrb[0].mxu0
  %v386 = vadd.f32 0.0, %v385
  %v387 = vpop.f32.mrb[0].mxu0
  %388 = vmatprep.mubr.bf16.mxu0 0
  %389 = vmatmul.mubr.bf16.gmra.mrb[0].mxu0 %v263
  %v390 = vpop.f32.mrb[0].mxu0
  %v391 = vadd.f32 0.0, %v390
  %v392 = vpop.f32.mrb[0].mxu0
  %v393 = vpop.f32.mrb[0].mxu0
  %v394 = vadd.f32 0.0, %v393
  %v395 = vpop.f32.mrb[0].mxu0
  %396 = vmatprep.mubr.bf16.mxu0 0
  %397 = vmatmul.mubr.bf16.gmra.mrb[0].mxu0 %v264
  %v398 = vpop.f32.mrb[0].mxu0
  %v399 = vadd.f32 0.0, %v398
  %v400 = vpop.f32.mrb[0].mxu0
  %v401 = vpop.f32.mrb[0].mxu0
  %v402 = vadd.f32 0.0, %v401
  %v403 = vpop.f32.mrb[0].mxu0
  %404 = vmatprep.mubr.bf16.mxu0 0
  %405 = vmatmul.mubr.bf16.gmra.mrb[0].mxu0 %v265
  %v406 = vpop.f32.mrb[0].mxu0
  %v407 = vadd.f32 0.0, %v406
  %v408 = vpop.f32.mrb[0].mxu0
  %v409 = vpop.f32.mrb[0].mxu0
  %v410 = vadd.f32 0.0, %v409
  %v411 = vpop.f32.mrb[0].mxu0
  %412 = vmatprep.mubr.bf16.mxu0 0
  %413 = vmatmul.mubr.bf16.gmra.mrb[0].mxu0 %v266
  %v414 = vpop.f32.mrb[0].mxu0
  %v415 = vadd.f32 0.0, %v414
  %v416 = vpop.f32.mrb[0].mxu0
  %v417 = vpop.f32.mrb[0].mxu0
  %v418 = vadd.f32 0.0, %v417
  %v419 = vpop.f32.mrb[0].mxu0
  %420 = vmatprep.mubr.bf16.mxu0 0
  %421 = vmatmul.mubr.bf16.gmra.mrb[0].mxu0 %v267
  %v422 = vpop.f32.mrb[0].mxu0
  %v423 = vadd.f32 0.0, %v422
  %v424 = vpop.f32.mrb[0].mxu0
  %v425 = vpop.f32.mrb[0].mxu0
  %v426 = vadd.f32 0.0, %v425
  %v427 = vpop.f32.mrb[0].mxu0
  %428 = vdwg.mxu0
  %429 = vst [vmem:[%s3] sm:$0xff] %v367
  %430 = vst [vmem:[%s3 + $0x8] sm:$0xff] %v370
  %431 = vst [vmem:[%s3 + $0x10] sm:$0xff] %v375
  %432 = vst [vmem:[%s3 + $0x18] sm:$0xff] %v378
  %433 = vst [vmem:[%s3 + $0x20] sm:$0xff] %v383
  %434 = vst [vmem:[%s3 + $0x28] sm:$0xff] %v386
  %435 = vst [vmem:[%s3 + $0x30] sm:$0xff] %v391
  %436 = vst [vmem:[%s3 + $0x38] sm:$0xff] %v394
  %437 = vst [vmem:[%s3 + $0x40] sm:$0xff] %v399
  %438 = vst [vmem:[%s3 + $0x48] sm:$0xff] %v402
  %439 = vst [vmem:[%s3 + $0x50] sm:$0xff] %v407
  %440 = vst [vmem:[%s3 + $0x58] sm:$0xff] %v410
  %441 = vst [vmem:[%s3 + $0x60] sm:$0xff] %v415
  %442 = vst [vmem:[%s3 + $0x68] sm:$0xff] %v418
  %443 = vst [vmem:[%s3 + $0x70] sm:$0xff] %v423
  %444 = vst [vmem:[%s3 + $0x78] sm:$0xff] %v426
  // Predicated region
  $region18: #{dual_encoder_forward.9} parent=0 // pred_check
    _
  $region19: #{dual_encoder_forward.9} parent=0 // pred_check_branch
    %446 = sbr.rel (0) target = $region21
  $region20: #{dual_encoder_forward.9} parent=0 // pred_region
    _
  $region21: #{dual_encoder_forward.9} parent=0 // pred_fallthru
    _
  // Predicated region
  $region22: #{dual_encoder_forward.9} parent=0 // pred_check
    _
  $region23: #{dual_encoder_forward.9} parent=0 // pred_check_branch
    %448 = sbr.rel (0) target = $region25
  $region24: #{dual_encoder_forward.9} parent=0 // pred_region
    _
  $region25: #{dual_encoder_forward.9} parent=0 // pred_fallthru
    _

</llo_original>
